<compile_context>
chip_gen: v6e
topology: v6e:2x2x1
jax: 0.10.0
libtpu: 0.0.40
codegen_flags: <defaults>
</compile_context>

<pallas_src>
import math
import functools

import jax
import jax.numpy as jnp
import numpy as np
from jax.experimental import pallas as pl
from jax.experimental.pallas import tpu as pltpu


def _round_up(x, m):
    return (x + m - 1) // m * m


# ----------------------------- Pallas kernels ------------------------------

def _matmul_bias_kernel(a_ref, w_ref, b_ref, o_ref):
    # a: (TN, KC) bf16, w: (KC, Mpad) bf16, b: (1, Mpad) f32 -> o: (TN, Mpad) f32
    o_ref[...] = (
        jnp.dot(a_ref[...], w_ref[...], preferred_element_type=jnp.float32)
        + b_ref[...]
    )


def _deform_matmul_kernel(cols_ref, ml_ref, expand_ref, w_ref, b_ref, o_ref):
    # cols  : (TN, K*Cin) bf16  bilinearly sampled values, column order k*Cin + c
    # ml    : (TN, K)     f32   modulation-mask logits (softmax over K == torch dim=1)
    # expand: (K, K*Cin)  f32   0/1 matrix: expand[k, k*Cin+c] = 1
    # w     : (K*Cin, Cout_pad) bf16 flattened flipped weights; b: (1, Cout_pad) f32
    ml = ml_ref[...]
    ml = ml - jnp.max(ml, axis=-1, keepdims=True)
    e = jnp.exp(ml)                                                   # EUP
    inv = pl.reciprocal(jnp.sum(e, axis=-1, keepdims=True), approx=True)
    m = e * inv                                                       # (TN, K) softmax
    # Expand the per-tap mask to per-column with a tiny MXU matmul (MXU is otherwise
    # idle at this point; avoids lane-interleave shuffles that grow with Cin).
    m_cols = jnp.dot(m, expand_ref[...], preferred_element_type=jnp.float32)
    masked = cols_ref[...] * m_cols.astype(cols_ref.dtype)            # bf16 VPU
    o_ref[...] = (
        jnp.dot(masked, w_ref[...], preferred_element_type=jnp.float32)
        + b_ref[...]
    )


def _pick_tile(n_rows, tile_n):
    return max(8, min(tile_n, _round_up(n_rows, 8)))


def _pallas_matmul_bias(a, w, b, *, tile_n=512):
    # a: (N, KC) bf16 rows; w: (KC, Mpad) bf16; b: (1, Mpad) f32.  Mpad % 128 == 0.
    n, kc = a.shape
    mpad = w.shape[1]
    tn = _pick_tile(n, tile_n)
    return pl.pallas_call(
        _matmul_bias_kernel,
        out_shape=jax.ShapeDtypeStruct((n, mpad), jnp.float32),
        grid=(pl.cdiv(n, tn),),
        in_specs=[
            pl.BlockSpec((tn, kc), lambda i: (i, 0)),
            pl.BlockSpec((kc, mpad), lambda i: (0, 0)),
            pl.BlockSpec((1, mpad), lambda i: (0, 0)),
        ],
        out_specs=pl.BlockSpec((tn, mpad), lambda i: (i, 0)),
        compiler_params=pltpu.CompilerParams(dimension_semantics=("parallel",)),
    )(a, w, b)


def _pallas_deform_matmul(cols, ml, expand, w, b, *, tile_n=512):
    # cols: (N, K*Cin) bf16; ml: (N, K) f32; expand: (K, K*Cin) f32;
    # w: (K*Cin, Cout_pad) bf16; b: (1, Cout_pad) f32.
    n, ck = cols.shape
    k = ml.shape[1]
    mpad = w.shape[1]
    tn = _pick_tile(n, tile_n)
    return pl.pallas_call(
        _deform_matmul_kernel,
        out_shape=jax.ShapeDtypeStruct((n, mpad), jnp.float32),
        grid=(pl.cdiv(n, tn),),
        in_specs=[
            pl.BlockSpec((tn, ck), lambda i: (i, 0)),
            pl.BlockSpec((tn, k), lambda i: (i, 0)),
            pl.BlockSpec((k, ck), lambda i: (0, 0)),
            pl.BlockSpec((ck, mpad), lambda i: (0, 0)),
            pl.BlockSpec((1, mpad), lambda i: (0, 0)),
        ],
        out_specs=pl.BlockSpec((tn, mpad), lambda i: (i, 0)),
        compiler_params=pltpu.CompilerParams(dimension_semantics=("parallel",)),
    )(cols, ml, expand, w, b)


# ------------------------------ JAX glue -----------------------------------

def input_transform_nchw(x, stride, kernel_size, padding):
    # PyTorch DCNTranspose.input_transform (NCHW): zero-insert upsample + edge pad,
    # expressed as one lax.pad with interior padding.
    ip = stride - 1
    ph = kernel_size[0] - padding - 1
    pw = kernel_size[1] - padding - 1
    zero = jnp.zeros((), x.dtype)
    return jax.lax.pad(x, zero, ((0, 0, 0), (0, 0, 0), (ph, ph, ip), (pw, pw, ip)))


def input_transform_nhwc(x_nhwc, stride, kernel_size, padding):
    ip = stride - 1
    ph = kernel_size[0] - padding - 1
    pw = kernel_size[1] - padding - 1
    zero = jnp.zeros((), x_nhwc.dtype)
    return jax.lax.pad(x_nhwc, zero,
                       ((0, 0, 0), (ph, ph, ip), (pw, pw, ip), (0, 0, 0)))


def im2col_nhwc(x_nhwc, kh, kw):
    # x_nhwc: (B, H, W, C) -> rows (B*OH*OW, KH*KW*C), column order (i*kw+j)*C + c.
    # Channel-last stacking: no large transpose required.
    b, h, w, c = x_nhwc.shape
    oh, ow = h - kh + 1, w - kw + 1
    taps = [x_nhwc[:, i:i + oh, j:j + ow, :] for i in range(kh) for j in range(kw)]
    p = jnp.stack(taps, axis=3)                       # (B, OH, OW, K, C)
    return p.reshape(b * oh * ow, kh * kw * c), oh, ow


def bilinear_sample_nhwc(img_nhwc, y, x, out_dtype=jnp.bfloat16):
    # img_nhwc: (B, H, W, C); y, x: (B, OH, OW, K) float sample coords.
    # torchvision deform_conv2d semantics: each corner contributes only if inside.
    # Returns (B, OH, OW, K, C) in out_dtype (column order k*C + c downstream).
    B, H, W, C = img_nhwc.shape
    y0 = jnp.floor(y)
    x0 = jnp.floor(x)
    y1 = y0 + 1.0
    x1 = x0 + 1.0
    wy1 = y - y0
    wy0 = 1.0 - wy1
    wx1 = x - x0
    wx0 = 1.0 - wx1
    src = img_nhwc.reshape(B, H * W, C)

    def corner(yi, xi, wt):
        valid = (yi >= 0) & (yi <= H - 1) & (xi >= 0) & (xi <= W - 1)
        wv = wt * valid.astype(img_nhwc.dtype)        # fold validity into the weight
        yc = jnp.clip(yi, 0, H - 1).astype(jnp.int32)
        xc = jnp.clip(xi, 0, W - 1).astype(jnp.int32)
        flat = yc * W + xc                            # (B, OH, OW, K)

        def per_b(src_b, idx_b):
            g = jnp.take(src_b, idx_b.reshape(-1), axis=0)   # (OH*OW*K, C)
            return g.reshape(idx_b.shape + (C,))             # (OH, OW, K, C)

        vals = jax.vmap(per_b)(src, flat)             # (B, OH, OW, K, C)
        return vals * wv[..., None]

    out = (corner(y0, x0, wy0 * wx0) + corner(y0, x1, wy0 * wx1)
           + corner(y1, x0, wy1 * wx0) + corner(y1, x1, wy1 * wx1))
    return out.astype(out_dtype)


# --------------------------- module: DCNTranspose --------------------------

def init_dcn_transpose(key, in_channels, out_channels, up_factor=2, bias=True,
                       groups=1):
    if groups != 1:
        # TODO(synk): grouped offset-conv / grouped deform path not implemented.
        raise NotImplementedError("only groups=1 is implemented")
    if up_factor % 2 != 0:
        raise ValueError("up_factor must be even")
    ks = (up_factor * 2, up_factor * 2)
    K = ks[0] * ks[1]
    channels_ = groups * 3 * K

    # Static (Python-int) config — kept OUT of the jitted pytree.
    cfg = dict(in_channels=in_channels, out_channels=out_channels,
               up_factor=up_factor, kernel_size=ks, stride=up_factor,
               padding=up_factor // 2, groups=groups,
               off_out=channels_,
               off_out_pad=_round_up(channels_, 128),     # lane-dense output widths
               out_pad=_round_up(out_channels, 128))

    # conv_offset_mask is zero-initialized in the PyTorch module (init_offset).
    off_w = jnp.zeros((channels_, in_channels, ks[0], ks[1]), jnp.float32)
    off_b = jnp.zeros((channels_,), jnp.float32)

    # DeformConvTranspose weight: kaiming_uniform_(a=sqrt(5)) == U(-1/sqrt(fan_in), +)
    fan_in = (in_channels // groups) * K
    bound = 1.0 / math.sqrt(fan_in)
    kw_, kb_ = jax.random.split(key)
    dcn_w = jax.random.uniform(kw_, (out_channels, in_channels // groups, ks[0], ks[1]),
                               jnp.float32, minval=-bound, maxval=bound)
    dcn_b = (jax.random.uniform(kb_, (out_channels,), jnp.float32,
                                minval=-bound, maxval=bound)
             if bias else jnp.zeros((out_channels,), jnp.float32))

    # --- Precompute flattened, lane-dense (padded to x128), bf16 matmul weights ---
    # Row order = (i*kw+j)*Cin + c (matches im2col / gather column order).
    off_w_flat = off_w.transpose(2, 3, 1, 0).reshape(K * in_channels, channels_)
    # Permute output columns: torchvision interleaves dy_k/dx_k at channels 2k/2k+1;
    # reorder to [dy_0..dy_{K-1} | dx_0..dx_{K-1} | mask_0..mask_{K-1}] so the slices
    # of the Pallas output are contiguous lane slices (exact column permutation).
    perm = np.concatenate([np.arange(0, 2 * K, 2), np.arange(1, 2 * K, 2),
                           np.arange(2 * K, 3 * K)])
    off_w_flat = off_w_flat[:, perm]
    off_b = off_b[perm]
    off_w_flat = jnp.pad(off_w_flat, ((0, 0), (0, cfg["off_out_pad"] - channels_)))
    off_b_pad = jnp.pad(off_b, (0, cfg["off_out_pad"] - channels_)).reshape(1, -1)

    dcn_w_flip = dcn_w[:, :, ::-1, ::-1]                          # weight.flip(-1, -2)
    dcn_w_flat = dcn_w_flip.transpose(2, 3, 1, 0).reshape(K * in_channels, out_channels)
    dcn_w_flat = jnp.pad(dcn_w_flat, ((0, 0), (0, cfg["out_pad"] - out_channels)))
    dcn_b_pad = jnp.pad(dcn_b, (0, cfg["out_pad"] - out_channels)).reshape(1, -1)

    # Mask-expansion matrix: expand[k, k*Cin + c] = 1 (used as a tiny in-kernel matmul).
    expand = (jnp.arange(K * in_channels)[None, :] // in_channels
              == jnp.arange(K)[:, None]).astype(jnp.float32)

    params = {
        "offset_w_flat": off_w_flat.astype(jnp.bfloat16),
        "offset_b_pad": off_b_pad,
        "dcn_w_flat": dcn_w_flat.astype(jnp.bfloat16),
        "dcn_b_pad": dcn_b_pad,
        "mask_expand": expand,
        # raw params kept for the reference check in __main__
        "dcn_w": dcn_w, "dcn_b": dcn_b,
    }
    return cfg, params


def dcn_transpose_forward(cfg, params, x, *, tile_n=512):
    # cfg holds static Python ints (closed over / partial'd, never traced).
    ks, stride, pad = cfg["kernel_size"], cfg["stride"], cfg["padding"]
    cin, cout = cfg["in_channels"], cfg["out_channels"]
    kh, kw = ks
    K = kh * kw

    # 1) NCHW -> NHWC relayout on the small input, then zero-insert upsample + pad as a
    #    single lax.pad with interior padding; everything downstream is channel-last.
    x_nhwc = x.transpose(0, 2, 3, 1)                          # (B, H, W, Cin)
    xt_nhwc = input_transform_nhwc(x_nhwc, stride, ks, pad)   # (B, Ht, Wt, Cin) f32
    B = xt_nhwc.shape[0]

    # 2) conv_offset_mask: bf16 im2col rows + Pallas bf16 matmul(+bias), lane-dense out.
    #    NOTE: offsets feed coordinate math; switch this matmul to f32 operands if higher
    #    offset precision is ever needed (weights are zero-init here).
    patches, oh, ow = im2col_nhwc(xt_nhwc.astype(jnp.bfloat16), kh, kw)  # (N, K*Cin)
    n_rows = B * oh * ow
    offm = _pallas_matmul_bias(patches,
                               params["offset_w_flat"],
                               params["offset_b_pad"],
                               tile_n=tile_n)                 # (N, off_out_pad) f32

    # Columns were permuted at init: [dy | dx | mask] are contiguous lane slices.
    off_y = offm[:, 0:K].reshape(B, oh, ow, K)
    off_x = offm[:, K:2 * K].reshape(B, oh, ow, K)
    ml_rows = offm[:, 2 * K:3 * K]                            # (N, K) mask logits

    # 3) deformable sampling locations (deform_conv2d defaults: stride=1, pad=0, dil=1).
    ky, kx = jnp.meshgrid(jnp.arange(kh, dtype=jnp.float32),
                          jnp.arange(kw, dtype=jnp.float32), indexing="ij")
    ky = ky.reshape(-1)
    kx = kx.reshape(-1)
    py = jnp.arange(oh, dtype=jnp.float32)
    px = jnp.arange(ow, dtype=jnp.float32)
    y = py[None, :, None, None] + ky[None, None, None, :] + off_y    # (B, oh, ow, K)
    xs = px[None, None, :, None] + kx[None, None, None, :] + off_x

    # TODO(synk): fuse the data-dependent bilinear gather into the deform Pallas kernel
    # (memory_space=pl.ANY + manual DMA / scalar prefetch); it stays in plain-JAX glue.
    sampled = bilinear_sample_nhwc(xt_nhwc, y, xs)            # (B, oh, ow, K, Cin) bf16
    cols = sampled.reshape(n_rows, K * cin)                   # trailing-dim merge (free)

    # 4) deform hot path in Pallas: softmax(mask) * cols @ flip(W) + bias on bf16 MXU.
    out_rows = _pallas_deform_matmul(cols,
                                     ml_rows,
                                     params["mask_expand"],
                                     params["dcn_w_flat"],
                                     params["dcn_b_pad"],
                                     tile_n=tile_n)           # (N, out_pad) f32
    out = out_rows[:, :cout].reshape(B, oh, ow, cout).transpose(0, 3, 1, 2)
    return out                                                # (B, Cout, up*H, up*W)


# ---------------------------------- main ------------------------------------

if __name__ == "__main__":
    key = jax.random.PRNGKey(0)
    k_x, k_p = jax.random.split(key)

    B, Cin, H, W = 2, 4, 16, 16
    Cout, up = 8, 2

    x = jax.random.normal(k_x, (B, Cin, H, W), jnp.float32)
    cfg, params = init_dcn_transpose(k_p, Cin, Cout, up_factor=up, bias=True, groups=1)

    # Static config is closed over via partial, so jit only traces arrays.
    fwd = jax.jit(functools.partial(dcn_transpose_forward, cfg))
    out = fwd(params, x)
    out = jax.block_until_ready(out)
    assert out.shape == (B, Cout, up * H, up * W), out.shape

    # Reference check: with the zero-initialized offset conv, offsets are 0 and the
    # modulation mask is uniform 1/K, so the result equals conv(xt, flip(W))/K + bias.
    ks = cfg["kernel_size"]
    K = ks[0] * ks[1]
    xt = input_transform_nchw(x, cfg["stride"], ks, cfg["padding"])
    w_flip = params["dcn_w"][:, :, ::-1, ::-1]
    ref = jax.lax.conv_general_dilated(
        xt, w_flip, window_strides=(1, 1), padding="VALID",
        dimension_numbers=("NCHW", "OIHW", "NCHW"),
        precision=jax.lax.Precision.HIGHEST)
    ref = ref / K + params["dcn_b"][None, :, None, None]
    # bf16 MXU operands (f32 accumulate) + approx reciprocal -> loosened tolerance.
    np.testing.assert_allclose(np.asarray(out), np.asarray(ref), rtol=2e-2, atol=2e-2)

    print("KERNEL_OK")
</pallas_src>

<mosaic_0001>
module attributes {stable_mosaic.version = 11 : i64} {
  func.func @_matmul_bias_kernel(%arg0: i32, %arg1: memref<512x64xbf16, #tpu.memory_space<vmem>>, %arg2: memref<64x128xbf16, #tpu.memory_space<vmem>>, %arg3: memref<1x128xf32, #tpu.memory_space<vmem>>, %arg4: memref<512x128xf32, #tpu.memory_space<vmem>>) attributes {dimension_semantics = [#tpu.dimension_semantics<parallel>], iteration_bounds = array<i64: 4>, scalar_prefetch = 0 : i64, scratch_operands = 0 : i64, tpu.core_type = #tpu.core_type<tc>, window_params = [{transform_indices = @transform_0, window_bounds = array<i64: 512, 64>}, {pipeline_mode = #tpu.pipeline_mode<synchronous>, transform_indices = @transform_1, window_bounds = array<i64: 64, 128>}, {pipeline_mode = #tpu.pipeline_mode<synchronous>, transform_indices = @transform_2, window_bounds = array<i64: 1, 128>}, {transform_indices = @transform_3, window_bounds = array<i64: 512, 128>}]} {
    %c0 = arith.constant 0 : index
    %c0_0 = arith.constant 0 : index
    %0 = vector.load %arg1[%c0, %c0_0] : memref<512x64xbf16, #tpu.memory_space<vmem>>, vector<512x64xbf16>
    %c0_1 = arith.constant 0 : index
    %c0_2 = arith.constant 0 : index
    %1 = vector.load %arg2[%c0_1, %c0_2] : memref<64x128xbf16, #tpu.memory_space<vmem>>, vector<64x128xbf16>
    %cst = arith.constant dense<0.000000e+00> : vector<512x128xf32>
    %2 = tpu.matmul %0, %1, %cst {dimension_numbers = #tpu.dot_dimension_numbers<[1], [0], [0], [1], [0, 0, 1, 1], [], []>} : vector<512x64xbf16>, vector<64x128xbf16>, vector<512x128xf32> -> vector<512x128xf32>
    %c0_3 = arith.constant 0 : index
    %c0_4 = arith.constant 0 : index
    %3 = vector.load %arg3[%c0_3, %c0_4] : memref<1x128xf32, #tpu.memory_space<vmem>>, vector<1x128xf32>
    %4 = vector.broadcast %3 : vector<1x128xf32> to vector<512x128xf32>
    %5 = arith.addf %2, %4 : vector<512x128xf32>
    %c0_5 = arith.constant 0 : index
    %c0_6 = arith.constant 0 : index
    %6 = vector.load %arg4[%c0_5, %c0_6] : memref<512x128xf32, #tpu.memory_space<vmem>>, vector<512x128xf32>
    tpu.vector_store %arg4[%c0_5, %c0_6], %5 {strides = array<i32>} : memref<512x128xf32, #tpu.memory_space<vmem>>, vector<512x128xf32>,
    return
  }
  func.func @transform_0(%arg0: i32) -> (i32, i32) {
    %c0_i32 = arith.constant 0 : i32
    %c0_i32_0 = arith.constant 0 : i32
    return %arg0, %c0_i32 : i32, i32
  }
  func.func @transform_1(%arg0: i32) -> (i32, i32) {
    %c0_i32 = arith.constant 0 : i32
    %c0_i32_0 = arith.constant 0 : i32
    %c0_i32_1 = arith.constant 0 : i32
    return %c0_i32, %c0_i32_0 : i32, i32
  }
  func.func @transform_2(%arg0: i32) -> (i32, i32) {
    %c0_i32 = arith.constant 0 : i32
    %c0_i32_0 = arith.constant 0 : i32
    %c0_i32_1 = arith.constant 0 : i32
    return %c0_i32, %c0_i32_0 : i32, i32
  }
  func.func @transform_3(%arg0: i32) -> (i32, i32) {
    %c0_i32 = arith.constant 0 : i32
    %c0_i32_0 = arith.constant 0 : i32
    return %arg0, %c0_i32 : i32, i32
  }
}

module attributes {stable_mosaic.version = 11 : i64} {
  func.func @_deform_matmul_kernel(%arg0: i32, %arg1: memref<512x64xbf16, #tpu.memory_space<vmem>>, %arg2: memref<512x16xf32, #tpu.memory_space<vmem>>, %arg3: memref<16x64xf32, #tpu.memory_space<vmem>>, %arg4: memref<64x128xbf16, #tpu.memory_space<vmem>>, %arg5: memref<1x128xf32, #tpu.memory_space<vmem>>, %arg6: memref<512x128xf32, #tpu.memory_space<vmem>>) attributes {dimension_semantics = [#tpu.dimension_semantics<parallel>], iteration_bounds = array<i64: 4>, scalar_prefetch = 0 : i64, scratch_operands = 0 : i64, tpu.core_type = #tpu.core_type<tc>, window_params = [{transform_indices = @transform_0, window_bounds = array<i64: 512, 64>}, {transform_indices = @transform_1, window_bounds = array<i64: 512, 16>}, {pipeline_mode = #tpu.pipeline_mode<synchronous>, transform_indices = @transform_2, window_bounds = array<i64: 16, 64>}, {pipeline_mode = #tpu.pipeline_mode<synchronous>, transform_indices = @transform_3, window_bounds = array<i64: 64, 128>}, {pipeline_mode = #tpu.pipeline_mode<synchronous>, transform_indices = @transform_4, window_bounds = array<i64: 1, 128>}, {transform_indices = @transform_5, window_bounds = array<i64: 512, 128>}]} {
    %c0 = arith.constant 0 : index
    %c0_0 = arith.constant 0 : index
    %0 = vector.load %arg2[%c0, %c0_0] : memref<512x16xf32, #tpu.memory_space<vmem>>, vector<512x16xf32>
    %cst = arith.constant dense<0xFF800000> : vector<512xf32>
    %1 = vector.multi_reduction <maximumf>, %0, %cst [1] : vector<512x16xf32> to vector<512xf32>
    %2 = vector.shape_cast %1 : vector<512xf32> to vector<512x1xf32>
    %3 = vector.broadcast %2 : vector<512x1xf32> to vector<512x16xf32>
    %4 = arith.subf %0, %3 : vector<512x16xf32>
    %5 = math.exp %4 : vector<512x16xf32>
    %cst_1 = arith.constant dense<0.000000e+00> : vector<512xf32>
    %6 = vector.multi_reduction <add>, %5, %cst_1 [1] : vector<512x16xf32> to vector<512xf32>
    %7 = vector.shape_cast %6 : vector<512xf32> to vector<512x1xf32>
    %8 = tpu.reciprocal %7 {approx = true} : vector<512x1xf32> -> vector<512x1xf32>
    %9 = vector.broadcast %8 : vector<512x1xf32> to vector<512x16xf32>
    %10 = arith.mulf %5, %9 : vector<512x16xf32>
    %c0_2 = arith.constant 0 : index
    %c0_3 = arith.constant 0 : index
    %11 = vector.load %arg3[%c0_2, %c0_3] : memref<16x64xf32, #tpu.memory_space<vmem>>, vector<16x64xf32>
    %cst_4 = arith.constant dense<0.000000e+00> : vector<512x64xf32>
    %12 = tpu.matmul %10, %11, %cst_4 {dimension_numbers = #tpu.dot_dimension_numbers<[1], [0], [0], [1], [0, 0, 1, 1], [], []>} : vector<512x16xf32>, vector<16x64xf32>, vector<512x64xf32> -> vector<512x64xf32>
    %c0_5 = arith.constant 0 : index
    %c0_6 = arith.constant 0 : index
    %13 = vector.load %arg1[%c0_5, %c0_6] : memref<512x64xbf16, #tpu.memory_space<vmem>>, vector<512x64xbf16>
    %14 = arith.truncf %12 : vector<512x64xf32> to vector<512x64xbf16>
    %15 = arith.mulf %13, %14 : vector<512x64xbf16>
    %c0_7 = arith.constant 0 : index
    %c0_8 = arith.constant 0 : index
    %16 = vector.load %arg4[%c0_7, %c0_8] : memref<64x128xbf16, #tpu.memory_space<vmem>>, vector<64x128xbf16>
    %cst_9 = arith.constant dense<0.000000e+00> : vector<512x128xf32>
    %17 = tpu.matmul %15, %16, %cst_9 {dimension_numbers = #tpu.dot_dimension_numbers<[1], [0], [0], [1], [0, 0, 1, 1], [], []>} : vector<512x64xbf16>, vector<64x128xbf16>, vector<512x128xf32> -> vector<512x128xf32>
    %c0_10 = arith.constant 0 : index
    %c0_11 = arith.constant 0 : index
    %18 = vector.load %arg5[%c0_10, %c0_11] : memref<1x128xf32, #tpu.memory_space<vmem>>, vector<1x128xf32>
    %19 = vector.broadcast %18 : vector<1x128xf32> to vector<512x128xf32>
    %20 = arith.addf %17, %19 : vector<512x128xf32>
    %c0_12 = arith.constant 0 : index
    %c0_13 = arith.constant 0 : index
    %21 = vector.load %arg6[%c0_12, %c0_13] : memref<512x128xf32, #tpu.memory_space<vmem>>, vector<512x128xf32>
    tpu.vector_store %arg6[%c0_12, %c0_13], %20 {strides = array<i32>} : memref<512x128xf32, #tpu.memory_space<vmem>>, vector<512x128xf32>,
    return
  }
  func.func @transform_0(%arg0: i32) -> (i32, i32) {
    %c0_i32 = arith.constant 0 : i32
    %c0_i32_0 = arith.constant 0 : i32
    return %arg0, %c0_i32 : i32, i32
  }
  func.func @transform_1(%arg0: i32) -> (i32, i32) {
    %c0_i32 = arith.constant 0 : i32
    %c0_i32_0 = arith.constant 0 : i32
    return %arg0, %c0_i32 : i32, i32
  }
  func.func @transform_2(%arg0: i32) -> (i32, i32) {
    %c0_i32 = arith.constant 0 : i32
    %c0_i32_0 = arith.constant 0 : i32
    %c0_i32_1 = arith.constant 0 : i32
    return %c0_i32, %c0_i32_0 : i32, i32
  }
  func.func @transform_3(%arg0: i32) -> (i32, i32) {
    %c0_i32 = arith.constant 0 : i32
    %c0_i32_0 = arith.constant 0 : i32
    %c0_i32_1 = arith.constant 0 : i32
    return %c0_i32, %c0_i32_0 : i32, i32
  }
  func.func @transform_4(%arg0: i32) -> (i32, i32) {
    %c0_i32 = arith.constant 0 : i32
    %c0_i32_0 = arith.constant 0 : i32
    %c0_i32_1 = arith.constant 0 : i32
    return %c0_i32, %c0_i32_0 : i32, i32
  }
  func.func @transform_5(%arg0: i32) -> (i32, i32) {
    %c0_i32 = arith.constant 0 : i32
    %c0_i32_0 = arith.constant 0 : i32
    return %arg0, %c0_i32 : i32, i32
  }
}

</mosaic_0001>

<llo_original>
// kernel: dcn_transpose_forward.2
$region0: #{dcn_transpose_forward.2}
  #allocation0 [shape = 'u32[]', space=smem, size = 0x4, offset = 0x4, fixed_abs, tag = 'smem constant byte address 0x4 - core index']
  #allocation1 [shape = 'u32[144,128]{1,0:T(1,128)}', space=vmem, size = 0x12000, scoped, tag = 'internal scratch']
  %s0 = inlined_call_operand.vmem [shape: bf16[2048,64], index: 0, kind: input, shape index: {}]
  %s1 = inlined_call_operand.hbm [shape: bf16[64,128], index: 1, kind: input, shape index: {}]
  %s2 = inlined_call_operand.hbm [shape: f32[1,128], index: 2, kind: input, shape index: {}]
  %s3 = inlined_call_operand.vmem [shape: f32[2048,128], index: 3, kind: output, shape index: {}]
  %s4 = sld [smem:[#allocation0]]
  $region53: #{dcn_transpose_forward.2} parent=0
    _
  %s6 = ssub.s32 1, %s4
  %s7 = scalar_select 0, %s6, %s4
  $region1: #{dcn_transpose_forward.2} parent=0
    #allocation2 [shape = 'u8[16384]{0}', space=vmem, size = 0x4000, scoped, tag = 'input window, operand 1, single buffered']
    #allocation3 [shape = 's32[2]{0}', space=sflag, size = 0x8, scoped, tag = 'scoped memory for dcn_transpose_forward.2']
    #allocation4 [shape = 'u8[512]{0}', space=vmem, size = 0x400, scoped, tag = 'input window, operand 2, single buffered']
    #allocation5 [shape = 's32[1]{0}', space=sflag, size = 0x4, scoped, tag = 'scoped memory for dcn_transpose_forward.2']
    %8 = vsyncpa [#allocation3], 0
    %9 = vsyncpa [#allocation5], 0
    loop: start=0, step=1, limit=6
    $region2: #{dcn_transpose_forward.2} parent=1 // loop_pre_header
      _
    $region3: #{dcn_transpose_forward.2} parent=1 // loop_header
      %s11 = sphi 0, %s15
      %p12 = scmp.ge.s32.totalorder %s11, 6
      %s21 = sphi 0, %s23
      %s24 = sphi 0, %s21
      %s25 = sphi 0, %s24
      %s41 = sphi 0, %s25
      %s45 = sphi 0, %s45
      %s47 = sphi 0, %s45
      %s48 = sphi 0, %s47
      %s62 = sphi 0, %s48
      %s66 = sphi 0, %s66
      %s68 = sphi 0, %s66
      %s69 = sphi 0, %s68
      %s83 = sphi 0, %s69
      %s89 = sphi 0, %s91
      %s92 = sphi 0, %s89
      %s93 = sphi 0, %s92
      %s109 = sphi 0, %s93
    $region4: #{dcn_transpose_forward.2} parent=1 // loop_header_branch
      %14 = sbr.rel (%p12) target = $region8
    $region5: #{dcn_transpose_forward.2} parent=1 // loop_body
      %s16 = ssub.s32 %s11, 1
      %s17 = ssub.s32 %s11, 2
      %s18 = sadd.s32 %s11, 1
      %s19 = ssub.s32 %s11, %s18
      %p20 = scmp.eq.s32.totalorder %s19, 0
      %s22 = sadd.s32 %s21, 1
      %s23 = scalar_select %p20, %s21, %s22
      %p26 = pneg %p20
      %p27 = scmp.eq.s32.totalorder %s11, 3
      %p28 = por %p26, %p27
      %p29 = scmp.ne.s32.totalorder %s21, %s24
      %p30 = scmp.eq.s32.totalorder %s11, 0
      %p31 = por %p29, %p30
      %p32 = scmp.ne.s32.totalorder %s21, %s24
      %p33 = scmp.eq.s32.totalorder %s16, 3
      %p34 = por %p32, %p33
      %p35 = scmp.ne.s32.totalorder %s24, %s25
      %p36 = scmp.eq.s32.totalorder %s16, 0
      %p37 = por %p35, %p36
      %p38 = scmp.ne.s32.totalorder %s24, %s25
      %p39 = scmp.eq.s32.totalorder %s17, 3
      %p40 = por %p38, %p39
      %p42 = scmp.ne.s32.totalorder %s25, %s41
      %p43 = scmp.eq.s32.totalorder %s17, 0
      %p44 = por %p42, %p43
      %s46 = sadd.s32 %s45, 1
      %p49 = scmp.eq.s32.totalorder %s11, 3
      %p50 = scmp.ne.s32.totalorder %s45, %s47
      %p51 = scmp.eq.s32.totalorder %s11, 0
      %p52 = por %p50, %p51
      %p53 = scmp.ne.s32.totalorder %s45, %s47
      %p54 = scmp.eq.s32.totalorder %s16, 3
      %p55 = por %p53, %p54
      %p56 = scmp.ne.s32.totalorder %s47, %s48
      %p57 = scmp.eq.s32.totalorder %s16, 0
      %p58 = por %p56, %p57
      %p59 = scmp.ne.s32.totalorder %s47, %s48
      %p60 = scmp.eq.s32.totalorder %s17, 3
      %p61 = por %p59, %p60
      %p63 = scmp.ne.s32.totalorder %s48, %s62
      %p64 = scmp.eq.s32.totalorder %s17, 0
      %p65 = por %p63, %p64
      %s67 = sadd.s32 %s66, 1
      %p70 = scmp.eq.s32.totalorder %s11, 3
      %p71 = scmp.ne.s32.totalorder %s66, %s68
      %p72 = scmp.eq.s32.totalorder %s11, 0
      %p73 = por %p71, %p72
      %p74 = scmp.ne.s32.totalorder %s66, %s68
      %p75 = scmp.eq.s32.totalorder %s16, 3
      %p76 = por %p74, %p75
      %p77 = scmp.ne.s32.totalorder %s68, %s69
      %p78 = scmp.eq.s32.totalorder %s16, 0
      %p79 = por %p77, %p78
      %p80 = scmp.ne.s32.totalorder %s68, %s69
      %p81 = scmp.eq.s32.totalorder %s17, 3
      %p82 = por %p80, %p81
      %p84 = scmp.ne.s32.totalorder %s69, %s83
      %p85 = scmp.eq.s32.totalorder %s17, 0
      %p86 = por %p84, %p85
      %s87 = ssub.s32 %s11, %s18
      %p88 = scmp.eq.s32.totalorder %s87, 0
      %s90 = sadd.s32 %s89, 1
      %s91 = scalar_select %p88, %s89, %s90
      %p94 = pneg %p88
      %p95 = scmp.eq.s32.totalorder %s11, 3
      %p96 = por %p94, %p95
      %p97 = scmp.ne.s32.totalorder %s89, %s92
      %p98 = scmp.eq.s32.totalorder %s11, 0
      %p99 = por %p97, %p98
      %p100 = scmp.ne.s32.totalorder %s89, %s92
      %p101 = scmp.eq.s32.totalorder %s16, 3
      %p102 = por %p100, %p101
      %p103 = scmp.ne.s32.totalorder %s92, %s93
      %p104 = scmp.eq.s32.totalorder %s16, 0
      %p105 = por %p103, %p104
      %p106 = scmp.ne.s32.totalorder %s92, %s93
      %p107 = scmp.eq.s32.totalorder %s17, 3
      %p108 = por %p106, %p107
      %p110 = scmp.ne.s32.totalorder %s93, %s109
      %p111 = scmp.eq.s32.totalorder %s17, 0
      %p112 = por %p110, %p111
      %p113 = scmp.le.s32.totalorder 1, %s11
      %p114 = scmp.lt.s32.totalorder %s11, 5
      %p115 = pnand %p113, %p114
      %p116 = pneg %p115
      // Predicated region
      $region9: #{dcn_transpose_forward.2} parent=5 // pred_check
        _
      $region10: #{dcn_transpose_forward.2} parent=5 // pred_check_branch
        %118 = sbr.rel (%p115) target = $region12
      $region11: #{dcn_transpose_forward.2} parent=5 // pred_region
        %s119 = ssub.s32 %s11, 1
        // Predicated region
        $region13: #{dcn_transpose_forward.2} parent=11 // pred_check
          %p120 = pneg %p58
        $region14: #{dcn_transpose_forward.2} parent=11 // pred_check_branch
          %122 = sbr.rel (%p120) target = $region16
        $region15: #{dcn_transpose_forward.2} parent=11 // pred_region
          %s124 = ssub.s32 512, 512
          %125 = vsyncadd [#allocation3], %s124
          %s126 = sshll.u32 [#allocation2], 4
          %s127 = int_to_ptr.vmem [resolvable:$true] %s126
          %132 = dma.hbm_to_vmem [thread:$0]  %s1, 512, %s127, [#allocation3], 64, 64, 4
        $region16: #{dcn_transpose_forward.2} parent=11 // pred_fallthru
          _
        // Predicated region
        $region17: #{dcn_transpose_forward.2} parent=11 // pred_check
          %p133 = pneg %p79
        $region18: #{dcn_transpose_forward.2} parent=11 // pred_check_branch
          %135 = sbr.rel (%p133) target = $region20
        $region19: #{dcn_transpose_forward.2} parent=11 // pred_region
          %s137 = ssub.s32 16, 16
          %138 = vsyncadd [#allocation5], %s137
          %s140 = sshll.u32 [#allocation4], 4
          %s141 = int_to_ptr.vmem [resolvable:$true] %s140
          %143 = dma.hbm_to_vmem [thread:$0]  %s2, 16, %s141, [#allocation5]
        $region20: #{dcn_transpose_forward.2} parent=11 // pred_fallthru
          _
      $region12: #{dcn_transpose_forward.2} parent=5 // pred_fallthru
        _
      %p144 = scmp.lt.s32.totalorder %s11, 4
      // Predicated region
      $region21: #{dcn_transpose_forward.2} parent=5 // pred_check
        %p145 = pneg %p144
      $region22: #{dcn_transpose_forward.2} parent=5 // pred_check_branch
        %147 = sbr.rel (%p145) target = $region24
      $region23: #{dcn_transpose_forward.2} parent=5 // pred_region
        // Predicated region
        $region25: #{dcn_transpose_forward.2} parent=23 // pred_check
          %p148 = pneg %p31
        $region26: #{dcn_transpose_forward.2} parent=23 // pred_check_branch
          %150 = sbr.rel (%p148) target = $region28
        $region27: #{dcn_transpose_forward.2} parent=23 // pred_region
          %s151 = smul.u32 64, %s11
          %p152 = scmp.lt.s32.totalorder %s151, 255
          %s153 = scalar_select %p152, %s151, 255
          %s154 = smul.addr %s153, 4
          %s155 = scalar_lea.vmem %s0, %s154
          %s156 = smul.u32 64, %s11
        $region28: #{dcn_transpose_forward.2} parent=23 // pred_fallthru
          _
      $region24: #{dcn_transpose_forward.2} parent=5 // pred_fallthru
        _
      %p157 = scmp.le.s32.totalorder 1, %s11
      %p158 = scmp.lt.s32.totalorder %s11, 5
      %p159 = pnand %p157, %p158
      %p160 = pneg %p159
      // Predicated region
      $region29: #{dcn_transpose_forward.2} parent=5 // pred_check
        _
      $region30: #{dcn_transpose_forward.2} parent=5 // pred_check_branch
        %162 = sbr.rel (%p159) target = $region32
      $region31: #{dcn_transpose_forward.2} parent=5 // pred_region
        %s163 = ssub.s32 %s11, 1
        // Predicated region
        $region33: #{dcn_transpose_forward.2} parent=31 // pred_check
          %p164 = pneg %p58
        $region34: #{dcn_transpose_forward.2} parent=31 // pred_check_branch
          %166 = sbr.rel (%p164) target = $region36
        $region35: #{dcn_transpose_forward.2} parent=31 // pred_region
          %167 = dma.done [#allocation3], 512
        $region36: #{dcn_transpose_forward.2} parent=31 // pred_fallthru
          _
        // Predicated region
        $region37: #{dcn_transpose_forward.2} parent=31 // pred_check
          %p168 = pneg %p79
        $region38: #{dcn_transpose_forward.2} parent=31 // pred_check_branch
          %170 = sbr.rel (%p168) target = $region40
        $region39: #{dcn_transpose_forward.2} parent=31 // pred_region
          %171 = dma.done [#allocation5], 16
        $region40: #{dcn_transpose_forward.2} parent=31 // pred_fallthru
          _
        %s172 = smul.u32 64, %s16
        %p173 = scmp.lt.s32.totalorder %s172, 255
        %s174 = scalar_select %p173, %s172, 255
        %s175 = smul.addr %s174, 4
        %s176 = scalar_lea.vmem %s0, %s175
        %p177 = pneg %p37
        %p178 = pneg %p34
        %p179 = pneg %p58
        %p180 = pneg %p55
        %p181 = pneg %p79
        %p182 = pneg %p76
        %p183 = pneg %p105
        %p184 = pneg %p102
        %s185 = smul.u32 64, %s16
        %p186 = scmp.lt.s32.totalorder %s185, 255
        %s187 = scalar_select %p186, %s185, 255
        %s188 = smul.addr %s187, 8
        %s189 = scalar_lea.vmem %s3, %s188
        %s190 = smul.u32 64, %s16
        %p191 = scmp.lt.s32.totalorder %s190, 255
        %s192 = scalar_select %p191, %s190, 255
        %s193 = smul.addr %s192, 4
        %s194 = scalar_lea.vmem %s0, %s193
        %s195 = smul.u32 64, %s16
        %s196 = smul.u32 64, %s16
        %p197 = scmp.lt.s32.totalorder %s196, 255
        %s198 = scalar_select %p197, %s196, 255
        %s199 = smul.addr %s198, 8
        %s200 = scalar_lea.vmem %s3, %s199
        %s201 = smul.u32 64, %s16
        %v203 = vld [vmem:[%s194] sm:$0xf]
        %v204 = vld [vmem:[%s194 + $0x4] sm:$0xf]
        %v205 = vld [vmem:[%s194 + $0x8] sm:$0xf]
        %v206 = vld [vmem:[%s194 + $0xc] sm:$0xf]
        %v207 = vld [vmem:[%s194 + $0x10] sm:$0xf]
        %v208 = vld [vmem:[%s194 + $0x14] sm:$0xf]
        %v209 = vld [vmem:[%s194 + $0x18] sm:$0xf]
        %v210 = vld [vmem:[%s194 + $0x1c] sm:$0xf]
        %v211 = vld [vmem:[%s194 + $0x20] sm:$0xf]
        %v212 = vld [vmem:[%s194 + $0x24] sm:$0xf]
        %v213 = vld [vmem:[%s194 + $0x28] sm:$0xf]
        %v214 = vld [vmem:[%s194 + $0x2c] sm:$0xf]
        %v215 = vld [vmem:[%s194 + $0x30] sm:$0xf]
        %v216 = vld [vmem:[%s194 + $0x34] sm:$0xf]
        %v217 = vld [vmem:[%s194 + $0x38] sm:$0xf]
        %v218 = vld [vmem:[%s194 + $0x3c] sm:$0xf]
        %v219 = vld [vmem:[%s194 + $0x40] sm:$0xf]
        %v220 = vld [vmem:[%s194 + $0x44] sm:$0xf]
        %v221 = vld [vmem:[%s194 + $0x48] sm:$0xf]
        %v222 = vld [vmem:[%s194 + $0x4c] sm:$0xf]
        %v223 = vld [vmem:[%s194 + $0x50] sm:$0xf]
        %v224 = vld [vmem:[%s194 + $0x54] sm:$0xf]
        %v225 = vld [vmem:[%s194 + $0x58] sm:$0xf]
        %v226 = vld [vmem:[%s194 + $0x5c] sm:$0xf]
        %v227 = vld [vmem:[%s194 + $0x60] sm:$0xf]
        %v228 = vld [vmem:[%s194 + $0x64] sm:$0xf]
        %v229 = vld [vmem:[%s194 + $0x68] sm:$0xf]
        %v230 = vld [vmem:[%s194 + $0x6c] sm:$0xf]
        %v231 = vld [vmem:[%s194 + $0x70] sm:$0xf]
        %v232 = vld [vmem:[%s194 + $0x74] sm:$0xf]
        %v233 = vld [vmem:[%s194 + $0x78] sm:$0xf]
        %v234 = vld [vmem:[%s194 + $0x7c] sm:$0xf]
        %v235 = vld [vmem:[%s194 + $0x80] sm:$0xf]
        %v236 = vld [vmem:[%s194 + $0x84] sm:$0xf]
        %v237 = vld [vmem:[%s194 + $0x88] sm:$0xf]
        %v238 = vld [vmem:[%s194 + $0x8c] sm:$0xf]
        %v239 = vld [vmem:[%s194 + $0x90] sm:$0xf]
        %v240 = vld [vmem:[%s194 + $0x94] sm:$0xf]
        %v241 = vld [vmem:[%s194 + $0x98] sm:$0xf]
        %v242 = vld [vmem:[%s194 + $0x9c] sm:$0xf]
        %v243 = vld [vmem:[%s194 + $0xa0] sm:$0xf]
        %v244 = vld [vmem:[%s194 + $0xa4] sm:$0xf]
        %v245 = vld [vmem:[%s194 + $0xa8] sm:$0xf]
        %v246 = vld [vmem:[%s194 + $0xac] sm:$0xf]
        %v247 = vld [vmem:[%s194 + $0xb0] sm:$0xf]
        %v248 = vld [vmem:[%s194 + $0xb4] sm:$0xf]
        %v249 = vld [vmem:[%s194 + $0xb8] sm:$0xf]
        %v250 = vld [vmem:[%s194 + $0xbc] sm:$0xf]
        %v251 = vld [vmem:[%s194 + $0xc0] sm:$0xf]
        %v252 = vld [vmem:[%s194 + $0xc4] sm:$0xf]
        %v253 = vld [vmem:[%s194 + $0xc8] sm:$0xf]
        %v254 = vld [vmem:[%s194 + $0xcc] sm:$0xf]
        %v255 = vld [vmem:[%s194 + $0xd0] sm:$0xf]
        %v256 = vld [vmem:[%s194 + $0xd4] sm:$0xf]
        %v257 = vld [vmem:[%s194 + $0xd8] sm:$0xf]
        %v258 = vld [vmem:[%s194 + $0xdc] sm:$0xf]
        %v259 = vld [vmem:[%s194 + $0xe0] sm:$0xf]
        %v260 = vld [vmem:[%s194 + $0xe4] sm:$0xf]
        %v261 = vld [vmem:[%s194 + $0xe8] sm:$0xf]
        %v262 = vld [vmem:[%s194 + $0xec] sm:$0xf]
        %v263 = vld [vmem:[%s194 + $0xf0] sm:$0xf]
        %v264 = vld [vmem:[%s194 + $0xf4] sm:$0xf]
        %v265 = vld [vmem:[%s194 + $0xf8] sm:$0xf]
        %v266 = vld [vmem:[%s194 + $0xfc] sm:$0xf]
        %v267 = vld [vmem:[#allocation2] sm:$0xf]
        %v268 = vld [vmem:[#allocation2 + $0x4] sm:$0xf]
        %v269 = vld [vmem:[#allocation2 + $0x8] sm:$0xf]
        %v270 = vld [vmem:[#allocation2 + $0xc] sm:$0xf]
        %v271 = vld [vmem:[#allocation2 + $0x10] sm:$0xf]
        %v272 = vld [vmem:[#allocation2 + $0x14] sm:$0xf]
        %v273 = vld [vmem:[#allocation2 + $0x18] sm:$0xf]
        %v274 = vld [vmem:[#allocation2 + $0x1c] sm:$0xf]
        %v275 = vld [vmem:[#allocation4] sm:$0x1]
        %v277 = vlaneseq
        %v278 = vshrl.u32 %v277, 7
        %v279 = vsub.s32 0, %v278
        %v280 = vrot.slane %v275, %v279
        %v346 = vunpack.c.l.b16 %v203
        %v347 = vunpack.c.l.b16 %v204
        %v348 = vunpack.c.l.b16 %v205
        %v349 = vunpack.c.l.b16 %v206
        %v350 = vunpack.c.l.b16 %v207
        %v351 = vunpack.c.l.b16 %v208
        %v352 = vunpack.c.l.b16 %v209
        %v353 = vunpack.c.l.b16 %v210
        %v354 = vunpack.c.l.b16 %v211
        %v355 = vunpack.c.l.b16 %v212
        %v356 = vunpack.c.l.b16 %v213
        %v357 = vunpack.c.l.b16 %v214
        %v358 = vunpack.c.l.b16 %v215
        %v359 = vunpack.c.l.b16 %v216
        %v360 = vunpack.c.l.b16 %v217
        %v361 = vunpack.c.l.b16 %v218
        %v362 = vunpack.c.l.b16 %v219
        %v363 = vunpack.c.l.b16 %v220
        %v364 = vunpack.c.l.b16 %v221
        %v365 = vunpack.c.l.b16 %v222
        %v366 = vunpack.c.l.b16 %v223
        %v367 = vunpack.c.l.b16 %v224
        %v368 = vunpack.c.l.b16 %v225
        %v369 = vunpack.c.l.b16 %v226
        %v370 = vunpack.c.l.b16 %v227
        %v371 = vunpack.c.l.b16 %v228
        %v372 = vunpack.c.l.b16 %v229
        %v373 = vunpack.c.l.b16 %v230
        %v374 = vunpack.c.l.b16 %v231
        %v375 = vunpack.c.l.b16 %v232
        %v376 = vunpack.c.l.b16 %v233
        %v377 = vunpack.c.l.b16 %v234
        %v378 = vunpack.c.l.b16 %v235
        %v379 = vunpack.c.l.b16 %v236
        %v380 = vunpack.c.l.b16 %v237
        %v381 = vunpack.c.l.b16 %v238
        %v382 = vunpack.c.l.b16 %v239
        %v383 = vunpack.c.l.b16 %v240
        %v384 = vunpack.c.l.b16 %v241
        %v385 = vunpack.c.l.b16 %v242
        %v386 = vunpack.c.l.b16 %v243
        %v387 = vunpack.c.l.b16 %v244
        %v388 = vunpack.c.l.b16 %v245
        %v389 = vunpack.c.l.b16 %v246
        %v390 = vunpack.c.l.b16 %v247
        %v391 = vunpack.c.l.b16 %v248
        %v392 = vunpack.c.l.b16 %v249
        %v393 = vunpack.c.l.b16 %v250
        %v394 = vunpack.c.l.b16 %v251
        %v395 = vunpack.c.l.b16 %v252
        %v396 = vunpack.c.l.b16 %v253
        %v397 = vunpack.c.l.b16 %v254
        %v398 = vunpack.c.l.b16 %v255
        %v399 = vunpack.c.l.b16 %v256
        %v400 = vunpack.c.l.b16 %v257
        %v401 = vunpack.c.l.b16 %v258
        %v402 = vunpack.c.l.b16 %v259
        %v403 = vunpack.c.l.b16 %v260
        %v404 = vunpack.c.l.b16 %v261
        %v405 = vunpack.c.l.b16 %v262
        %v406 = vunpack.c.l.b16 %v263
        %v407 = vunpack.c.l.b16 %v264
        %v408 = vunpack.c.l.b16 %v265
        %v409 = vunpack.c.l.b16 %v266
        %v410 = vpack.c.b16 %v347, %v346
        %v411 = vpack.c.b16 %v349, %v348
        %v412 = vpack.c.b16 %v351, %v350
        %v413 = vpack.c.b16 %v353, %v352
        %v414 = vpack.c.b16 %v355, %v354
        %v415 = vpack.c.b16 %v357, %v356
        %v416 = vpack.c.b16 %v359, %v358
        %v417 = vpack.c.b16 %v361, %v360
        %v418 = vpack.c.b16 %v363, %v362
        %v419 = vpack.c.b16 %v365, %v364
        %v420 = vpack.c.b16 %v367, %v366
        %v421 = vpack.c.b16 %v369, %v368
        %v422 = vpack.c.b16 %v371, %v370
        %v423 = vpack.c.b16 %v373, %v372
        %v424 = vpack.c.b16 %v375, %v374
        %v425 = vpack.c.b16 %v377, %v376
        %v426 = vpack.c.b16 %v379, %v378
        %v427 = vpack.c.b16 %v381, %v380
        %v428 = vpack.c.b16 %v383, %v382
        %v429 = vpack.c.b16 %v385, %v384
        %v430 = vpack.c.b16 %v387, %v386
        %v431 = vpack.c.b16 %v389, %v388
        %v432 = vpack.c.b16 %v391, %v390
        %v433 = vpack.c.b16 %v393, %v392
        %v434 = vpack.c.b16 %v395, %v394
        %v435 = vpack.c.b16 %v397, %v396
        %v436 = vpack.c.b16 %v399, %v398
        %v437 = vpack.c.b16 %v401, %v400
        %v438 = vpack.c.b16 %v403, %v402
        %v439 = vpack.c.b16 %v405, %v404
        %v440 = vpack.c.b16 %v407, %v406
        %v441 = vpack.c.b16 %v409, %v408
        %v450 = vunpack.c.l.b16 %v267
        %v451 = vunpack.c.l.b16 %v268
        %v452 = vunpack.c.l.b16 %v269
        %v453 = vunpack.c.l.b16 %v270
        %v454 = vunpack.c.l.b16 %v271
        %v455 = vunpack.c.l.b16 %v272
        %v456 = vunpack.c.l.b16 %v273
        %v457 = vunpack.c.l.b16 %v274
        %v458 = vpack.c.b16 %v451, %v450
        %v459 = vpack.c.b16 %v453, %v452
        %v460 = vpack.c.b16 %v455, %v454
        %v461 = vpack.c.b16 %v457, %v456
        %vm466 = vcmask 523264
        %v468 = vsel %vm466, %v410, 0
        %v471 = vsel %vm466, %v411, 0
        %v474 = vsel %vm466, %v412, 0
        %v477 = vsel %vm466, %v413, 0
        %v480 = vsel %vm466, %v414, 0
        %v483 = vsel %vm466, %v415, 0
        %v486 = vsel %vm466, %v416, 0
        %v489 = vsel %vm466, %v417, 0
        %v492 = vsel %vm466, %v418, 0
        %v495 = vsel %vm466, %v419, 0
        %v498 = vsel %vm466, %v420, 0
        %v501 = vsel %vm466, %v421, 0
        %v504 = vsel %vm466, %v422, 0
        %v507 = vsel %vm466, %v423, 0
        %v510 = vsel %vm466, %v424, 0
        %v513 = vsel %vm466, %v425, 0
        %v516 = vsel %vm466, %v426, 0
        %v519 = vsel %vm466, %v427, 0
        %v522 = vsel %vm466, %v428, 0
        %v525 = vsel %vm466, %v429, 0
        %v528 = vsel %vm466, %v430, 0
        %v531 = vsel %vm466, %v431, 0
        %v534 = vsel %vm466, %v432, 0
        %v537 = vsel %vm466, %v433, 0
        %v540 = vsel %vm466, %v434, 0
        %v543 = vsel %vm466, %v435, 0
        %v546 = vsel %vm466, %v436, 0
        %v549 = vsel %vm466, %v437, 0
        %v552 = vsel %vm466, %v438, 0
        %v555 = vsel %vm466, %v439, 0
        %v558 = vsel %vm466, %v440, 0
        %v561 = vsel %vm466, %v441, 0
        %563 = vmatprep.subr.bf16.mxu0 0
        %564 = vmatpush1.bf16.msra.mxu0 0
        %565 = vmatprep.subr.bf16.mxu0 0
        %566 = vmatpush1.bf16.msra.mxu0 0
        %567 = vmatprep.subr.bf16.mxu0 0
        %568 = vmatpush1.bf16.msra.mxu0 0
        %569 = vmatprep.subr.bf16.mxu0 0
        %570 = vmatpush1.bf16.msra.mxu0 0
        %571 = vmatprep.subr.bf16.mxu0 0
        %572 = vmatpush1.bf16.msra.mxu0 %v461
        %573 = vmatprep.subr.bf16.mxu0 0
        %574 = vmatpush1.bf16.msra.mxu0 %v460
        %575 = vmatprep.subr.bf16.mxu0 0
        %576 = vmatpush1.bf16.msra.mxu0 %v459
        %577 = vmatprep.subr.bf16.mxu0 0
        %578 = vmatpush1.bf16.msra.mxu0 %v458
        %579 = vmatprep.subr.bf16.mxu0 0
        %580 = vmatpush2.bf16.msra.mxu0 0
        %581 = vmatprep.subr.bf16.mxu0 0
        %582 = vmatpush2.bf16.msra.mxu0 0
        %583 = vmatprep.subr.bf16.mxu0 0
        %584 = vmatpush2.bf16.msra.mxu0 0
        %585 = vmatprep.subr.bf16.mxu0 0
        %586 = vmatpush2.bf16.msra.mxu0 0
        %587 = vmatprep.subr.bf16.mxu0 0
        %588 = vmatpush2.bf16.msra.mxu0 0
        %589 = vmatprep.subr.bf16.mxu0 0
        %590 = vmatpush2.bf16.msra.mxu0 0
        %591 = vmatprep.subr.bf16.mxu0 0
        %592 = vmatpush2.bf16.msra.mxu0 0
        %593 = vmatprep.subr.bf16.mxu0 0
        %594 = vmatpush2.bf16.msra.mxu0 0
        %595 = vmatprep.mubr.bf16.mxu0 0
        %596 = vmatmul.mubr.bf16.gmra.mxu0 %v468
        %v597 = vpop.f32.mrf.mxu0
        %v598 = vadd.f32 %v280, %v597
        %v599 = vpop.f32.mrf.mxu0
        %v600 = vpop.f32.mrf.mxu0
        %v601 = vadd.f32 %v280, %v600
        %v602 = vpop.f32.mrf.mxu0
        %603 = vmatprep.mubr.bf16.mxu0 0
        %604 = vmatmul.mubr.bf16.gmra.mxu0 %v471
        %v605 = vpop.f32.mrf.mxu0
        %v606 = vadd.f32 %v280, %v605
        %v607 = vpop.f32.mrf.mxu0
        %v608 = vpop.f32.mrf.mxu0
        %v609 = vadd.f32 %v280, %v608
        %v610 = vpop.f32.mrf.mxu0
        %611 = vmatprep.mubr.bf16.mxu0 0
        %612 = vmatmul.mubr.bf16.gmra.mxu0 %v474
        %v613 = vpop.f32.mrf.mxu0
        %v614 = vadd.f32 %v280, %v613
        %v615 = vpop.f32.mrf.mxu0
        %v616 = vpop.f32.mrf.mxu0
        %v617 = vadd.f32 %v280, %v616
        %v618 = vpop.f32.mrf.mxu0
        %619 = vmatprep.mubr.bf16.mxu0 0
        %620 = vmatmul.mubr.bf16.gmra.mxu0 %v477
        %v621 = vpop.f32.mrf.mxu0
        %v622 = vadd.f32 %v280, %v621
        %v623 = vpop.f32.mrf.mxu0
        %v624 = vpop.f32.mrf.mxu0
        %v625 = vadd.f32 %v280, %v624
        %v626 = vpop.f32.mrf.mxu0
        %627 = vmatprep.mubr.bf16.mxu0 0
        %628 = vmatmul.mubr.bf16.gmra.mxu0 %v480
        %v629 = vpop.f32.mrf.mxu0
        %v630 = vadd.f32 %v280, %v629
        %v631 = vpop.f32.mrf.mxu0
        %v632 = vpop.f32.mrf.mxu0
        %v633 = vadd.f32 %v280, %v632
        %v634 = vpop.f32.mrf.mxu0
        %635 = vmatprep.mubr.bf16.mxu0 0
        %636 = vmatmul.mubr.bf16.gmra.mxu0 %v483
        %v637 = vpop.f32.mrf.mxu0
        %v638 = vadd.f32 %v280, %v637
        %v639 = vpop.f32.mrf.mxu0
        %v640 = vpop.f32.mrf.mxu0
        %v641 = vadd.f32 %v280, %v640
        %v642 = vpop.f32.mrf.mxu0
        %643 = vmatprep.mubr.bf16.mxu0 0
        %644 = vmatmul.mubr.bf16.gmra.mxu0 %v486
        %v645 = vpop.f32.mrf.mxu0
        %v646 = vadd.f32 %v280, %v645
        %v647 = vpop.f32.mrf.mxu0
        %v648 = vpop.f32.mrf.mxu0
        %v649 = vadd.f32 %v280, %v648
        %v650 = vpop.f32.mrf.mxu0
        %651 = vmatprep.mubr.bf16.mxu0 0
        %652 = vmatmul.mubr.bf16.gmra.mxu0 %v489
        %v653 = vpop.f32.mrf.mxu0
        %v654 = vadd.f32 %v280, %v653
        %v655 = vpop.f32.mrf.mxu0
        %v656 = vpop.f32.mrf.mxu0
        %v657 = vadd.f32 %v280, %v656
        %v658 = vpop.f32.mrf.mxu0
        %659 = vmatprep.mubr.bf16.mxu0 0
        %660 = vmatmul.mubr.bf16.gmra.mxu0 %v492
        %v661 = vpop.f32.mrf.mxu0
        %v662 = vadd.f32 %v280, %v661
        %v663 = vpop.f32.mrf.mxu0
        %v664 = vpop.f32.mrf.mxu0
        %v665 = vadd.f32 %v280, %v664
        %v666 = vpop.f32.mrf.mxu0
        %667 = vmatprep.mubr.bf16.mxu0 0
        %668 = vmatmul.mubr.bf16.gmra.mxu0 %v495
        %v669 = vpop.f32.mrf.mxu0
        %v670 = vadd.f32 %v280, %v669
        %v671 = vpop.f32.mrf.mxu0
        %v672 = vpop.f32.mrf.mxu0
        %v673 = vadd.f32 %v280, %v672
        %v674 = vpop.f32.mrf.mxu0
        %675 = vmatprep.mubr.bf16.mxu0 0
        %676 = vmatmul.mubr.bf16.gmra.mxu0 %v498
        %v677 = vpop.f32.mrf.mxu0
        %v678 = vadd.f32 %v280, %v677
        %v679 = vpop.f32.mrf.mxu0
        %v680 = vpop.f32.mrf.mxu0
        %v681 = vadd.f32 %v280, %v680
        %v682 = vpop.f32.mrf.mxu0
        %683 = vmatprep.mubr.bf16.mxu0 0
        %684 = vmatmul.mubr.bf16.gmra.mxu0 %v501
        %v685 = vpop.f32.mrf.mxu0
        %v686 = vadd.f32 %v280, %v685
        %v687 = vpop.f32.mrf.mxu0
        %v688 = vpop.f32.mrf.mxu0
        %v689 = vadd.f32 %v280, %v688
        %v690 = vpop.f32.mrf.mxu0
        %691 = vmatprep.mubr.bf16.mxu0 0
        %692 = vmatmul.mubr.bf16.gmra.mxu0 %v504
        %v693 = vpop.f32.mrf.mxu0
        %v694 = vadd.f32 %v280, %v693
        %v695 = vpop.f32.mrf.mxu0
        %v696 = vpop.f32.mrf.mxu0
        %v697 = vadd.f32 %v280, %v696
        %v698 = vpop.f32.mrf.mxu0
        %699 = vmatprep.mubr.bf16.mxu0 0
        %700 = vmatmul.mubr.bf16.gmra.mxu0 %v507
        %v701 = vpop.f32.mrf.mxu0
        %v702 = vadd.f32 %v280, %v701
        %v703 = vpop.f32.mrf.mxu0
        %v704 = vpop.f32.mrf.mxu0
        %v705 = vadd.f32 %v280, %v704
        %v706 = vpop.f32.mrf.mxu0
        %707 = vmatprep.mubr.bf16.mxu0 0
        %708 = vmatmul.mubr.bf16.gmra.mxu0 %v510
        %v709 = vpop.f32.mrf.mxu0
        %v710 = vadd.f32 %v280, %v709
        %v711 = vpop.f32.mrf.mxu0
        %v712 = vpop.f32.mrf.mxu0
        %v713 = vadd.f32 %v280, %v712
        %v714 = vpop.f32.mrf.mxu0
        %715 = vmatprep.mubr.bf16.mxu0 0
        %716 = vmatmul.mubr.bf16.gmra.mxu0 %v513
        %v717 = vpop.f32.mrf.mxu0
        %v718 = vadd.f32 %v280, %v717
        %v719 = vpop.f32.mrf.mxu0
        %v720 = vpop.f32.mrf.mxu0
        %v721 = vadd.f32 %v280, %v720
        %v722 = vpop.f32.mrf.mxu0
        %723 = vmatprep.mubr.bf16.mxu0 0
        %724 = vmatmul.mubr.bf16.gmra.mxu0 %v516
        %v725 = vpop.f32.mrf.mxu0
        %v726 = vadd.f32 %v280, %v725
        %v727 = vpop.f32.mrf.mxu0
        %v728 = vpop.f32.mrf.mxu0
        %v729 = vadd.f32 %v280, %v728
        %v730 = vpop.f32.mrf.mxu0
        %731 = vmatprep.mubr.bf16.mxu0 0
        %732 = vmatmul.mubr.bf16.gmra.mxu0 %v519
        %v733 = vpop.f32.mrf.mxu0
        %v734 = vadd.f32 %v280, %v733
        %v735 = vpop.f32.mrf.mxu0
        %v736 = vpop.f32.mrf.mxu0
        %v737 = vadd.f32 %v280, %v736
        %v738 = vpop.f32.mrf.mxu0
        %739 = vmatprep.mubr.bf16.mxu0 0
        %740 = vmatmul.mubr.bf16.gmra.mxu0 %v522
        %v741 = vpop.f32.mrf.mxu0
        %v742 = vadd.f32 %v280, %v741
        %v743 = vpop.f32.mrf.mxu0
        %v744 = vpop.f32.mrf.mxu0
        %v745 = vadd.f32 %v280, %v744
        %v746 = vpop.f32.mrf.mxu0
        %747 = vmatprep.mubr.bf16.mxu0 0
        %748 = vmatmul.mubr.bf16.gmra.mxu0 %v525
        %v749 = vpop.f32.mrf.mxu0
        %v750 = vadd.f32 %v280, %v749
        %v751 = vpop.f32.mrf.mxu0
        %v752 = vpop.f32.mrf.mxu0
        %v753 = vadd.f32 %v280, %v752
        %v754 = vpop.f32.mrf.mxu0
        %755 = vmatprep.mubr.bf16.mxu0 0
        %756 = vmatmul.mubr.bf16.gmra.mxu0 %v528
        %v757 = vpop.f32.mrf.mxu0
        %v758 = vadd.f32 %v280, %v757
        %v759 = vpop.f32.mrf.mxu0
        %v760 = vpop.f32.mrf.mxu0
        %v761 = vadd.f32 %v280, %v760
        %v762 = vpop.f32.mrf.mxu0
        %763 = vmatprep.mubr.bf16.mxu0 0
        %764 = vmatmul.mubr.bf16.gmra.mxu0 %v531
        %v765 = vpop.f32.mrf.mxu0
        %v766 = vadd.f32 %v280, %v765
        %v767 = vpop.f32.mrf.mxu0
        %v768 = vpop.f32.mrf.mxu0
        %v769 = vadd.f32 %v280, %v768
        %v770 = vpop.f32.mrf.mxu0
        %771 = vmatprep.mubr.bf16.mxu0 0
        %772 = vmatmul.mubr.bf16.gmra.mxu0 %v534
        %v773 = vpop.f32.mrf.mxu0
        %v774 = vadd.f32 %v280, %v773
        %v775 = vpop.f32.mrf.mxu0
        %v776 = vpop.f32.mrf.mxu0
        %v777 = vadd.f32 %v280, %v776
        %v778 = vpop.f32.mrf.mxu0
        %779 = vmatprep.mubr.bf16.mxu0 0
        %780 = vmatmul.mubr.bf16.gmra.mxu0 %v537
        %v781 = vpop.f32.mrf.mxu0
        %v782 = vadd.f32 %v280, %v781
        %v783 = vpop.f32.mrf.mxu0
        %v784 = vpop.f32.mrf.mxu0
        %v785 = vadd.f32 %v280, %v784
        %v786 = vpop.f32.mrf.mxu0
        %787 = vmatprep.mubr.bf16.mxu0 0
        %788 = vmatmul.mubr.bf16.gmra.mxu0 %v540
        %v789 = vpop.f32.mrf.mxu0
        %v790 = vadd.f32 %v280, %v789
        %v791 = vpop.f32.mrf.mxu0
        %v792 = vpop.f32.mrf.mxu0
        %v793 = vadd.f32 %v280, %v792
        %v794 = vpop.f32.mrf.mxu0
        %795 = vmatprep.mubr.bf16.mxu0 0
        %796 = vmatmul.mubr.bf16.gmra.mxu0 %v543
        %v797 = vpop.f32.mrf.mxu0
        %v798 = vadd.f32 %v280, %v797
        %v799 = vpop.f32.mrf.mxu0
        %v800 = vpop.f32.mrf.mxu0
        %v801 = vadd.f32 %v280, %v800
        %v802 = vpop.f32.mrf.mxu0
        %803 = vmatprep.mubr.bf16.mxu0 0
        %804 = vmatmul.mubr.bf16.gmra.mxu0 %v546
        %v805 = vpop.f32.mrf.mxu0
        %v806 = vadd.f32 %v280, %v805
        %v807 = vpop.f32.mrf.mxu0
        %v808 = vpop.f32.mrf.mxu0
        %v809 = vadd.f32 %v280, %v808
        %v810 = vpop.f32.mrf.mxu0
        %811 = vmatprep.mubr.bf16.mxu0 0
        %812 = vmatmul.mubr.bf16.gmra.mxu0 %v549
        %v813 = vpop.f32.mrf.mxu0
        %v814 = vadd.f32 %v280, %v813
        %v815 = vpop.f32.mrf.mxu0
        %v816 = vpop.f32.mrf.mxu0
        %v817 = vadd.f32 %v280, %v816
        %v818 = vpop.f32.mrf.mxu0
        %819 = vmatprep.mubr.bf16.mxu0 0
        %820 = vmatmul.mubr.bf16.gmra.mxu0 %v552
        %v821 = vpop.f32.mrf.mxu0
        %v822 = vadd.f32 %v280, %v821
        %v823 = vpop.f32.mrf.mxu0
        %v824 = vpop.f32.mrf.mxu0
        %v825 = vadd.f32 %v280, %v824
        %v826 = vpop.f32.mrf.mxu0
        %827 = vmatprep.mubr.bf16.mxu0 0
        %828 = vmatmul.mubr.bf16.gmra.mxu0 %v555
        %v829 = vpop.f32.mrf.mxu0
        %v830 = vadd.f32 %v280, %v829
        %v831 = vpop.f32.mrf.mxu0
        %v832 = vpop.f32.mrf.mxu0
        %v833 = vadd.f32 %v280, %v832
        %v834 = vpop.f32.mrf.mxu0
        %835 = vmatprep.mubr.bf16.mxu0 0
        %836 = vmatmul.mubr.bf16.gmra.mxu0 %v558
        %v837 = vpop.f32.mrf.mxu0
        %v838 = vadd.f32 %v280, %v837
        %v839 = vpop.f32.mrf.mxu0
        %v840 = vpop.f32.mrf.mxu0
        %v841 = vadd.f32 %v280, %v840
        %v842 = vpop.f32.mrf.mxu0
        %843 = vmatprep.mubr.bf16.mxu0 0
        %844 = vmatmul.mubr.bf16.gmra.mxu0 %v561
        %v845 = vpop.f32.mrf.mxu0
        %v846 = vadd.f32 %v280, %v845
        %v847 = vpop.f32.mrf.mxu0
        %v848 = vpop.f32.mrf.mxu0
        %v849 = vadd.f32 %v280, %v848
        %v850 = vpop.f32.mrf.mxu0
        %851 = vdwg.mxu0
        %852 = vst [vmem:[%s200] sm:$0xff] %v598
        %853 = vst [vmem:[%s200 + $0x8] sm:$0xff] %v601
        %854 = vst [vmem:[%s200 + $0x10] sm:$0xff] %v606
        %855 = vst [vmem:[%s200 + $0x18] sm:$0xff] %v609
        %856 = vst [vmem:[%s200 + $0x20] sm:$0xff] %v614
        %857 = vst [vmem:[%s200 + $0x28] sm:$0xff] %v617
        %858 = vst [vmem:[%s200 + $0x30] sm:$0xff] %v622
        %859 = vst [vmem:[%s200 + $0x38] sm:$0xff] %v625
        %860 = vst [vmem:[%s200 + $0x40] sm:$0xff] %v630
        %861 = vst [vmem:[%s200 + $0x48] sm:$0xff] %v633
        %862 = vst [vmem:[%s200 + $0x50] sm:$0xff] %v638
        %863 = vst [vmem:[%s200 + $0x58] sm:$0xff] %v641
        %864 = vst [vmem:[%s200 + $0x60] sm:$0xff] %v646
        %865 = vst [vmem:[%s200 + $0x68] sm:$0xff] %v649
        %866 = vst [vmem:[%s200 + $0x70] sm:$0xff] %v654
        %867 = vst [vmem:[%s200 + $0x78] sm:$0xff] %v657
        %868 = vst [vmem:[%s200 + $0x80] sm:$0xff] %v662
        %869 = vst [vmem:[%s200 + $0x88] sm:$0xff] %v665
        %870 = vst [vmem:[%s200 + $0x90] sm:$0xff] %v670
        %871 = vst [vmem:[%s200 + $0x98] sm:$0xff] %v673
        %872 = vst [vmem:[%s200 + $0xa0] sm:$0xff] %v678
        %873 = vst [vmem:[%s200 + $0xa8] sm:$0xff] %v681
        %874 = vst [vmem:[%s200 + $0xb0] sm:$0xff] %v686
        %875 = vst [vmem:[%s200 + $0xb8] sm:$0xff] %v689
        %876 = vst [vmem:[%s200 + $0xc0] sm:$0xff] %v694
        %877 = vst [vmem:[%s200 + $0xc8] sm:$0xff] %v697
        %878 = vst [vmem:[%s200 + $0xd0] sm:$0xff] %v702
        %879 = vst [vmem:[%s200 + $0xd8] sm:$0xff] %v705
        %880 = vst [vmem:[%s200 + $0xe0] sm:$0xff] %v710
        %881 = vst [vmem:[%s200 + $0xe8] sm:$0xff] %v713
        %882 = vst [vmem:[%s200 + $0xf0] sm:$0xff] %v718
        %883 = vst [vmem:[%s200 + $0xf8] sm:$0xff] %v721
        %884 = vst [vmem:[%s200 + $0x100] sm:$0xff] %v726
        %885 = vst [vmem:[%s200 + $0x108] sm:$0xff] %v729
        %886 = vst [vmem:[%s200 + $0x110] sm:$0xff] %v734
        %887 = vst [vmem:[%s200 + $0x118] sm:$0xff] %v737
        %888 = vst [vmem:[%s200 + $0x120] sm:$0xff] %v742
        %889 = vst [vmem:[%s200 + $0x128] sm:$0xff] %v745
        %890 = vst [vmem:[%s200 + $0x130] sm:$0xff] %v750
        %891 = vst [vmem:[%s200 + $0x138] sm:$0xff] %v753
        %892 = vst [vmem:[%s200 + $0x140] sm:$0xff] %v758
        %893 = vst [vmem:[%s200 + $0x148] sm:$0xff] %v761
        %894 = vst [vmem:[%s200 + $0x150] sm:$0xff] %v766
        %895 = vst [vmem:[%s200 + $0x158] sm:$0xff] %v769
        %896 = vst [vmem:[%s200 + $0x160] sm:$0xff] %v774
        %897 = vst [vmem:[%s200 + $0x168] sm:$0xff] %v777
        %898 = vst [vmem:[%s200 + $0x170] sm:$0xff] %v782
        %899 = vst [vmem:[%s200 + $0x178] sm:$0xff] %v785
        %900 = vst [vmem:[%s200 + $0x180] sm:$0xff] %v790
        %901 = vst [vmem:[%s200 + $0x188] sm:$0xff] %v793
        %902 = vst [vmem:[%s200 + $0x190] sm:$0xff] %v798
        %903 = vst [vmem:[%s200 + $0x198] sm:$0xff] %v801
        %904 = vst [vmem:[%s200 + $0x1a0] sm:$0xff] %v806
        %905 = vst [vmem:[%s200 + $0x1a8] sm:$0xff] %v809
        %906 = vst [vmem:[%s200 + $0x1b0] sm:$0xff] %v814
        %907 = vst [vmem:[%s200 + $0x1b8] sm:$0xff] %v817
        %908 = vst [vmem:[%s200 + $0x1c0] sm:$0xff] %v822
        %909 = vst [vmem:[%s200 + $0x1c8] sm:$0xff] %v825
        %910 = vst [vmem:[%s200 + $0x1d0] sm:$0xff] %v830
        %911 = vst [vmem:[%s200 + $0x1d8] sm:$0xff] %v833
        %912 = vst [vmem:[%s200 + $0x1e0] sm:$0xff] %v838
        %913 = vst [vmem:[%s200 + $0x1e8] sm:$0xff] %v841
        %914 = vst [vmem:[%s200 + $0x1f0] sm:$0xff] %v846
        %915 = vst [vmem:[%s200 + $0x1f8] sm:$0xff] %v849
        %s916 = smul.u32 64, %s16
        %p917 = scmp.lt.s32.totalorder %s916, 255
        %s918 = scalar_select %p917, %s916, 255
        %s919 = smul.addr %s918, 8
        %s920 = scalar_lea.vmem %s3, %s919
        // Predicated region
        $region41: #{dcn_transpose_forward.2} parent=31 // pred_check
          %p921 = pneg %p102
        $region42: #{dcn_transpose_forward.2} parent=31 // pred_check_branch
          %923 = sbr.rel (%p921) target = $region44
        $region43: #{dcn_transpose_forward.2} parent=31 // pred_region
          %s924 = smul.u32 64, %s16
        $region44: #{dcn_transpose_forward.2} parent=31 // pred_fallthru
          _
      $region32: #{dcn_transpose_forward.2} parent=5 // pred_fallthru
        _
      %p925 = scmp.le.s32.totalorder 2, %s11
      // Predicated region
      $region45: #{dcn_transpose_forward.2} parent=5 // pred_check
        %p926 = pneg %p925
      $region46: #{dcn_transpose_forward.2} parent=5 // pred_check_branch
        %928 = sbr.rel (%p926) target = $region48
      $region47: #{dcn_transpose_forward.2} parent=5 // pred_region
        %s929 = ssub.s32 %s11, 2
        // Predicated region
        $region49: #{dcn_transpose_forward.2} parent=47 // pred_check
          %p930 = pneg %p108
        $region50: #{dcn_transpose_forward.2} parent=47 // pred_check_branch
          %932 = sbr.rel (%p930) target = $region52
        $region51: #{dcn_transpose_forward.2} parent=47 // pred_region
          %s933 = smul.u32 64, %s17
          %p934 = scmp.lt.s32.totalorder %s933, 255
          %s935 = scalar_select %p934, %s933, 255
          %s936 = smul.addr %s935, 8
          %s937 = scalar_lea.vmem %s3, %s936
        $region52: #{dcn_transpose_forward.2} parent=47 // pred_fallthru
          _
      $region48: #{dcn_transpose_forward.2} parent=5 // pred_fallthru
        _
    $region6: #{dcn_transpose_forward.2} parent=1 // loop_footer
      %s15 = sadd.s32 1, %s11
    $region7: #{dcn_transpose_forward.2} parent=1 // loop_footer_branch
      %10 = sbr.rel target = $region3
    $region8: #{dcn_transpose_forward.2} parent=1 // loop_exit
      _
    %938 = vsyncpa [#allocation3], 1
    %s939 = scalar_lea.sflag [#allocation3], 1
    %940 = vsyncpa %s939, 1
    %941 = vsyncpa [#allocation5], 1

// kernel: dcn_transpose_forward.3
$region0: #{dcn_transpose_forward.3}
  #allocation0 [shape = 'u32[]', space=smem, size = 0x4, offset = 0x4, fixed_abs, tag = 'smem constant byte address 0x4 - core index']
  #allocation1 [shape = 'u32[144,128]{1,0:T(1,128)}', space=vmem, size = 0x12000, scoped, tag = 'internal scratch']
  %s0 = inlined_call_operand.vmem [shape: bf16[2048,64], index: 0, kind: input, shape index: {}]
  %s1 = inlined_call_operand.vmem [shape: f32[2048,16], index: 1, kind: input, shape index: {}]
  %s2 = inlined_call_operand.vmem [shape: f32[16,64], index: 2, kind: input, shape index: {}]
  %s3 = inlined_call_operand.vmem [shape: bf16[64,128], index: 3, kind: input, shape index: {}]
  %s4 = inlined_call_operand.vmem [shape: f32[1,128], index: 4, kind: input, shape index: {}]
  %s5 = inlined_call_operand.vmem [shape: f32[2048,128], index: 5, kind: output, shape index: {}]
  %s6 = sld [smem:[#allocation0]]
  $region53: #{dcn_transpose_forward.3} parent=0
    _
  %s8 = ssub.s32 1, %s6
  %s9 = scalar_select 0, %s8, %s6
  loop: start=0, step=1, limit=6
  $region2: #{dcn_transpose_forward.3} parent=0 // loop_pre_header
    _
  $region3: #{dcn_transpose_forward.3} parent=0 // loop_header
    %s11 = sphi 0, %s15
    %p12 = scmp.ge.s32.totalorder %s11, 6
    %s21 = sphi 0, %s23
    %s24 = sphi 0, %s21
    %s25 = sphi 0, %s24
    %s41 = sphi 0, %s25
    %s47 = sphi 0, %s49
    %s50 = sphi 0, %s47
    %s51 = sphi 0, %s50
    %s67 = sphi 0, %s51
    %s71 = sphi 0, %s71
    %s73 = sphi 0, %s71
    %s74 = sphi 0, %s73
    %s88 = sphi 0, %s74
    %s92 = sphi 0, %s92
    %s94 = sphi 0, %s92
    %s95 = sphi 0, %s94
    %s109 = sphi 0, %s95
    %s113 = sphi 0, %s113
    %s115 = sphi 0, %s113
    %s116 = sphi 0, %s115
    %s130 = sphi 0, %s116
    %s136 = sphi 0, %s138
    %s139 = sphi 0, %s136
    %s140 = sphi 0, %s139
    %s156 = sphi 0, %s140
  $region4: #{dcn_transpose_forward.3} parent=0 // loop_header_branch
    %14 = sbr.rel (%p12) target = $region8
  $region5: #{dcn_transpose_forward.3} parent=0 // loop_body
    %s16 = ssub.s32 %s11, 1
    %s17 = ssub.s32 %s11, 2
    %s18 = sadd.s32 %s11, 1
    %s19 = ssub.s32 %s11, %s18
    %p20 = scmp.eq.s32.totalorder %s19, 0
    %s22 = sadd.s32 %s21, 1
    %s23 = scalar_select %p20, %s21, %s22
    %p26 = pneg %p20
    %p27 = scmp.eq.s32.totalorder %s11, 3
    %p28 = por %p26, %p27
    %p29 = scmp.ne.s32.totalorder %s21, %s24
    %p30 = scmp.eq.s32.totalorder %s11, 0
    %p31 = por %p29, %p30
    %p32 = scmp.ne.s32.totalorder %s21, %s24
    %p33 = scmp.eq.s32.totalorder %s16, 3
    %p34 = por %p32, %p33
    %p35 = scmp.ne.s32.totalorder %s24, %s25
    %p36 = scmp.eq.s32.totalorder %s16, 0
    %p37 = por %p35, %p36
    %p38 = scmp.ne.s32.totalorder %s24, %s25
    %p39 = scmp.eq.s32.totalorder %s17, 3
    %p40 = por %p38, %p39
    %p42 = scmp.ne.s32.totalorder %s25, %s41
    %p43 = scmp.eq.s32.totalorder %s17, 0
    %p44 = por %p42, %p43
    %s45 = ssub.s32 %s11, %s18
    %p46 = scmp.eq.s32.totalorder %s45, 0
    %s48 = sadd.s32 %s47, 1
    %s49 = scalar_select %p46, %s47, %s48
    %p52 = pneg %p46
    %p53 = scmp.eq.s32.totalorder %s11, 3
    %p54 = por %p52, %p53
    %p55 = scmp.ne.s32.totalorder %s47, %s50
    %p56 = scmp.eq.s32.totalorder %s11, 0
    %p57 = por %p55, %p56
    %p58 = scmp.ne.s32.totalorder %s47, %s50
    %p59 = scmp.eq.s32.totalorder %s16, 3
    %p60 = por %p58, %p59
    %p61 = scmp.ne.s32.totalorder %s50, %s51
    %p62 = scmp.eq.s32.totalorder %s16, 0
    %p63 = por %p61, %p62
    %p64 = scmp.ne.s32.totalorder %s50, %s51
    %p65 = scmp.eq.s32.totalorder %s17, 3
    %p66 = por %p64, %p65
    %p68 = scmp.ne.s32.totalorder %s51, %s67
    %p69 = scmp.eq.s32.totalorder %s17, 0
    %p70 = por %p68, %p69
    %s72 = sadd.s32 %s71, 1
    %p75 = scmp.eq.s32.totalorder %s11, 3
    %p76 = scmp.ne.s32.totalorder %s71, %s73
    %p77 = scmp.eq.s32.totalorder %s11, 0
    %p78 = por %p76, %p77
    %p79 = scmp.ne.s32.totalorder %s71, %s73
    %p80 = scmp.eq.s32.totalorder %s16, 3
    %p81 = por %p79, %p80
    %p82 = scmp.ne.s32.totalorder %s73, %s74
    %p83 = scmp.eq.s32.totalorder %s16, 0
    %p84 = por %p82, %p83
    %p85 = scmp.ne.s32.totalorder %s73, %s74
    %p86 = scmp.eq.s32.totalorder %s17, 3
    %p87 = por %p85, %p86
    %p89 = scmp.ne.s32.totalorder %s74, %s88
    %p90 = scmp.eq.s32.totalorder %s17, 0
    %p91 = por %p89, %p90
    %s93 = sadd.s32 %s92, 1
    %p96 = scmp.eq.s32.totalorder %s11, 3
    %p97 = scmp.ne.s32.totalorder %s92, %s94
    %p98 = scmp.eq.s32.totalorder %s11, 0
    %p99 = por %p97, %p98
    %p100 = scmp.ne.s32.totalorder %s92, %s94
    %p101 = scmp.eq.s32.totalorder %s16, 3
    %p102 = por %p100, %p101
    %p103 = scmp.ne.s32.totalorder %s94, %s95
    %p104 = scmp.eq.s32.totalorder %s16, 0
    %p105 = por %p103, %p104
    %p106 = scmp.ne.s32.totalorder %s94, %s95
    %p107 = scmp.eq.s32.totalorder %s17, 3
    %p108 = por %p106, %p107
    %p110 = scmp.ne.s32.totalorder %s95, %s109
    %p111 = scmp.eq.s32.totalorder %s17, 0
    %p112 = por %p110, %p111
    %s114 = sadd.s32 %s113, 1
    %p117 = scmp.eq.s32.totalorder %s11, 3
    %p118 = scmp.ne.s32.totalorder %s113, %s115
    %p119 = scmp.eq.s32.totalorder %s11, 0
    %p120 = por %p118, %p119
    %p121 = scmp.ne.s32.totalorder %s113, %s115
    %p122 = scmp.eq.s32.totalorder %s16, 3
    %p123 = por %p121, %p122
    %p124 = scmp.ne.s32.totalorder %s115, %s116
    %p125 = scmp.eq.s32.totalorder %s16, 0
    %p126 = por %p124, %p125
    %p127 = scmp.ne.s32.totalorder %s115, %s116
    %p128 = scmp.eq.s32.totalorder %s17, 3
    %p129 = por %p127, %p128
    %p131 = scmp.ne.s32.totalorder %s116, %s130
    %p132 = scmp.eq.s32.totalorder %s17, 0
    %p133 = por %p131, %p132
    %s134 = ssub.s32 %s11, %s18
    %p135 = scmp.eq.s32.totalorder %s134, 0
    %s137 = sadd.s32 %s136, 1
    %s138 = scalar_select %p135, %s136, %s137
    %p141 = pneg %p135
    %p142 = scmp.eq.s32.totalorder %s11, 3
    %p143 = por %p141, %p142
    %p144 = scmp.ne.s32.totalorder %s136, %s139
    %p145 = scmp.eq.s32.totalorder %s11, 0
    %p146 = por %p144, %p145
    %p147 = scmp.ne.s32.totalorder %s136, %s139
    %p148 = scmp.eq.s32.totalorder %s16, 3
    %p149 = por %p147, %p148
    %p150 = scmp.ne.s32.totalorder %s139, %s140
    %p151 = scmp.eq.s32.totalorder %s16, 0
    %p152 = por %p150, %p151
    %p153 = scmp.ne.s32.totalorder %s139, %s140
    %p154 = scmp.eq.s32.totalorder %s17, 3
    %p155 = por %p153, %p154
    %p157 = scmp.ne.s32.totalorder %s140, %s156
    %p158 = scmp.eq.s32.totalorder %s17, 0
    %p159 = por %p157, %p158
    %p160 = scmp.le.s32.totalorder 1, %s11
    %p161 = scmp.lt.s32.totalorder %s11, 5
    %p162 = pnand %p160, %p161
    %p163 = pneg %p162
    // Predicated region
    $region9: #{dcn_transpose_forward.3} parent=5 // pred_check
      _
    $region10: #{dcn_transpose_forward.3} parent=5 // pred_check_branch
      %165 = sbr.rel (%p162) target = $region12
    $region11: #{dcn_transpose_forward.3} parent=5 // pred_region
      %s166 = ssub.s32 %s11, 1
      // Predicated region
      $region13: #{dcn_transpose_forward.3} parent=11 // pred_check
        %p167 = pneg %p84
      $region14: #{dcn_transpose_forward.3} parent=11 // pred_check_branch
        %169 = sbr.rel (%p167) target = $region16
      $region15: #{dcn_transpose_forward.3} parent=11 // pred_region
        _
      $region16: #{dcn_transpose_forward.3} parent=11 // pred_fallthru
        _
      // Predicated region
      $region17: #{dcn_transpose_forward.3} parent=11 // pred_check
        %p170 = pneg %p105
      $region18: #{dcn_transpose_forward.3} parent=11 // pred_check_branch
        %172 = sbr.rel (%p170) target = $region20
      $region19: #{dcn_transpose_forward.3} parent=11 // pred_region
        _
      $region20: #{dcn_transpose_forward.3} parent=11 // pred_fallthru
        _
      // Predicated region
      $region21: #{dcn_transpose_forward.3} parent=11 // pred_check
        %p173 = pneg %p126
      $region22: #{dcn_transpose_forward.3} parent=11 // pred_check_branch
        %175 = sbr.rel (%p173) target = $region24
      $region23: #{dcn_transpose_forward.3} parent=11 // pred_region
        _
      $region24: #{dcn_transpose_forward.3} parent=11 // pred_fallthru
        _
    $region12: #{dcn_transpose_forward.3} parent=5 // pred_fallthru
      _
    %p176 = scmp.lt.s32.totalorder %s11, 4
    // Predicated region
    $region25: #{dcn_transpose_forward.3} parent=5 // pred_check
      %p177 = pneg %p176
    $region26: #{dcn_transpose_forward.3} parent=5 // pred_check_branch
      %179 = sbr.rel (%p177) target = $region28
    $region27: #{dcn_transpose_forward.3} parent=5 // pred_region
      // Predicated region
      $region29: #{dcn_transpose_forward.3} parent=27 // pred_check
        %p180 = pneg %p31
      $region30: #{dcn_transpose_forward.3} parent=27 // pred_check_branch
        %182 = sbr.rel (%p180) target = $region32
      $region31: #{dcn_transpose_forward.3} parent=27 // pred_region
        %s183 = smul.u32 64, %s11
        %p184 = scmp.lt.s32.totalorder %s183, 255
        %s185 = scalar_select %p184, %s183, 255
        %s186 = smul.addr %s185, 4
        %s187 = scalar_lea.vmem %s0, %s186
        %s188 = smul.u32 64, %s11
      $region32: #{dcn_transpose_forward.3} parent=27 // pred_fallthru
        _
      // Predicated region
      $region33: #{dcn_transpose_forward.3} parent=27 // pred_check
        %p189 = pneg %p57
      $region34: #{dcn_transpose_forward.3} parent=27 // pred_check_branch
        %191 = sbr.rel (%p189) target = $region36
      $region35: #{dcn_transpose_forward.3} parent=27 // pred_region
        %s192 = smul.u32 64, %s11
        %p193 = scmp.lt.s32.totalorder %s192, 255
        %s194 = scalar_select %p193, %s192, 255
        %s195 = smul.addr %s194, 8
        %s196 = scalar_lea.vmem %s1, %s195
        %s197 = smul.u32 64, %s11
      $region36: #{dcn_transpose_forward.3} parent=27 // pred_fallthru
        _
    $region28: #{dcn_transpose_forward.3} parent=5 // pred_fallthru
      _
    %p198 = scmp.le.s32.totalorder 1, %s11
    %p199 = scmp.lt.s32.totalorder %s11, 5
    %p200 = pnand %p198, %p199
    %p201 = pneg %p200
    // Predicated region
    $region37: #{dcn_transpose_forward.3} parent=5 // pred_check
      _
    $region38: #{dcn_transpose_forward.3} parent=5 // pred_check_branch
      %203 = sbr.rel (%p200) target = $region40
    $region39: #{dcn_transpose_forward.3} parent=5 // pred_region
      %s204 = ssub.s32 %s11, 1
      %s205 = smul.u32 64, %s16
      %p206 = scmp.lt.s32.totalorder %s205, 255
      %s207 = scalar_select %p206, %s205, 255
      %s208 = smul.addr %s207, 4
      %s209 = scalar_lea.vmem %s0, %s208
      %p210 = pneg %p37
      %p211 = pneg %p34
      %s212 = smul.u32 64, %s16
      %p213 = scmp.lt.s32.totalorder %s212, 255
      %s214 = scalar_select %p213, %s212, 255
      %s215 = smul.addr %s214, 8
      %s216 = scalar_lea.vmem %s1, %s215
      %p217 = pneg %p63
      %p218 = pneg %p60
      %p219 = pneg %p84
      %p220 = pneg %p81
      %p221 = pneg %p105
      %p222 = pneg %p102
      %p223 = pneg %p126
      %p224 = pneg %p123
      %p225 = pneg %p152
      %p226 = pneg %p149
      %s227 = smul.u32 64, %s16
      %p228 = scmp.lt.s32.totalorder %s227, 255
      %s229 = scalar_select %p228, %s227, 255
      %s230 = smul.addr %s229, 8
      %s231 = scalar_lea.vmem %s5, %s230
      %s232 = smul.u32 64, %s16
      %p233 = scmp.lt.s32.totalorder %s232, 255
      %s234 = scalar_select %p233, %s232, 255
      %s235 = smul.addr %s234, 4
      %s236 = scalar_lea.vmem %s0, %s235
      %s237 = smul.u32 64, %s16
      %s238 = smul.u32 64, %s16
      %p239 = scmp.lt.s32.totalorder %s238, 255
      %s240 = scalar_select %p239, %s238, 255
      %s241 = smul.addr %s240, 8
      %s242 = scalar_lea.vmem %s1, %s241
      %s243 = smul.u32 64, %s16
      %s244 = smul.u32 64, %s16
      %p245 = scmp.lt.s32.totalorder %s244, 255
      %s246 = scalar_select %p245, %s244, 255
      %s247 = smul.addr %s246, 8
      %s248 = scalar_lea.vmem %s5, %s247
      %s249 = smul.u32 64, %s16
      %v251 = vld [vmem:[%s242] sm:$0xff]
      %v252 = vld [vmem:[%s242 + $0x8] sm:$0xff]
      %v253 = vld [vmem:[%s242 + $0x10] sm:$0xff]
      %v254 = vld [vmem:[%s242 + $0x18] sm:$0xff]
      %v255 = vld [vmem:[%s242 + $0x20] sm:$0xff]
      %v256 = vld [vmem:[%s242 + $0x28] sm:$0xff]
      %v257 = vld [vmem:[%s242 + $0x30] sm:$0xff]
      %v258 = vld [vmem:[%s242 + $0x38] sm:$0xff]
      %v259 = vld [vmem:[%s242 + $0x40] sm:$0xff]
      %v260 = vld [vmem:[%s242 + $0x48] sm:$0xff]
      %v261 = vld [vmem:[%s242 + $0x50] sm:$0xff]
      %v262 = vld [vmem:[%s242 + $0x58] sm:$0xff]
      %v263 = vld [vmem:[%s242 + $0x60] sm:$0xff]
      %v264 = vld [vmem:[%s242 + $0x68] sm:$0xff]
      %v265 = vld [vmem:[%s242 + $0x70] sm:$0xff]
      %v266 = vld [vmem:[%s242 + $0x78] sm:$0xff]
      %v267 = vld [vmem:[%s242 + $0x80] sm:$0xff]
      %v268 = vld [vmem:[%s242 + $0x88] sm:$0xff]
      %v269 = vld [vmem:[%s242 + $0x90] sm:$0xff]
      %v270 = vld [vmem:[%s242 + $0x98] sm:$0xff]
      %v271 = vld [vmem:[%s242 + $0xa0] sm:$0xff]
      %v272 = vld [vmem:[%s242 + $0xa8] sm:$0xff]
      %v273 = vld [vmem:[%s242 + $0xb0] sm:$0xff]
      %v274 = vld [vmem:[%s242 + $0xb8] sm:$0xff]
      %v275 = vld [vmem:[%s242 + $0xc0] sm:$0xff]
      %v276 = vld [vmem:[%s242 + $0xc8] sm:$0xff]
      %v277 = vld [vmem:[%s242 + $0xd0] sm:$0xff]
      %v278 = vld [vmem:[%s242 + $0xd8] sm:$0xff]
      %v279 = vld [vmem:[%s242 + $0xe0] sm:$0xff]
      %v280 = vld [vmem:[%s242 + $0xe8] sm:$0xff]
      %v281 = vld [vmem:[%s242 + $0xf0] sm:$0xff]
      %v282 = vld [vmem:[%s242 + $0xf8] sm:$0xff]
      %v283 = vld [vmem:[%s242 + $0x100] sm:$0xff]
      %v284 = vld [vmem:[%s242 + $0x108] sm:$0xff]
      %v285 = vld [vmem:[%s242 + $0x110] sm:$0xff]
      %v286 = vld [vmem:[%s242 + $0x118] sm:$0xff]
      %v287 = vld [vmem:[%s242 + $0x120] sm:$0xff]
      %v288 = vld [vmem:[%s242 + $0x128] sm:$0xff]
      %v289 = vld [vmem:[%s242 + $0x130] sm:$0xff]
      %v290 = vld [vmem:[%s242 + $0x138] sm:$0xff]
      %v291 = vld [vmem:[%s242 + $0x140] sm:$0xff]
      %v292 = vld [vmem:[%s242 + $0x148] sm:$0xff]
      %v293 = vld [vmem:[%s242 + $0x150] sm:$0xff]
      %v294 = vld [vmem:[%s242 + $0x158] sm:$0xff]
      %v295 = vld [vmem:[%s242 + $0x160] sm:$0xff]
      %v296 = vld [vmem:[%s242 + $0x168] sm:$0xff]
      %v297 = vld [vmem:[%s242 + $0x170] sm:$0xff]
      %v298 = vld [vmem:[%s242 + $0x178] sm:$0xff]
      %v299 = vld [vmem:[%s242 + $0x180] sm:$0xff]
      %v300 = vld [vmem:[%s242 + $0x188] sm:$0xff]
      %v301 = vld [vmem:[%s242 + $0x190] sm:$0xff]
      %v302 = vld [vmem:[%s242 + $0x198] sm:$0xff]
      %v303 = vld [vmem:[%s242 + $0x1a0] sm:$0xff]
      %v304 = vld [vmem:[%s242 + $0x1a8] sm:$0xff]
      %v305 = vld [vmem:[%s242 + $0x1b0] sm:$0xff]
      %v306 = vld [vmem:[%s242 + $0x1b8] sm:$0xff]
      %v307 = vld [vmem:[%s242 + $0x1c0] sm:$0xff]
      %v308 = vld [vmem:[%s242 + $0x1c8] sm:$0xff]
      %v309 = vld [vmem:[%s242 + $0x1d0] sm:$0xff]
      %v310 = vld [vmem:[%s242 + $0x1d8] sm:$0xff]
      %v311 = vld [vmem:[%s242 + $0x1e0] sm:$0xff]
      %v312 = vld [vmem:[%s242 + $0x1e8] sm:$0xff]
      %v313 = vld [vmem:[%s242 + $0x1f0] sm:$0xff]
      %v314 = vld [vmem:[%s242 + $0x1f8] sm:$0xff]
      %vm315 = vcmask 130048
      %v316 = vsel %vm315, %v251, -inf
      %317 = vmax.xlane.f32.xlu0 %v316
      %v318 = vpop.xlane.xlu0 %317
      %v319 = vsel %vm315, %v252, -inf
      %320 = vmax.xlane.f32.xlu0 %v319
      %v321 = vpop.xlane.xlu0 %320
      %v322 = vsel %vm315, %v253, -inf
      %323 = vmax.xlane.f32.xlu0 %v322
      %v324 = vpop.xlane.xlu0 %323
      %v325 = vsel %vm315, %v254, -inf
      %326 = vmax.xlane.f32.xlu0 %v325
      %v327 = vpop.xlane.xlu0 %326
      %v328 = vsel %vm315, %v255, -inf
      %329 = vmax.xlane.f32.xlu0 %v328
      %v330 = vpop.xlane.xlu0 %329
      %v331 = vsel %vm315, %v256, -inf
      %332 = vmax.xlane.f32.xlu0 %v331
      %v333 = vpop.xlane.xlu0 %332
      %v334 = vsel %vm315, %v257, -inf
      %335 = vmax.xlane.f32.xlu0 %v334
      %v336 = vpop.xlane.xlu0 %335
      %v337 = vsel %vm315, %v258, -inf
      %338 = vmax.xlane.f32.xlu0 %v337
      %v339 = vpop.xlane.xlu0 %338
      %v340 = vsel %vm315, %v259, -inf
      %341 = vmax.xlane.f32.xlu0 %v340
      %v342 = vpop.xlane.xlu0 %341
      %v343 = vsel %vm315, %v260, -inf
      %344 = vmax.xlane.f32.xlu0 %v343
      %v345 = vpop.xlane.xlu0 %344
      %v346 = vsel %vm315, %v261, -inf
      %347 = vmax.xlane.f32.xlu0 %v346
      %v348 = vpop.xlane.xlu0 %347
      %v349 = vsel %vm315, %v262, -inf
      %350 = vmax.xlane.f32.xlu0 %v349
      %v351 = vpop.xlane.xlu0 %350
      %v352 = vsel %vm315, %v263, -inf
      %353 = vmax.xlane.f32.xlu0 %v352
      %v354 = vpop.xlane.xlu0 %353
      %v355 = vsel %vm315, %v264, -inf
      %356 = vmax.xlane.f32.xlu0 %v355
      %v357 = vpop.xlane.xlu0 %356
      %v358 = vsel %vm315, %v265, -inf
      %359 = vmax.xlane.f32.xlu0 %v358
      %v360 = vpop.xlane.xlu0 %359
      %v361 = vsel %vm315, %v266, -inf
      %362 = vmax.xlane.f32.xlu0 %v361
      %v363 = vpop.xlane.xlu0 %362
      %v364 = vsel %vm315, %v267, -inf
      %365 = vmax.xlane.f32.xlu0 %v364
      %v366 = vpop.xlane.xlu0 %365
      %v367 = vsel %vm315, %v268, -inf
      %368 = vmax.xlane.f32.xlu0 %v367
      %v369 = vpop.xlane.xlu0 %368
      %v370 = vsel %vm315, %v269, -inf
      %371 = vmax.xlane.f32.xlu0 %v370
      %v372 = vpop.xlane.xlu0 %371
      %v373 = vsel %vm315, %v270, -inf
      %374 = vmax.xlane.f32.xlu0 %v373
      %v375 = vpop.xlane.xlu0 %374
      %v376 = vsel %vm315, %v271, -inf
      %377 = vmax.xlane.f32.xlu0 %v376
      %v378 = vpop.xlane.xlu0 %377
      %v379 = vsel %vm315, %v272, -inf
      %380 = vmax.xlane.f32.xlu0 %v379
      %v381 = vpop.xlane.xlu0 %380
      %v382 = vsel %vm315, %v273, -inf
      %383 = vmax.xlane.f32.xlu0 %v382
      %v384 = vpop.xlane.xlu0 %383
      %v385 = vsel %vm315, %v274, -inf
      %386 = vmax.xlane.f32.xlu0 %v385
      %v387 = vpop.xlane.xlu0 %386
      %v388 = vsel %vm315, %v275, -inf
      %389 = vmax.xlane.f32.xlu0 %v388
      %v390 = vpop.xlane.xlu0 %389
      %v391 = vsel %vm315, %v276, -inf
      %392 = vmax.xlane.f32.xlu0 %v391
      %v393 = vpop.xlane.xlu0 %392
      %v394 = vsel %vm315, %v277, -inf
      %395 = vmax.xlane.f32.xlu0 %v394
      %v396 = vpop.xlane.xlu0 %395
      %v397 = vsel %vm315, %v278, -inf
      %398 = vmax.xlane.f32.xlu0 %v397
      %v399 = vpop.xlane.xlu0 %398
      %v400 = vsel %vm315, %v279, -inf
      %401 = vmax.xlane.f32.xlu0 %v400
      %v402 = vpop.xlane.xlu0 %401
      %v403 = vsel %vm315, %v280, -inf
      %404 = vmax.xlane.f32.xlu0 %v403
      %v405 = vpop.xlane.xlu0 %404
      %v406 = vsel %vm315, %v281, -inf
      %407 = vmax.xlane.f32.xlu0 %v406
      %v408 = vpop.xlane.xlu0 %407
      %v409 = vsel %vm315, %v282, -inf
      %410 = vmax.xlane.f32.xlu0 %v409
      %v411 = vpop.xlane.xlu0 %410
      %v412 = vsel %vm315, %v283, -inf
      %413 = vmax.xlane.f32.xlu0 %v412
      %v414 = vpop.xlane.xlu0 %413
      %v415 = vsel %vm315, %v284, -inf
      %416 = vmax.xlane.f32.xlu0 %v415
      %v417 = vpop.xlane.xlu0 %416
      %v418 = vsel %vm315, %v285, -inf
      %419 = vmax.xlane.f32.xlu0 %v418
      %v420 = vpop.xlane.xlu0 %419
      %v421 = vsel %vm315, %v286, -inf
      %422 = vmax.xlane.f32.xlu0 %v421
      %v423 = vpop.xlane.xlu0 %422
      %v424 = vsel %vm315, %v287, -inf
      %425 = vmax.xlane.f32.xlu0 %v424
      %v426 = vpop.xlane.xlu0 %425
      %v427 = vsel %vm315, %v288, -inf
      %428 = vmax.xlane.f32.xlu0 %v427
      %v429 = vpop.xlane.xlu0 %428
      %v430 = vsel %vm315, %v289, -inf
      %431 = vmax.xlane.f32.xlu0 %v430
      %v432 = vpop.xlane.xlu0 %431
      %v433 = vsel %vm315, %v290, -inf
      %434 = vmax.xlane.f32.xlu0 %v433
      %v435 = vpop.xlane.xlu0 %434
      %v436 = vsel %vm315, %v291, -inf
      %437 = vmax.xlane.f32.xlu0 %v436
      %v438 = vpop.xlane.xlu0 %437
      %v439 = vsel %vm315, %v292, -inf
      %440 = vmax.xlane.f32.xlu0 %v439
      %v441 = vpop.xlane.xlu0 %440
      %v442 = vsel %vm315, %v293, -inf
      %443 = vmax.xlane.f32.xlu0 %v442
      %v444 = vpop.xlane.xlu0 %443
      %v445 = vsel %vm315, %v294, -inf
      %446 = vmax.xlane.f32.xlu0 %v445
      %v447 = vpop.xlane.xlu0 %446
      %v448 = vsel %vm315, %v295, -inf
      %449 = vmax.xlane.f32.xlu0 %v448
      %v450 = vpop.xlane.xlu0 %449
      %v451 = vsel %vm315, %v296, -inf
      %452 = vmax.xlane.f32.xlu0 %v451
      %v453 = vpop.xlane.xlu0 %452
      %v454 = vsel %vm315, %v297, -inf
      %455 = vmax.xlane.f32.xlu0 %v454
      %v456 = vpop.xlane.xlu0 %455
      %v457 = vsel %vm315, %v298, -inf
      %458 = vmax.xlane.f32.xlu0 %v457
      %v459 = vpop.xlane.xlu0 %458
      %v460 = vsel %vm315, %v299, -inf
      %461 = vmax.xlane.f32.xlu0 %v460
      %v462 = vpop.xlane.xlu0 %461
      %v463 = vsel %vm315, %v300, -inf
      %464 = vmax.xlane.f32.xlu0 %v463
      %v465 = vpop.xlane.xlu0 %464
      %v466 = vsel %vm315, %v301, -inf
      %467 = vmax.xlane.f32.xlu0 %v466
      %v468 = vpop.xlane.xlu0 %467
      %v469 = vsel %vm315, %v302, -inf
      %470 = vmax.xlane.f32.xlu0 %v469
      %v471 = vpop.xlane.xlu0 %470
      %v472 = vsel %vm315, %v303, -inf
      %473 = vmax.xlane.f32.xlu0 %v472
      %v474 = vpop.xlane.xlu0 %473
      %v475 = vsel %vm315, %v304, -inf
      %476 = vmax.xlane.f32.xlu0 %v475
      %v477 = vpop.xlane.xlu0 %476
      %v478 = vsel %vm315, %v305, -inf
      %479 = vmax.xlane.f32.xlu0 %v478
      %v480 = vpop.xlane.xlu0 %479
      %v481 = vsel %vm315, %v306, -inf
      %482 = vmax.xlane.f32.xlu0 %v481
      %v483 = vpop.xlane.xlu0 %482
      %v484 = vsel %vm315, %v307, -inf
      %485 = vmax.xlane.f32.xlu0 %v484
      %v486 = vpop.xlane.xlu0 %485
      %v487 = vsel %vm315, %v308, -inf
      %488 = vmax.xlane.f32.xlu0 %v487
      %v489 = vpop.xlane.xlu0 %488
      %v490 = vsel %vm315, %v309, -inf
      %491 = vmax.xlane.f32.xlu0 %v490
      %v492 = vpop.xlane.xlu0 %491
      %v493 = vsel %vm315, %v310, -inf
      %494 = vmax.xlane.f32.xlu0 %v493
      %v495 = vpop.xlane.xlu0 %494
      %v496 = vsel %vm315, %v311, -inf
      %497 = vmax.xlane.f32.xlu0 %v496
      %v498 = vpop.xlane.xlu0 %497
      %v499 = vsel %vm315, %v312, -inf
      %500 = vmax.xlane.f32.xlu0 %v499
      %v501 = vpop.xlane.xlu0 %500
      %v502 = vsel %vm315, %v313, -inf
      %503 = vmax.xlane.f32.xlu0 %v502
      %v504 = vpop.xlane.xlu0 %503
      %v505 = vsel %vm315, %v314, -inf
      %506 = vmax.xlane.f32.xlu0 %v505
      %v507 = vpop.xlane.xlu0 %506
      %v508 = vsub.f32 %v251, %v318
      %v509 = vsub.f32 %v252, %v321
      %v510 = vsub.f32 %v253, %v324
      %v511 = vsub.f32 %v254, %v327
      %v512 = vsub.f32 %v255, %v330
      %v513 = vsub.f32 %v256, %v333
      %v514 = vsub.f32 %v257, %v336
      %v515 = vsub.f32 %v258, %v339
      %v516 = vsub.f32 %v259, %v342
      %v517 = vsub.f32 %v260, %v345
      %v518 = vsub.f32 %v261, %v348
      %v519 = vsub.f32 %v262, %v351
      %v520 = vsub.f32 %v263, %v354
      %v521 = vsub.f32 %v264, %v357
      %v522 = vsub.f32 %v265, %v360
      %v523 = vsub.f32 %v266, %v363
      %v524 = vsub.f32 %v267, %v366
      %v525 = vsub.f32 %v268, %v369
      %v526 = vsub.f32 %v269, %v372
      %v527 = vsub.f32 %v270, %v375
      %v528 = vsub.f32 %v271, %v378
      %v529 = vsub.f32 %v272, %v381
      %v530 = vsub.f32 %v273, %v384
      %v531 = vsub.f32 %v274, %v387
      %v532 = vsub.f32 %v275, %v390
      %v533 = vsub.f32 %v276, %v393
      %v534 = vsub.f32 %v277, %v396
      %v535 = vsub.f32 %v278, %v399
      %v536 = vsub.f32 %v279, %v402
      %v537 = vsub.f32 %v280, %v405
      %v538 = vsub.f32 %v281, %v408
      %v539 = vsub.f32 %v282, %v411
      %v540 = vsub.f32 %v283, %v414
      %v541 = vsub.f32 %v284, %v417
      %v542 = vsub.f32 %v285, %v420
      %v543 = vsub.f32 %v286, %v423
      %v544 = vsub.f32 %v287, %v426
      %v545 = vsub.f32 %v288, %v429
      %v546 = vsub.f32 %v289, %v432
      %v547 = vsub.f32 %v290, %v435
      %v548 = vsub.f32 %v291, %v438
      %v549 = vsub.f32 %v292, %v441
      %v550 = vsub.f32 %v293, %v444
      %v551 = vsub.f32 %v294, %v447
      %v552 = vsub.f32 %v295, %v450
      %v553 = vsub.f32 %v296, %v453
      %v554 = vsub.f32 %v297, %v456
      %v555 = vsub.f32 %v298, %v459
      %v556 = vsub.f32 %v299, %v462
      %v557 = vsub.f32 %v300, %v465
      %v558 = vsub.f32 %v301, %v468
      %v559 = vsub.f32 %v302, %v471
      %v560 = vsub.f32 %v303, %v474
      %v561 = vsub.f32 %v304, %v477
      %v562 = vsub.f32 %v305, %v480
      %v563 = vsub.f32 %v306, %v483
      %v564 = vsub.f32 %v307, %v486
      %v565 = vsub.f32 %v308, %v489
      %v566 = vsub.f32 %v309, %v492
      %v567 = vsub.f32 %v310, %v495
      %v568 = vsub.f32 %v311, %v498
      %v569 = vsub.f32 %v312, %v501
      %v570 = vsub.f32 %v313, %v504
      %v571 = vsub.f32 %v314, %v507
      %v572 = vmul.f32 %v508, 1.442695
      %v573 = vpow.pop %v572
      %v574 = vmul.f32 %v509, 1.442695
      %v575 = vpow.pop %v574
      %v576 = vmul.f32 %v510, 1.442695
      %v577 = vpow.pop %v576
      %v578 = vmul.f32 %v511, 1.442695
      %v579 = vpow.pop %v578
      %v580 = vmul.f32 %v512, 1.442695
      %v581 = vpow.pop %v580
      %v582 = vmul.f32 %v513, 1.442695
      %v583 = vpow.pop %v582
      %v584 = vmul.f32 %v514, 1.442695
      %v585 = vpow.pop %v584
      %v586 = vmul.f32 %v515, 1.442695
      %v587 = vpow.pop %v586
      %v588 = vmul.f32 %v516, 1.442695
      %v589 = vpow.pop %v588
      %v590 = vmul.f32 %v517, 1.442695
      %v591 = vpow.pop %v590
      %v592 = vmul.f32 %v518, 1.442695
      %v593 = vpow.pop %v592
      %v594 = vmul.f32 %v519, 1.442695
      %v595 = vpow.pop %v594
      %v596 = vmul.f32 %v520, 1.442695
      %v597 = vpow.pop %v596
      %v598 = vmul.f32 %v521, 1.442695
      %v599 = vpow.pop %v598
      %v600 = vmul.f32 %v522, 1.442695
      %v601 = vpow.pop %v600
      %v602 = vmul.f32 %v523, 1.442695
      %v603 = vpow.pop %v602
      %v604 = vmul.f32 %v524, 1.442695
      %v605 = vpow.pop %v604
      %v606 = vmul.f32 %v525, 1.442695
      %v607 = vpow.pop %v606
      %v608 = vmul.f32 %v526, 1.442695
      %v609 = vpow.pop %v608
      %v610 = vmul.f32 %v527, 1.442695
      %v611 = vpow.pop %v610
      %v612 = vmul.f32 %v528, 1.442695
      %v613 = vpow.pop %v612
      %v614 = vmul.f32 %v529, 1.442695
      %v615 = vpow.pop %v614
      %v616 = vmul.f32 %v530, 1.442695
      %v617 = vpow.pop %v616
      %v618 = vmul.f32 %v531, 1.442695
      %v619 = vpow.pop %v618
      %v620 = vmul.f32 %v532, 1.442695
      %v621 = vpow.pop %v620
      %v622 = vmul.f32 %v533, 1.442695
      %v623 = vpow.pop %v622
      %v624 = vmul.f32 %v534, 1.442695
      %v625 = vpow.pop %v624
      %v626 = vmul.f32 %v535, 1.442695
      %v627 = vpow.pop %v626
      %v628 = vmul.f32 %v536, 1.442695
      %v629 = vpow.pop %v628
      %v630 = vmul.f32 %v537, 1.442695
      %v631 = vpow.pop %v630
      %v632 = vmul.f32 %v538, 1.442695
      %v633 = vpow.pop %v632
      %v634 = vmul.f32 %v539, 1.442695
      %v635 = vpow.pop %v634
      %v636 = vmul.f32 %v540, 1.442695
      %v637 = vpow.pop %v636
      %v638 = vmul.f32 %v541, 1.442695
      %v639 = vpow.pop %v638
      %v640 = vmul.f32 %v542, 1.442695
      %v641 = vpow.pop %v640
      %v642 = vmul.f32 %v543, 1.442695
      %v643 = vpow.pop %v642
      %v644 = vmul.f32 %v544, 1.442695
      %v645 = vpow.pop %v644
      %v646 = vmul.f32 %v545, 1.442695
      %v647 = vpow.pop %v646
      %v648 = vmul.f32 %v546, 1.442695
      %v649 = vpow.pop %v648
      %v650 = vmul.f32 %v547, 1.442695
      %v651 = vpow.pop %v650
      %v652 = vmul.f32 %v548, 1.442695
      %v653 = vpow.pop %v652
      %v654 = vmul.f32 %v549, 1.442695
      %v655 = vpow.pop %v654
      %v656 = vmul.f32 %v550, 1.442695
      %v657 = vpow.pop %v656
      %v658 = vmul.f32 %v551, 1.442695
      %v659 = vpow.pop %v658
      %v660 = vmul.f32 %v552, 1.442695
      %v661 = vpow.pop %v660
      %v662 = vmul.f32 %v553, 1.442695
      %v663 = vpow.pop %v662
      %v664 = vmul.f32 %v554, 1.442695
      %v665 = vpow.pop %v664
      %v666 = vmul.f32 %v555, 1.442695
      %v667 = vpow.pop %v666
      %v668 = vmul.f32 %v556, 1.442695
      %v669 = vpow.pop %v668
      %v670 = vmul.f32 %v557, 1.442695
      %v671 = vpow.pop %v670
      %v672 = vmul.f32 %v558, 1.442695
      %v673 = vpow.pop %v672
      %v674 = vmul.f32 %v559, 1.442695
      %v675 = vpow.pop %v674
      %v676 = vmul.f32 %v560, 1.442695
      %v677 = vpow.pop %v676
      %v678 = vmul.f32 %v561, 1.442695
      %v679 = vpow.pop %v678
      %v680 = vmul.f32 %v562, 1.442695
      %v681 = vpow.pop %v680
      %v682 = vmul.f32 %v563, 1.442695
      %v683 = vpow.pop %v682
      %v684 = vmul.f32 %v564, 1.442695
      %v685 = vpow.pop %v684
      %v686 = vmul.f32 %v565, 1.442695
      %v687 = vpow.pop %v686
      %v688 = vmul.f32 %v566, 1.442695
      %v689 = vpow.pop %v688
      %v690 = vmul.f32 %v567, 1.442695
      %v691 = vpow.pop %v690
      %v692 = vmul.f32 %v568, 1.442695
      %v693 = vpow.pop %v692
      %v694 = vmul.f32 %v569, 1.442695
      %v695 = vpow.pop %v694
      %v696 = vmul.f32 %v570, 1.442695
      %v697 = vpow.pop %v696
      %v698 = vmul.f32 %v571, 1.442695
      %v699 = vpow.pop %v698
      %v700 = vsel %vm315, %v573, 0.0
      %701 = vadd.xlane.f32.xlu0 %v700
      %v702 = vpop.xlane.xlu0 %701
      %v703 = vsel %vm315, %v575, 0.0
      %704 = vadd.xlane.f32.xlu0 %v703
      %v705 = vpop.xlane.xlu0 %704
      %v706 = vsel %vm315, %v577, 0.0
      %707 = vadd.xlane.f32.xlu0 %v706
      %v708 = vpop.xlane.xlu0 %707
      %v709 = vsel %vm315, %v579, 0.0
      %710 = vadd.xlane.f32.xlu0 %v709
      %v711 = vpop.xlane.xlu0 %710
      %v712 = vsel %vm315, %v581, 0.0
      %713 = vadd.xlane.f32.xlu0 %v712
      %v714 = vpop.xlane.xlu0 %713
      %v715 = vsel %vm315, %v583, 0.0
      %716 = vadd.xlane.f32.xlu0 %v715
      %v717 = vpop.xlane.xlu0 %716
      %v718 = vsel %vm315, %v585, 0.0
      %719 = vadd.xlane.f32.xlu0 %v718
      %v720 = vpop.xlane.xlu0 %719
      %v721 = vsel %vm315, %v587, 0.0
      %722 = vadd.xlane.f32.xlu0 %v721
      %v723 = vpop.xlane.xlu0 %722
      %v724 = vsel %vm315, %v589, 0.0
      %725 = vadd.xlane.f32.xlu0 %v724
      %v726 = vpop.xlane.xlu0 %725
      %v727 = vsel %vm315, %v591, 0.0
      %728 = vadd.xlane.f32.xlu0 %v727
      %v729 = vpop.xlane.xlu0 %728
      %v730 = vsel %vm315, %v593, 0.0
      %731 = vadd.xlane.f32.xlu0 %v730
      %v732 = vpop.xlane.xlu0 %731
      %v733 = vsel %vm315, %v595, 0.0
      %734 = vadd.xlane.f32.xlu0 %v733
      %v735 = vpop.xlane.xlu0 %734
      %v736 = vsel %vm315, %v597, 0.0
      %737 = vadd.xlane.f32.xlu0 %v736
      %v738 = vpop.xlane.xlu0 %737
      %v739 = vsel %vm315, %v599, 0.0
      %740 = vadd.xlane.f32.xlu0 %v739
      %v741 = vpop.xlane.xlu0 %740
      %v742 = vsel %vm315, %v601, 0.0
      %743 = vadd.xlane.f32.xlu0 %v742
      %v744 = vpop.xlane.xlu0 %743
      %v745 = vsel %vm315, %v603, 0.0
      %746 = vadd.xlane.f32.xlu0 %v745
      %v747 = vpop.xlane.xlu0 %746
      %v748 = vsel %vm315, %v605, 0.0
      %749 = vadd.xlane.f32.xlu0 %v748
      %v750 = vpop.xlane.xlu0 %749
      %v751 = vsel %vm315, %v607, 0.0
      %752 = vadd.xlane.f32.xlu0 %v751
      %v753 = vpop.xlane.xlu0 %752
      %v754 = vsel %vm315, %v609, 0.0
      %755 = vadd.xlane.f32.xlu0 %v754
      %v756 = vpop.xlane.xlu0 %755
      %v757 = vsel %vm315, %v611, 0.0
      %758 = vadd.xlane.f32.xlu0 %v757
      %v759 = vpop.xlane.xlu0 %758
      %v760 = vsel %vm315, %v613, 0.0
      %761 = vadd.xlane.f32.xlu0 %v760
      %v762 = vpop.xlane.xlu0 %761
      %v763 = vsel %vm315, %v615, 0.0
      %764 = vadd.xlane.f32.xlu0 %v763
      %v765 = vpop.xlane.xlu0 %764
      %v766 = vsel %vm315, %v617, 0.0
      %767 = vadd.xlane.f32.xlu0 %v766
      %v768 = vpop.xlane.xlu0 %767
      %v769 = vsel %vm315, %v619, 0.0
      %770 = vadd.xlane.f32.xlu0 %v769
      %v771 = vpop.xlane.xlu0 %770
      %v772 = vsel %vm315, %v621, 0.0
      %773 = vadd.xlane.f32.xlu0 %v772
      %v774 = vpop.xlane.xlu0 %773
      %v775 = vsel %vm315, %v623, 0.0
      %776 = vadd.xlane.f32.xlu0 %v775
      %v777 = vpop.xlane.xlu0 %776
      %v778 = vsel %vm315, %v625, 0.0
      %779 = vadd.xlane.f32.xlu0 %v778
      %v780 = vpop.xlane.xlu0 %779
      %v781 = vsel %vm315, %v627, 0.0
      %782 = vadd.xlane.f32.xlu0 %v781
      %v783 = vpop.xlane.xlu0 %782
      %v784 = vsel %vm315, %v629, 0.0
      %785 = vadd.xlane.f32.xlu0 %v784
      %v786 = vpop.xlane.xlu0 %785
      %v787 = vsel %vm315, %v631, 0.0
      %788 = vadd.xlane.f32.xlu0 %v787
      %v789 = vpop.xlane.xlu0 %788
      %v790 = vsel %vm315, %v633, 0.0
      %791 = vadd.xlane.f32.xlu0 %v790
      %v792 = vpop.xlane.xlu0 %791
      %v793 = vsel %vm315, %v635, 0.0
      %794 = vadd.xlane.f32.xlu0 %v793
      %v795 = vpop.xlane.xlu0 %794
      %v796 = vsel %vm315, %v637, 0.0
      %797 = vadd.xlane.f32.xlu0 %v796
      %v798 = vpop.xlane.xlu0 %797
      %v799 = vsel %vm315, %v639, 0.0
      %800 = vadd.xlane.f32.xlu0 %v799
      %v801 = vpop.xlane.xlu0 %800
      %v802 = vsel %vm315, %v641, 0.0
      %803 = vadd.xlane.f32.xlu0 %v802
      %v804 = vpop.xlane.xlu0 %803
      %v805 = vsel %vm315, %v643, 0.0
      %806 = vadd.xlane.f32.xlu0 %v805
      %v807 = vpop.xlane.xlu0 %806
      %v808 = vsel %vm315, %v645, 0.0
      %809 = vadd.xlane.f32.xlu0 %v808
      %v810 = vpop.xlane.xlu0 %809
      %v811 = vsel %vm315, %v647, 0.0
      %812 = vadd.xlane.f32.xlu0 %v811
      %v813 = vpop.xlane.xlu0 %812
      %v814 = vsel %vm315, %v649, 0.0
      %815 = vadd.xlane.f32.xlu0 %v814
      %v816 = vpop.xlane.xlu0 %815
      %v817 = vsel %vm315, %v651, 0.0
      %818 = vadd.xlane.f32.xlu0 %v817
      %v819 = vpop.xlane.xlu0 %818
      %v820 = vsel %vm315, %v653, 0.0
      %821 = vadd.xlane.f32.xlu0 %v820
      %v822 = vpop.xlane.xlu0 %821
      %v823 = vsel %vm315, %v655, 0.0
      %824 = vadd.xlane.f32.xlu0 %v823
      %v825 = vpop.xlane.xlu0 %824
      %v826 = vsel %vm315, %v657, 0.0
      %827 = vadd.xlane.f32.xlu0 %v826
      %v828 = vpop.xlane.xlu0 %827
      %v829 = vsel %vm315, %v659, 0.0
      %830 = vadd.xlane.f32.xlu0 %v829
      %v831 = vpop.xlane.xlu0 %830
      %v832 = vsel %vm315, %v661, 0.0
      %833 = vadd.xlane.f32.xlu0 %v832
      %v834 = vpop.xlane.xlu0 %833
      %v835 = vsel %vm315, %v663, 0.0
      %836 = vadd.xlane.f32.xlu0 %v835
      %v837 = vpop.xlane.xlu0 %836
      %v838 = vsel %vm315, %v665, 0.0
      %839 = vadd.xlane.f32.xlu0 %v838
      %v840 = vpop.xlane.xlu0 %839
      %v841 = vsel %vm315, %v667, 0.0
      %842 = vadd.xlane.f32.xlu0 %v841
      %v843 = vpop.xlane.xlu0 %842
      %v844 = vsel %vm315, %v669, 0.0
      %845 = vadd.xlane.f32.xlu0 %v844
      %v846 = vpop.xlane.xlu0 %845
      %v847 = vsel %vm315, %v671, 0.0
      %848 = vadd.xlane.f32.xlu0 %v847
      %v849 = vpop.xlane.xlu0 %848
      %v850 = vsel %vm315, %v673, 0.0
      %851 = vadd.xlane.f32.xlu0 %v850
      %v852 = vpop.xlane.xlu0 %851
      %v853 = vsel %vm315, %v675, 0.0
      %854 = vadd.xlane.f32.xlu0 %v853
      %v855 = vpop.xlane.xlu0 %854
      %v856 = vsel %vm315, %v677, 0.0
      %857 = vadd.xlane.f32.xlu0 %v856
      %v858 = vpop.xlane.xlu0 %857
      %v859 = vsel %vm315, %v679, 0.0
      %860 = vadd.xlane.f32.xlu0 %v859
      %v861 = vpop.xlane.xlu0 %860
      %v862 = vsel %vm315, %v681, 0.0
      %863 = vadd.xlane.f32.xlu0 %v862
      %v864 = vpop.xlane.xlu0 %863
      %v865 = vsel %vm315, %v683, 0.0
      %866 = vadd.xlane.f32.xlu0 %v865
      %v867 = vpop.xlane.xlu0 %866
      %v868 = vsel %vm315, %v685, 0.0
      %869 = vadd.xlane.f32.xlu0 %v868
      %v870 = vpop.xlane.xlu0 %869
      %v871 = vsel %vm315, %v687, 0.0
      %872 = vadd.xlane.f32.xlu0 %v871
      %v873 = vpop.xlane.xlu0 %872
      %v874 = vsel %vm315, %v689, 0.0
      %875 = vadd.xlane.f32.xlu0 %v874
      %v876 = vpop.xlane.xlu0 %875
      %v877 = vsel %vm315, %v691, 0.0
      %878 = vadd.xlane.f32.xlu0 %v877
      %v879 = vpop.xlane.xlu0 %878
      %v880 = vsel %vm315, %v693, 0.0
      %881 = vadd.xlane.f32.xlu0 %v880
      %v882 = vpop.xlane.xlu0 %881
      %v883 = vsel %vm315, %v695, 0.0
      %884 = vadd.xlane.f32.xlu0 %v883
      %v885 = vpop.xlane.xlu0 %884
      %v886 = vsel %vm315, %v697, 0.0
      %887 = vadd.xlane.f32.xlu0 %v886
      %v888 = vpop.xlane.xlu0 %887
      %v889 = vsel %vm315, %v699, 0.0
      %890 = vadd.xlane.f32.xlu0 %v889
      %v891 = vpop.xlane.xlu0 %890
      %v892 = vrcp.pop %v702
      %v893 = vrcp.pop %v705
      %v894 = vrcp.pop %v708
      %v895 = vrcp.pop %v711
      %v896 = vrcp.pop %v714
      %v897 = vrcp.pop %v717
      %v898 = vrcp.pop %v720
      %v899 = vrcp.pop %v723
      %v900 = vrcp.pop %v726
      %v901 = vrcp.pop %v729
      %v902 = vrcp.pop %v732
      %v903 = vrcp.pop %v735
      %v904 = vrcp.pop %v738
      %v905 = vrcp.pop %v741
      %v906 = vrcp.pop %v744
      %v907 = vrcp.pop %v747
      %v908 = vrcp.pop %v750
      %v909 = vrcp.pop %v753
      %v910 = vrcp.pop %v756
      %v911 = vrcp.pop %v759
      %v912 = vrcp.pop %v762
      %v913 = vrcp.pop %v765
      %v914 = vrcp.pop %v768
      %v915 = vrcp.pop %v771
      %v916 = vrcp.pop %v774
      %v917 = vrcp.pop %v777
      %v918 = vrcp.pop %v780
      %v919 = vrcp.pop %v783
      %v920 = vrcp.pop %v786
      %v921 = vrcp.pop %v789
      %v922 = vrcp.pop %v792
      %v923 = vrcp.pop %v795
      %v924 = vrcp.pop %v798
      %v925 = vrcp.pop %v801
      %v926 = vrcp.pop %v804
      %v927 = vrcp.pop %v807
      %v928 = vrcp.pop %v810
      %v929 = vrcp.pop %v813
      %v930 = vrcp.pop %v816
      %v931 = vrcp.pop %v819
      %v932 = vrcp.pop %v822
      %v933 = vrcp.pop %v825
      %v934 = vrcp.pop %v828
      %v935 = vrcp.pop %v831
      %v936 = vrcp.pop %v834
      %v937 = vrcp.pop %v837
      %v938 = vrcp.pop %v840
      %v939 = vrcp.pop %v843
      %v940 = vrcp.pop %v846
      %v941 = vrcp.pop %v849
      %v942 = vrcp.pop %v852
      %v943 = vrcp.pop %v855
      %v944 = vrcp.pop %v858
      %v945 = vrcp.pop %v861
      %v946 = vrcp.pop %v864
      %v947 = vrcp.pop %v867
      %v948 = vrcp.pop %v870
      %v949 = vrcp.pop %v873
      %v950 = vrcp.pop %v876
      %v951 = vrcp.pop %v879
      %v952 = vrcp.pop %v882
      %v953 = vrcp.pop %v885
      %v954 = vrcp.pop %v888
      %v955 = vrcp.pop %v891
      %v956 = vmul.f32 %v573, %v892
      %v957 = vmul.f32 %v575, %v893
      %v958 = vmul.f32 %v577, %v894
      %v959 = vmul.f32 %v579, %v895
      %v960 = vmul.f32 %v581, %v896
      %v961 = vmul.f32 %v583, %v897
      %v962 = vmul.f32 %v585, %v898
      %v963 = vmul.f32 %v587, %v899
      %v964 = vmul.f32 %v589, %v900
      %v965 = vmul.f32 %v591, %v901
      %v966 = vmul.f32 %v593, %v902
      %v967 = vmul.f32 %v595, %v903
      %v968 = vmul.f32 %v597, %v904
      %v969 = vmul.f32 %v599, %v905
      %v970 = vmul.f32 %v601, %v906
      %v971 = vmul.f32 %v603, %v907
      %v972 = vmul.f32 %v605, %v908
      %v973 = vmul.f32 %v607, %v909
      %v974 = vmul.f32 %v609, %v910
      %v975 = vmul.f32 %v611, %v911
      %v976 = vmul.f32 %v613, %v912
      %v977 = vmul.f32 %v615, %v913
      %v978 = vmul.f32 %v617, %v914
      %v979 = vmul.f32 %v619, %v915
      %v980 = vmul.f32 %v621, %v916
      %v981 = vmul.f32 %v623, %v917
      %v982 = vmul.f32 %v625, %v918
      %v983 = vmul.f32 %v627, %v919
      %v984 = vmul.f32 %v629, %v920
      %v985 = vmul.f32 %v631, %v921
      %v986 = vmul.f32 %v633, %v922
      %v987 = vmul.f32 %v635, %v923
      %v988 = vmul.f32 %v637, %v924
      %v989 = vmul.f32 %v639, %v925
      %v990 = vmul.f32 %v641, %v926
      %v991 = vmul.f32 %v643, %v927
      %v992 = vmul.f32 %v645, %v928
      %v993 = vmul.f32 %v647, %v929
      %v994 = vmul.f32 %v649, %v930
      %v995 = vmul.f32 %v651, %v931
      %v996 = vmul.f32 %v653, %v932
      %v997 = vmul.f32 %v655, %v933
      %v998 = vmul.f32 %v657, %v934
      %v999 = vmul.f32 %v659, %v935
      %v1000 = vmul.f32 %v661, %v936
      %v1001 = vmul.f32 %v663, %v937
      %v1002 = vmul.f32 %v665, %v938
      %v1003 = vmul.f32 %v667, %v939
      %v1004 = vmul.f32 %v669, %v940
      %v1005 = vmul.f32 %v671, %v941
      %v1006 = vmul.f32 %v673, %v942
      %v1007 = vmul.f32 %v675, %v943
      %v1008 = vmul.f32 %v677, %v944
      %v1009 = vmul.f32 %v679, %v945
      %v1010 = vmul.f32 %v681, %v946
      %v1011 = vmul.f32 %v683, %v947
      %v1012 = vmul.f32 %v685, %v948
      %v1013 = vmul.f32 %v687, %v949
      %v1014 = vmul.f32 %v689, %v950
      %v1015 = vmul.f32 %v691, %v951
      %v1016 = vmul.f32 %v693, %v952
      %v1017 = vmul.f32 %v695, %v953
      %v1018 = vmul.f32 %v697, %v954
      %v1019 = vmul.f32 %v699, %v955
      %v1020 = vld [vmem:[%s2] sm:$0xff]
      %v1021 = vld [vmem:[%s2 + $0x8] sm:$0xff]
      %v1023 = vsel %vm315, %v956, 0
      %v1026 = vsel %vm315, %v957, 0
      %v1029 = vsel %vm315, %v958, 0
      %v1032 = vsel %vm315, %v959, 0
      %v1035 = vsel %vm315, %v960, 0
      %v1038 = vsel %vm315, %v961, 0
      %v1041 = vsel %vm315, %v962, 0
      %v1044 = vsel %vm315, %v963, 0
      %v1047 = vsel %vm315, %v964, 0
      %v1050 = vsel %vm315, %v965, 0
      %v1053 = vsel %vm315, %v966, 0
      %v1056 = vsel %vm315, %v967, 0
      %v1059 = vsel %vm315, %v968, 0
      %v1062 = vsel %vm315, %v969, 0
      %v1065 = vsel %vm315, %v970, 0
      %v1068 = vsel %vm315, %v971, 0
      %v1071 = vsel %vm315, %v972, 0
      %v1074 = vsel %vm315, %v973, 0
      %v1077 = vsel %vm315, %v974, 0
      %v1080 = vsel %vm315, %v975, 0
      %v1083 = vsel %vm315, %v976, 0
      %v1086 = vsel %vm315, %v977, 0
      %v1089 = vsel %vm315, %v978, 0
      %v1092 = vsel %vm315, %v979, 0
      %v1095 = vsel %vm315, %v980, 0
      %v1098 = vsel %vm315, %v981, 0
      %v1101 = vsel %vm315, %v982, 0
      %v1104 = vsel %vm315, %v983, 0
      %v1107 = vsel %vm315, %v984, 0
      %v1110 = vsel %vm315, %v985, 0
      %v1113 = vsel %vm315, %v986, 0
      %v1116 = vsel %vm315, %v987, 0
      %v1119 = vsel %vm315, %v988, 0
      %v1122 = vsel %vm315, %v989, 0
      %v1125 = vsel %vm315, %v990, 0
      %v1128 = vsel %vm315, %v991, 0
      %v1131 = vsel %vm315, %v992, 0
      %v1134 = vsel %vm315, %v993, 0
      %v1137 = vsel %vm315, %v994, 0
      %v1140 = vsel %vm315, %v995, 0
      %v1143 = vsel %vm315, %v996, 0
      %v1146 = vsel %vm315, %v997, 0
      %v1149 = vsel %vm315, %v998, 0
      %v1152 = vsel %vm315, %v999, 0
      %v1155 = vsel %vm315, %v1000, 0
      %v1158 = vsel %vm315, %v1001, 0
      %v1161 = vsel %vm315, %v1002, 0
      %v1164 = vsel %vm315, %v1003, 0
      %v1167 = vsel %vm315, %v1004, 0
      %v1170 = vsel %vm315, %v1005, 0
      %v1173 = vsel %vm315, %v1006, 0
      %v1176 = vsel %vm315, %v1007, 0
      %v1179 = vsel %vm315, %v1008, 0
      %v1182 = vsel %vm315, %v1009, 0
      %v1185 = vsel %vm315, %v1010, 0
      %v1188 = vsel %vm315, %v1011, 0
      %v1191 = vsel %vm315, %v1012, 0
      %v1194 = vsel %vm315, %v1013, 0
      %v1197 = vsel %vm315, %v1014, 0
      %v1200 = vsel %vm315, %v1015, 0
      %v1203 = vsel %vm315, %v1016, 0
      %v1206 = vsel %vm315, %v1017, 0
      %v1209 = vsel %vm315, %v1018, 0
      %v1212 = vsel %vm315, %v1019, 0
      %1214 = vmatprep.subr.mxu0 0.0
      %1215 = vmatpush1.msra.mxu0 0.0
      %1216 = vmatprep.subr.mxu0 0.0
      %1217 = vmatpush1.msra.mxu0 0.0
      %1218 = vmatprep.subr.mxu0 0.0
      %1219 = vmatpush1.msra.mxu0 0.0
      %1220 = vmatprep.subr.mxu0 0.0
      %1221 = vmatpush1.msra.mxu0 0.0
      %1222 = vmatprep.subr.mxu0 0.0
      %1223 = vmatpush1.msra.mxu0 0.0
      %1224 = vmatprep.subr.mxu0 0.0
      %1225 = vmatpush1.msra.mxu0 0.0
      %1226 = vmatprep.subr.mxu0 0.0
      %1227 = vmatpush1.msra.mxu0 0.0
      %1228 = vmatprep.subr.mxu0 0.0
      %1229 = vmatpush1.msra.mxu0 0.0
      %1230 = vmatprep.subr.mxu0 0.0
      %1231 = vmatpush1.msra.mxu0 0.0
      %1232 = vmatprep.subr.mxu0 0.0
      %1233 = vmatpush1.msra.mxu0 0.0
      %1234 = vmatprep.subr.mxu0 0.0
      %1235 = vmatpush1.msra.mxu0 0.0
      %1236 = vmatprep.subr.mxu0 0.0
      %1237 = vmatpush1.msra.mxu0 0.0
      %1238 = vmatprep.subr.mxu0 0.0
      %1239 = vmatpush1.msra.mxu0 0.0
      %1240 = vmatprep.subr.mxu0 0.0
      %1241 = vmatpush1.msra.mxu0 0.0
      %1242 = vmatprep.subr.mxu0 0.0
      %1243 = vmatpush1.msra.mxu0 %v1021
      %1244 = vmatprep.subr.mxu0 0.0
      %1245 = vmatpush1.msra.mxu0 %v1020
      %1246 = vmatprep.subr.mxu0 0.0
      %1247 = vmatpush2.msra.mxu0 0.0
      %1248 = vmatprep.subr.mxu0 0.0
      %1249 = vmatpush2.msra.mxu0 0.0
      %1250 = vmatprep.subr.mxu0 0.0
      %1251 = vmatpush2.msra.mxu0 0.0
      %1252 = vmatprep.subr.mxu0 0.0
      %1253 = vmatpush2.msra.mxu0 0.0
      %1254 = vmatprep.subr.mxu0 0.0
      %1255 = vmatpush2.msra.mxu0 0.0
      %1256 = vmatprep.subr.mxu0 0.0
      %1257 = vmatpush2.msra.mxu0 0.0
      %1258 = vmatprep.subr.mxu0 0.0
      %1259 = vmatpush2.msra.mxu0 0.0
      %1260 = vmatprep.subr.mxu0 0.0
      %1261 = vmatpush2.msra.mxu0 0.0
      %1262 = vmatprep.subr.mxu0 0.0
      %1263 = vmatpush2.msra.mxu0 0.0
      %1264 = vmatprep.subr.mxu0 0.0
      %1265 = vmatpush2.msra.mxu0 0.0
      %1266 = vmatprep.subr.mxu0 0.0
      %1267 = vmatpush2.msra.mxu0 0.0
      %1268 = vmatprep.subr.mxu0 0.0
      %1269 = vmatpush2.msra.mxu0 0.0
      %1270 = vmatprep.subr.mxu0 0.0
      %1271 = vmatpush2.msra.mxu0 0.0
      %1272 = vmatprep.subr.mxu0 0.0
      %1273 = vmatpush2.msra.mxu0 0.0
      %1274 = vmatprep.subr.mxu0 0.0
      %1275 = vmatpush2.msra.mxu0 0.0
      %1276 = vmatprep.subr.mxu0 0.0
      %1277 = vmatpush2.msra.mxu0 0.0
      %1278 = vmatprep.mubr.f32.mxu0 0.0
      %1279 = vmatmul.mubr.f32.gmra.mxu0 %v1023
      %v1280 = vpop.f32.mrf.mxu0
      %v1281 = vadd.f32 0.0, %v1280
      %v1282 = vpop.f32.mrf.mxu0
      %1283 = vmatprep.mubr.f32.mxu0 0.0
      %1284 = vmatmul.mubr.f32.gmra.mxu0 %v1026
      %v1285 = vpop.f32.mrf.mxu0
      %v1286 = vadd.f32 0.0, %v1285
      %v1287 = vpop.f32.mrf.mxu0
      %1288 = vmatprep.mubr.f32.mxu0 0.0
      %1289 = vmatmul.mubr.f32.gmra.mxu0 %v1029
      %v1290 = vpop.f32.mrf.mxu0
      %v1291 = vadd.f32 0.0, %v1290
      %v1292 = vpop.f32.mrf.mxu0
      %1293 = vmatprep.mubr.f32.mxu0 0.0
      %1294 = vmatmul.mubr.f32.gmra.mxu0 %v1032
      %v1295 = vpop.f32.mrf.mxu0
      %v1296 = vadd.f32 0.0, %v1295
      %v1297 = vpop.f32.mrf.mxu0
      %1298 = vmatprep.mubr.f32.mxu0 0.0
      %1299 = vmatmul.mubr.f32.gmra.mxu0 %v1035
      %v1300 = vpop.f32.mrf.mxu0
      %v1301 = vadd.f32 0.0, %v1300
      %v1302 = vpop.f32.mrf.mxu0
      %1303 = vmatprep.mubr.f32.mxu0 0.0
      %1304 = vmatmul.mubr.f32.gmra.mxu0 %v1038
      %v1305 = vpop.f32.mrf.mxu0
      %v1306 = vadd.f32 0.0, %v1305
      %v1307 = vpop.f32.mrf.mxu0
      %1308 = vmatprep.mubr.f32.mxu0 0.0
      %1309 = vmatmul.mubr.f32.gmra.mxu0 %v1041
      %v1310 = vpop.f32.mrf.mxu0
      %v1311 = vadd.f32 0.0, %v1310
      %v1312 = vpop.f32.mrf.mxu0
      %1313 = vmatprep.mubr.f32.mxu0 0.0
      %1314 = vmatmul.mubr.f32.gmra.mxu0 %v1044
      %v1315 = vpop.f32.mrf.mxu0
      %v1316 = vadd.f32 0.0, %v1315
      %v1317 = vpop.f32.mrf.mxu0
      %1318 = vmatprep.mubr.f32.mxu0 0.0
      %1319 = vmatmul.mubr.f32.gmra.mxu0 %v1047
      %v1320 = vpop.f32.mrf.mxu0
      %v1321 = vadd.f32 0.0, %v1320
      %v1322 = vpop.f32.mrf.mxu0
      %1323 = vmatprep.mubr.f32.mxu0 0.0
      %1324 = vmatmul.mubr.f32.gmra.mxu0 %v1050
      %v1325 = vpop.f32.mrf.mxu0
      %v1326 = vadd.f32 0.0, %v1325
      %v1327 = vpop.f32.mrf.mxu0
      %1328 = vmatprep.mubr.f32.mxu0 0.0
      %1329 = vmatmul.mubr.f32.gmra.mxu0 %v1053
      %v1330 = vpop.f32.mrf.mxu0
      %v1331 = vadd.f32 0.0, %v1330
      %v1332 = vpop.f32.mrf.mxu0
      %1333 = vmatprep.mubr.f32.mxu0 0.0
      %1334 = vmatmul.mubr.f32.gmra.mxu0 %v1056
      %v1335 = vpop.f32.mrf.mxu0
      %v1336 = vadd.f32 0.0, %v1335
      %v1337 = vpop.f32.mrf.mxu0
      %1338 = vmatprep.mubr.f32.mxu0 0.0
      %1339 = vmatmul.mubr.f32.gmra.mxu0 %v1059
      %v1340 = vpop.f32.mrf.mxu0
      %v1341 = vadd.f32 0.0, %v1340
      %v1342 = vpop.f32.mrf.mxu0
      %1343 = vmatprep.mubr.f32.mxu0 0.0
      %1344 = vmatmul.mubr.f32.gmra.mxu0 %v1062
      %v1345 = vpop.f32.mrf.mxu0
      %v1346 = vadd.f32 0.0, %v1345
      %v1347 = vpop.f32.mrf.mxu0
      %1348 = vmatprep.mubr.f32.mxu0 0.0
      %1349 = vmatmul.mubr.f32.gmra.mxu0 %v1065
      %v1350 = vpop.f32.mrf.mxu0
      %v1351 = vadd.f32 0.0, %v1350
      %v1352 = vpop.f32.mrf.mxu0
      %1353 = vmatprep.mubr.f32.mxu0 0.0
      %1354 = vmatmul.mubr.f32.gmra.mxu0 %v1068
      %v1355 = vpop.f32.mrf.mxu0
      %v1356 = vadd.f32 0.0, %v1355
      %v1357 = vpop.f32.mrf.mxu0
      %1358 = vmatprep.mubr.f32.mxu0 0.0
      %1359 = vmatmul.mubr.f32.gmra.mxu0 %v1071
      %v1360 = vpop.f32.mrf.mxu0
      %v1361 = vadd.f32 0.0, %v1360
      %v1362 = vpop.f32.mrf.mxu0
      %1363 = vmatprep.mubr.f32.mxu0 0.0
      %1364 = vmatmul.mubr.f32.gmra.mxu0 %v1074
      %v1365 = vpop.f32.mrf.mxu0
      %v1366 = vadd.f32 0.0, %v1365
      %v1367 = vpop.f32.mrf.mxu0
      %1368 = vmatprep.mubr.f32.mxu0 0.0
      %1369 = vmatmul.mubr.f32.gmra.mxu0 %v1077
      %v1370 = vpop.f32.mrf.mxu0
      %v1371 = vadd.f32 0.0, %v1370
      %v1372 = vpop.f32.mrf.mxu0
      %1373 = vmatprep.mubr.f32.mxu0 0.0
      %1374 = vmatmul.mubr.f32.gmra.mxu0 %v1080
      %v1375 = vpop.f32.mrf.mxu0
      %v1376 = vadd.f32 0.0, %v1375
      %v1377 = vpop.f32.mrf.mxu0
      %1378 = vmatprep.mubr.f32.mxu0 0.0
      %1379 = vmatmul.mubr.f32.gmra.mxu0 %v1083
      %v1380 = vpop.f32.mrf.mxu0
      %v1381 = vadd.f32 0.0, %v1380
      %v1382 = vpop.f32.mrf.mxu0
      %1383 = vmatprep.mubr.f32.mxu0 0.0
      %1384 = vmatmul.mubr.f32.gmra.mxu0 %v1086
      %v1385 = vpop.f32.mrf.mxu0
      %v1386 = vadd.f32 0.0, %v1385
      %v1387 = vpop.f32.mrf.mxu0
      %1388 = vmatprep.mubr.f32.mxu0 0.0
      %1389 = vmatmul.mubr.f32.gmra.mxu0 %v1089
      %v1390 = vpop.f32.mrf.mxu0
      %v1391 = vadd.f32 0.0, %v1390
      %v1392 = vpop.f32.mrf.mxu0
      %1393 = vmatprep.mubr.f32.mxu0 0.0
      %1394 = vmatmul.mubr.f32.gmra.mxu0 %v1092
      %v1395 = vpop.f32.mrf.mxu0
      %v1396 = vadd.f32 0.0, %v1395
      %v1397 = vpop.f32.mrf.mxu0
      %1398 = vmatprep.mubr.f32.mxu0 0.0
      %1399 = vmatmul.mubr.f32.gmra.mxu0 %v1095
      %v1400 = vpop.f32.mrf.mxu0
      %v1401 = vadd.f32 0.0, %v1400
      %v1402 = vpop.f32.mrf.mxu0
      %1403 = vmatprep.mubr.f32.mxu0 0.0
      %1404 = vmatmul.mubr.f32.gmra.mxu0 %v1098
      %v1405 = vpop.f32.mrf.mxu0
      %v1406 = vadd.f32 0.0, %v1405
      %v1407 = vpop.f32.mrf.mxu0
      %1408 = vmatprep.mubr.f32.mxu0 0.0
      %1409 = vmatmul.mubr.f32.gmra.mxu0 %v1101
      %v1410 = vpop.f32.mrf.mxu0
      %v1411 = vadd.f32 0.0, %v1410
      %v1412 = vpop.f32.mrf.mxu0
      %1413 = vmatprep.mubr.f32.mxu0 0.0
      %1414 = vmatmul.mubr.f32.gmra.mxu0 %v1104
      %v1415 = vpop.f32.mrf.mxu0
      %v1416 = vadd.f32 0.0, %v1415
      %v1417 = vpop.f32.mrf.mxu0
      %1418 = vmatprep.mubr.f32.mxu0 0.0
      %1419 = vmatmul.mubr.f32.gmra.mxu0 %v1107
      %v1420 = vpop.f32.mrf.mxu0
      %v1421 = vadd.f32 0.0, %v1420
      %v1422 = vpop.f32.mrf.mxu0
      %1423 = vmatprep.mubr.f32.mxu0 0.0
      %1424 = vmatmul.mubr.f32.gmra.mxu0 %v1110
      %v1425 = vpop.f32.mrf.mxu0
      %v1426 = vadd.f32 0.0, %v1425
      %v1427 = vpop.f32.mrf.mxu0
      %1428 = vmatprep.mubr.f32.mxu0 0.0
      %1429 = vmatmul.mubr.f32.gmra.mxu0 %v1113
      %v1430 = vpop.f32.mrf.mxu0
      %v1431 = vadd.f32 0.0, %v1430
      %v1432 = vpop.f32.mrf.mxu0
      %1433 = vmatprep.mubr.f32.mxu0 0.0
      %1434 = vmatmul.mubr.f32.gmra.mxu0 %v1116
      %v1435 = vpop.f32.mrf.mxu0
      %v1436 = vadd.f32 0.0, %v1435
      %v1437 = vpop.f32.mrf.mxu0
      %1438 = vmatprep.mubr.f32.mxu0 0.0
      %1439 = vmatmul.mubr.f32.gmra.mxu0 %v1119
      %v1440 = vpop.f32.mrf.mxu0
      %v1441 = vadd.f32 0.0, %v1440
      %v1442 = vpop.f32.mrf.mxu0
      %1443 = vmatprep.mubr.f32.mxu0 0.0
      %1444 = vmatmul.mubr.f32.gmra.mxu0 %v1122
      %v1445 = vpop.f32.mrf.mxu0
      %v1446 = vadd.f32 0.0, %v1445
      %v1447 = vpop.f32.mrf.mxu0
      %1448 = vmatprep.mubr.f32.mxu0 0.0
      %1449 = vmatmul.mubr.f32.gmra.mxu0 %v1125
      %v1450 = vpop.f32.mrf.mxu0
      %v1451 = vadd.f32 0.0, %v1450
      %v1452 = vpop.f32.mrf.mxu0
      %1453 = vmatprep.mubr.f32.mxu0 0.0
      %1454 = vmatmul.mubr.f32.gmra.mxu0 %v1128
      %v1455 = vpop.f32.mrf.mxu0
      %v1456 = vadd.f32 0.0, %v1455
      %v1457 = vpop.f32.mrf.mxu0
      %1458 = vmatprep.mubr.f32.mxu0 0.0
      %1459 = vmatmul.mubr.f32.gmra.mxu0 %v1131
      %v1460 = vpop.f32.mrf.mxu0
      %v1461 = vadd.f32 0.0, %v1460
      %v1462 = vpop.f32.mrf.mxu0
      %1463 = vmatprep.mubr.f32.mxu0 0.0
      %1464 = vmatmul.mubr.f32.gmra.mxu0 %v1134
      %v1465 = vpop.f32.mrf.mxu0
      %v1466 = vadd.f32 0.0, %v1465
      %v1467 = vpop.f32.mrf.mxu0
      %1468 = vmatprep.mubr.f32.mxu0 0.0
      %1469 = vmatmul.mubr.f32.gmra.mxu0 %v1137
      %v1470 = vpop.f32.mrf.mxu0
      %v1471 = vadd.f32 0.0, %v1470
      %v1472 = vpop.f32.mrf.mxu0
      %1473 = vmatprep.mubr.f32.mxu0 0.0
      %1474 = vmatmul.mubr.f32.gmra.mxu0 %v1140
      %v1475 = vpop.f32.mrf.mxu0
      %v1476 = vadd.f32 0.0, %v1475
      %v1477 = vpop.f32.mrf.mxu0
      %1478 = vmatprep.mubr.f32.mxu0 0.0
      %1479 = vmatmul.mubr.f32.gmra.mxu0 %v1143
      %v1480 = vpop.f32.mrf.mxu0
      %v1481 = vadd.f32 0.0, %v1480
      %v1482 = vpop.f32.mrf.mxu0
      %1483 = vmatprep.mubr.f32.mxu0 0.0
      %1484 = vmatmul.mubr.f32.gmra.mxu0 %v1146
      %v1485 = vpop.f32.mrf.mxu0
      %v1486 = vadd.f32 0.0, %v1485
      %v1487 = vpop.f32.mrf.mxu0
      %1488 = vmatprep.mubr.f32.mxu0 0.0
      %1489 = vmatmul.mubr.f32.gmra.mxu0 %v1149
      %v1490 = vpop.f32.mrf.mxu0
      %v1491 = vadd.f32 0.0, %v1490
      %v1492 = vpop.f32.mrf.mxu0
      %1493 = vmatprep.mubr.f32.mxu0 0.0
      %1494 = vmatmul.mubr.f32.gmra.mxu0 %v1152
      %v1495 = vpop.f32.mrf.mxu0
      %v1496 = vadd.f32 0.0, %v1495
      %v1497 = vpop.f32.mrf.mxu0
      %1498 = vmatprep.mubr.f32.mxu0 0.0
      %1499 = vmatmul.mubr.f32.gmra.mxu0 %v1155
      %v1500 = vpop.f32.mrf.mxu0
      %v1501 = vadd.f32 0.0, %v1500
      %v1502 = vpop.f32.mrf.mxu0
      %1503 = vmatprep.mubr.f32.mxu0 0.0
      %1504 = vmatmul.mubr.f32.gmra.mxu0 %v1158
      %v1505 = vpop.f32.mrf.mxu0
      %v1506 = vadd.f32 0.0, %v1505
      %v1507 = vpop.f32.mrf.mxu0
      %1508 = vmatprep.mubr.f32.mxu0 0.0
      %1509 = vmatmul.mubr.f32.gmra.mxu0 %v1161
      %v1510 = vpop.f32.mrf.mxu0
      %v1511 = vadd.f32 0.0, %v1510
      %v1512 = vpop.f32.mrf.mxu0
      %1513 = vmatprep.mubr.f32.mxu0 0.0
      %1514 = vmatmul.mubr.f32.gmra.mxu0 %v1164
      %v1515 = vpop.f32.mrf.mxu0
      %v1516 = vadd.f32 0.0, %v1515
      %v1517 = vpop.f32.mrf.mxu0
      %1518 = vmatprep.mubr.f32.mxu0 0.0
      %1519 = vmatmul.mubr.f32.gmra.mxu0 %v1167
      %v1520 = vpop.f32.mrf.mxu0
      %v1521 = vadd.f32 0.0, %v1520
      %v1522 = vpop.f32.mrf.mxu0
      %1523 = vmatprep.mubr.f32.mxu0 0.0
      %1524 = vmatmul.mubr.f32.gmra.mxu0 %v1170
      %v1525 = vpop.f32.mrf.mxu0
      %v1526 = vadd.f32 0.0, %v1525
      %v1527 = vpop.f32.mrf.mxu0
      %1528 = vmatprep.mubr.f32.mxu0 0.0
      %1529 = vmatmul.mubr.f32.gmra.mxu0 %v1173
      %v1530 = vpop.f32.mrf.mxu0
      %v1531 = vadd.f32 0.0, %v1530
      %v1532 = vpop.f32.mrf.mxu0
      %1533 = vmatprep.mubr.f32.mxu0 0.0
      %1534 = vmatmul.mubr.f32.gmra.mxu0 %v1176
      %v1535 = vpop.f32.mrf.mxu0
      %v1536 = vadd.f32 0.0, %v1535
      %v1537 = vpop.f32.mrf.mxu0
      %1538 = vmatprep.mubr.f32.mxu0 0.0
      %1539 = vmatmul.mubr.f32.gmra.mxu0 %v1179
      %v1540 = vpop.f32.mrf.mxu0
      %v1541 = vadd.f32 0.0, %v1540
      %v1542 = vpop.f32.mrf.mxu0
      %1543 = vmatprep.mubr.f32.mxu0 0.0
      %1544 = vmatmul.mubr.f32.gmra.mxu0 %v1182
      %v1545 = vpop.f32.mrf.mxu0
      %v1546 = vadd.f32 0.0, %v1545
      %v1547 = vpop.f32.mrf.mxu0
      %1548 = vmatprep.mubr.f32.mxu0 0.0
      %1549 = vmatmul.mubr.f32.gmra.mxu0 %v1185
      %v1550 = vpop.f32.mrf.mxu0
      %v1551 = vadd.f32 0.0, %v1550
      %v1552 = vpop.f32.mrf.mxu0
      %1553 = vmatprep.mubr.f32.mxu0 0.0
      %1554 = vmatmul.mubr.f32.gmra.mxu0 %v1188
      %v1555 = vpop.f32.mrf.mxu0
      %v1556 = vadd.f32 0.0, %v1555
      %v1557 = vpop.f32.mrf.mxu0
      %1558 = vmatprep.mubr.f32.mxu0 0.0
      %1559 = vmatmul.mubr.f32.gmra.mxu0 %v1191
      %v1560 = vpop.f32.mrf.mxu0
      %v1561 = vadd.f32 0.0, %v1560
      %v1562 = vpop.f32.mrf.mxu0
      %1563 = vmatprep.mubr.f32.mxu0 0.0
      %1564 = vmatmul.mubr.f32.gmra.mxu0 %v1194
      %v1565 = vpop.f32.mrf.mxu0
      %v1566 = vadd.f32 0.0, %v1565
      %v1567 = vpop.f32.mrf.mxu0
      %1568 = vmatprep.mubr.f32.mxu0 0.0
      %1569 = vmatmul.mubr.f32.gmra.mxu0 %v1197
      %v1570 = vpop.f32.mrf.mxu0
      %v1571 = vadd.f32 0.0, %v1570
      %v1572 = vpop.f32.mrf.mxu0
      %1573 = vmatprep.mubr.f32.mxu0 0.0
      %1574 = vmatmul.mubr.f32.gmra.mxu0 %v1200
      %v1575 = vpop.f32.mrf.mxu0
      %v1576 = vadd.f32 0.0, %v1575
      %v1577 = vpop.f32.mrf.mxu0
      %1578 = vmatprep.mubr.f32.mxu0 0.0
      %1579 = vmatmul.mubr.f32.gmra.mxu0 %v1203
      %v1580 = vpop.f32.mrf.mxu0
      %v1581 = vadd.f32 0.0, %v1580
      %v1582 = vpop.f32.mrf.mxu0
      %1583 = vmatprep.mubr.f32.mxu0 0.0
      %1584 = vmatmul.mubr.f32.gmra.mxu0 %v1206
      %v1585 = vpop.f32.mrf.mxu0
      %v1586 = vadd.f32 0.0, %v1585
      %v1587 = vpop.f32.mrf.mxu0
      %1588 = vmatprep.mubr.f32.mxu0 0.0
      %1589 = vmatmul.mubr.f32.gmra.mxu0 %v1209
      %v1590 = vpop.f32.mrf.mxu0
      %v1591 = vadd.f32 0.0, %v1590
      %v1592 = vpop.f32.mrf.mxu0
      %1593 = vmatprep.mubr.f32.mxu0 0.0
      %1594 = vmatmul.mubr.f32.gmra.mxu0 %v1212
      %v1595 = vpop.f32.mrf.mxu0
      %v1596 = vadd.f32 0.0, %v1595
      %v1597 = vpop.f32.mrf.mxu0
      %1598 = vdwg.mxu0
      %v1599 = vld [vmem:[%s236] sm:$0xf]
      %v1600 = vld [vmem:[%s236 + $0x4] sm:$0xf]
      %v1601 = vld [vmem:[%s236 + $0x8] sm:$0xf]
      %v1602 = vld [vmem:[%s236 + $0xc] sm:$0xf]
      %v1603 = vld [vmem:[%s236 + $0x10] sm:$0xf]
      %v1604 = vld [vmem:[%s236 + $0x14] sm:$0xf]
      %v1605 = vld [vmem:[%s236 + $0x18] sm:$0xf]
      %v1606 = vld [vmem:[%s236 + $0x1c] sm:$0xf]
      %v1607 = vld [vmem:[%s236 + $0x20] sm:$0xf]
      %v1608 = vld [vmem:[%s236 + $0x24] sm:$0xf]
      %v1609 = vld [vmem:[%s236 + $0x28] sm:$0xf]
      %v1610 = vld [vmem:[%s236 + $0x2c] sm:$0xf]
      %v1611 = vld [vmem:[%s236 + $0x30] sm:$0xf]
      %v1612 = vld [vmem:[%s236 + $0x34] sm:$0xf]
      %v1613 = vld [vmem:[%s236 + $0x38] sm:$0xf]
      %v1614 = vld [vmem:[%s236 + $0x3c] sm:$0xf]
      %v1615 = vld [vmem:[%s236 + $0x40] sm:$0xf]
      %v1616 = vld [vmem:[%s236 + $0x44] sm:$0xf]
      %v1617 = vld [vmem:[%s236 + $0x48] sm:$0xf]
      %v1618 = vld [vmem:[%s236 + $0x4c] sm:$0xf]
      %v1619 = vld [vmem:[%s236 + $0x50] sm:$0xf]
      %v1620 = vld [vmem:[%s236 + $0x54] sm:$0xf]
      %v1621 = vld [vmem:[%s236 + $0x58] sm:$0xf]
      %v1622 = vld [vmem:[%s236 + $0x5c] sm:$0xf]
      %v1623 = vld [vmem:[%s236 + $0x60] sm:$0xf]
      %v1624 = vld [vmem:[%s236 + $0x64] sm:$0xf]
      %v1625 = vld [vmem:[%s236 + $0x68] sm:$0xf]
      %v1626 = vld [vmem:[%s236 + $0x6c] sm:$0xf]
      %v1627 = vld [vmem:[%s236 + $0x70] sm:$0xf]
      %v1628 = vld [vmem:[%s236 + $0x74] sm:$0xf]
      %v1629 = vld [vmem:[%s236 + $0x78] sm:$0xf]
      %v1630 = vld [vmem:[%s236 + $0x7c] sm:$0xf]
      %v1631 = vld [vmem:[%s236 + $0x80] sm:$0xf]
      %v1632 = vld [vmem:[%s236 + $0x84] sm:$0xf]
      %v1633 = vld [vmem:[%s236 + $0x88] sm:$0xf]
      %v1634 = vld [vmem:[%s236 + $0x8c] sm:$0xf]
      %v1635 = vld [vmem:[%s236 + $0x90] sm:$0xf]
      %v1636 = vld [vmem:[%s236 + $0x94] sm:$0xf]
      %v1637 = vld [vmem:[%s236 + $0x98] sm:$0xf]
      %v1638 = vld [vmem:[%s236 + $0x9c] sm:$0xf]
      %v1639 = vld [vmem:[%s236 + $0xa0] sm:$0xf]
      %v1640 = vld [vmem:[%s236 + $0xa4] sm:$0xf]
      %v1641 = vld [vmem:[%s236 + $0xa8] sm:$0xf]
      %v1642 = vld [vmem:[%s236 + $0xac] sm:$0xf]
      %v1643 = vld [vmem:[%s236 + $0xb0] sm:$0xf]
      %v1644 = vld [vmem:[%s236 + $0xb4] sm:$0xf]
      %v1645 = vld [vmem:[%s236 + $0xb8] sm:$0xf]
      %v1646 = vld [vmem:[%s236 + $0xbc] sm:$0xf]
      %v1647 = vld [vmem:[%s236 + $0xc0] sm:$0xf]
      %v1648 = vld [vmem:[%s236 + $0xc4] sm:$0xf]
      %v1649 = vld [vmem:[%s236 + $0xc8] sm:$0xf]
      %v1650 = vld [vmem:[%s236 + $0xcc] sm:$0xf]
      %v1651 = vld [vmem:[%s236 + $0xd0] sm:$0xf]
      %v1652 = vld [vmem:[%s236 + $0xd4] sm:$0xf]
      %v1653 = vld [vmem:[%s236 + $0xd8] sm:$0xf]
      %v1654 = vld [vmem:[%s236 + $0xdc] sm:$0xf]
      %v1655 = vld [vmem:[%s236 + $0xe0] sm:$0xf]
      %v1656 = vld [vmem:[%s236 + $0xe4] sm:$0xf]
      %v1657 = vld [vmem:[%s236 + $0xe8] sm:$0xf]
      %v1658 = vld [vmem:[%s236 + $0xec] sm:$0xf]
      %v1659 = vld [vmem:[%s236 + $0xf0] sm:$0xf]
      %v1660 = vld [vmem:[%s236 + $0xf4] sm:$0xf]
      %v1661 = vld [vmem:[%s236 + $0xf8] sm:$0xf]
      %v1662 = vld [vmem:[%s236 + $0xfc] sm:$0xf]
      %v1663 = vpack.c.bf16 %v1286, %v1281
      %v1664 = vpack.c.bf16 %v1296, %v1291
      %v1665 = vpack.c.bf16 %v1306, %v1301
      %v1666 = vpack.c.bf16 %v1316, %v1311
      %v1667 = vpack.c.bf16 %v1326, %v1321
      %v1668 = vpack.c.bf16 %v1336, %v1331
      %v1669 = vpack.c.bf16 %v1346, %v1341
      %v1670 = vpack.c.bf16 %v1356, %v1351
      %v1671 = vpack.c.bf16 %v1366, %v1361
      %v1672 = vpack.c.bf16 %v1376, %v1371
      %v1673 = vpack.c.bf16 %v1386, %v1381
      %v1674 = vpack.c.bf16 %v1396, %v1391
      %v1675 = vpack.c.bf16 %v1406, %v1401
      %v1676 = vpack.c.bf16 %v1416, %v1411
      %v1677 = vpack.c.bf16 %v1426, %v1421
      %v1678 = vpack.c.bf16 %v1436, %v1431
      %v1679 = vpack.c.bf16 %v1446, %v1441
      %v1680 = vpack.c.bf16 %v1456, %v1451
      %v1681 = vpack.c.bf16 %v1466, %v1461
      %v1682 = vpack.c.bf16 %v1476, %v1471
      %v1683 = vpack.c.bf16 %v1486, %v1481
      %v1684 = vpack.c.bf16 %v1496, %v1491
      %v1685 = vpack.c.bf16 %v1506, %v1501
      %v1686 = vpack.c.bf16 %v1516, %v1511
      %v1687 = vpack.c.bf16 %v1526, %v1521
      %v1688 = vpack.c.bf16 %v1536, %v1531
      %v1689 = vpack.c.bf16 %v1546, %v1541
      %v1690 = vpack.c.bf16 %v1556, %v1551
      %v1691 = vpack.c.bf16 %v1566, %v1561
      %v1692 = vpack.c.bf16 %v1576, %v1571
      %v1693 = vpack.c.bf16 %v1586, %v1581
      %v1694 = vpack.c.bf16 %v1596, %v1591
      %v1727 = vunpack.c.l.b16 %v1663
      %v1728 = vunpack.c.h.b16 %v1663
      %v1729 = vunpack.c.l.b16 %v1664
      %v1730 = vunpack.c.h.b16 %v1664
      %v1731 = vunpack.c.l.b16 %v1665
      %v1732 = vunpack.c.h.b16 %v1665
      %v1733 = vunpack.c.l.b16 %v1666
      %v1734 = vunpack.c.h.b16 %v1666
      %v1735 = vunpack.c.l.b16 %v1667
      %v1736 = vunpack.c.h.b16 %v1667
      %v1737 = vunpack.c.l.b16 %v1668
      %v1738 = vunpack.c.h.b16 %v1668
      %v1739 = vunpack.c.l.b16 %v1669
      %v1740 = vunpack.c.h.b16 %v1669
      %v1741 = vunpack.c.l.b16 %v1670
      %v1742 = vunpack.c.h.b16 %v1670
      %v1743 = vunpack.c.l.b16 %v1671
      %v1744 = vunpack.c.h.b16 %v1671
      %v1745 = vunpack.c.l.b16 %v1672
      %v1746 = vunpack.c.h.b16 %v1672
      %v1747 = vunpack.c.l.b16 %v1673
      %v1748 = vunpack.c.h.b16 %v1673
      %v1749 = vunpack.c.l.b16 %v1674
      %v1750 = vunpack.c.h.b16 %v1674
      %v1751 = vunpack.c.l.b16 %v1675
      %v1752 = vunpack.c.h.b16 %v1675
      %v1753 = vunpack.c.l.b16 %v1676
      %v1754 = vunpack.c.h.b16 %v1676
      %v1755 = vunpack.c.l.b16 %v1677
      %v1756 = vunpack.c.h.b16 %v1677
      %v1757 = vunpack.c.l.b16 %v1678
      %v1758 = vunpack.c.h.b16 %v1678
      %v1759 = vunpack.c.l.b16 %v1679
      %v1760 = vunpack.c.h.b16 %v1679
      %v1761 = vunpack.c.l.b16 %v1680
      %v1762 = vunpack.c.h.b16 %v1680
      %v1763 = vunpack.c.l.b16 %v1681
      %v1764 = vunpack.c.h.b16 %v1681
      %v1765 = vunpack.c.l.b16 %v1682
      %v1766 = vunpack.c.h.b16 %v1682
      %v1767 = vunpack.c.l.b16 %v1683
      %v1768 = vunpack.c.h.b16 %v1683
      %v1769 = vunpack.c.l.b16 %v1684
      %v1770 = vunpack.c.h.b16 %v1684
      %v1771 = vunpack.c.l.b16 %v1685
      %v1772 = vunpack.c.h.b16 %v1685
      %v1773 = vunpack.c.l.b16 %v1686
      %v1774 = vunpack.c.h.b16 %v1686
      %v1775 = vunpack.c.l.b16 %v1687
      %v1776 = vunpack.c.h.b16 %v1687
      %v1777 = vunpack.c.l.b16 %v1688
      %v1778 = vunpack.c.h.b16 %v1688
      %v1779 = vunpack.c.l.b16 %v1689
      %v1780 = vunpack.c.h.b16 %v1689
      %v1781 = vunpack.c.l.b16 %v1690
      %v1782 = vunpack.c.h.b16 %v1690
      %v1783 = vunpack.c.l.b16 %v1691
      %v1784 = vunpack.c.h.b16 %v1691
      %v1785 = vunpack.c.l.b16 %v1692
      %v1786 = vunpack.c.h.b16 %v1692
      %v1787 = vunpack.c.l.b16 %v1693
      %v1788 = vunpack.c.h.b16 %v1693
      %v1789 = vunpack.c.l.b16 %v1694
      %v1790 = vunpack.c.h.b16 %v1694
      %v1791 = vpack.c.b16 %v1727, %v1727
      %v1792 = vpack.c.b16 %v1728, %v1728
      %v1793 = vpack.c.b16 %v1729, %v1729
      %v1794 = vpack.c.b16 %v1730, %v1730
      %v1795 = vpack.c.b16 %v1731, %v1731
      %v1796 = vpack.c.b16 %v1732, %v1732
      %v1797 = vpack.c.b16 %v1733, %v1733
      %v1798 = vpack.c.b16 %v1734, %v1734
      %v1799 = vpack.c.b16 %v1735, %v1735
      %v1800 = vpack.c.b16 %v1736, %v1736
      %v1801 = vpack.c.b16 %v1737, %v1737
      %v1802 = vpack.c.b16 %v1738, %v1738
      %v1803 = vpack.c.b16 %v1739, %v1739
      %v1804 = vpack.c.b16 %v1740, %v1740
      %v1805 = vpack.c.b16 %v1741, %v1741
      %v1806 = vpack.c.b16 %v1742, %v1742
      %v1807 = vpack.c.b16 %v1743, %v1743
      %v1808 = vpack.c.b16 %v1744, %v1744
      %v1809 = vpack.c.b16 %v1745, %v1745
      %v1810 = vpack.c.b16 %v1746, %v1746
      %v1811 = vpack.c.b16 %v1747, %v1747
      %v1812 = vpack.c.b16 %v1748, %v1748
      %v1813 = vpack.c.b16 %v1749, %v1749
      %v1814 = vpack.c.b16 %v1750, %v1750
      %v1815 = vpack.c.b16 %v1751, %v1751
      %v1816 = vpack.c.b16 %v1752, %v1752
      %v1817 = vpack.c.b16 %v1753, %v1753
      %v1818 = vpack.c.b16 %v1754, %v1754
      %v1819 = vpack.c.b16 %v1755, %v1755
      %v1820 = vpack.c.b16 %v1756, %v1756
      %v1821 = vpack.c.b16 %v1757, %v1757
      %v1822 = vpack.c.b16 %v1758, %v1758
      %v1823 = vpack.c.b16 %v1759, %v1759
      %v1824 = vpack.c.b16 %v1760, %v1760
      %v1825 = vpack.c.b16 %v1761, %v1761
      %v1826 = vpack.c.b16 %v1762, %v1762
      %v1827 = vpack.c.b16 %v1763, %v1763
      %v1828 = vpack.c.b16 %v1764, %v1764
      %v1829 = vpack.c.b16 %v1765, %v1765
      %v1830 = vpack.c.b16 %v1766, %v1766
      %v1831 = vpack.c.b16 %v1767, %v1767
      %v1832 = vpack.c.b16 %v1768, %v1768
      %v1833 = vpack.c.b16 %v1769, %v1769
      %v1834 = vpack.c.b16 %v1770, %v1770
      %v1835 = vpack.c.b16 %v1771, %v1771
      %v1836 = vpack.c.b16 %v1772, %v1772
      %v1837 = vpack.c.b16 %v1773, %v1773
      %v1838 = vpack.c.b16 %v1774, %v1774
      %v1839 = vpack.c.b16 %v1775, %v1775
      %v1840 = vpack.c.b16 %v1776, %v1776
      %v1841 = vpack.c.b16 %v1777, %v1777
      %v1842 = vpack.c.b16 %v1778, %v1778
      %v1843 = vpack.c.b16 %v1779, %v1779
      %v1844 = vpack.c.b16 %v1780, %v1780
      %v1845 = vpack.c.b16 %v1781, %v1781
      %v1846 = vpack.c.b16 %v1782, %v1782
      %v1847 = vpack.c.b16 %v1783, %v1783
      %v1848 = vpack.c.b16 %v1784, %v1784
      %v1849 = vpack.c.b16 %v1785, %v1785
      %v1850 = vpack.c.b16 %v1786, %v1786
      %v1851 = vpack.c.b16 %v1787, %v1787
      %v1852 = vpack.c.b16 %v1788, %v1788
      %v1853 = vpack.c.b16 %v1789, %v1789
      %v1854 = vpack.c.b16 %v1790, %v1790
      %v1919 = vmul.bf16 %v1599, %v1791
      %v1920 = vmul.bf16 %v1600, %v1792
      %v1921 = vmul.bf16 %v1601, %v1793
      %v1922 = vmul.bf16 %v1602, %v1794
      %v1923 = vmul.bf16 %v1603, %v1795
      %v1924 = vmul.bf16 %v1604, %v1796
      %v1925 = vmul.bf16 %v1605, %v1797
      %v1926 = vmul.bf16 %v1606, %v1798
      %v1927 = vmul.bf16 %v1607, %v1799
      %v1928 = vmul.bf16 %v1608, %v1800
      %v1929 = vmul.bf16 %v1609, %v1801
      %v1930 = vmul.bf16 %v1610, %v1802
      %v1931 = vmul.bf16 %v1611, %v1803
      %v1932 = vmul.bf16 %v1612, %v1804
      %v1933 = vmul.bf16 %v1613, %v1805
      %v1934 = vmul.bf16 %v1614, %v1806
      %v1935 = vmul.bf16 %v1615, %v1807
      %v1936 = vmul.bf16 %v1616, %v1808
      %v1937 = vmul.bf16 %v1617, %v1809
      %v1938 = vmul.bf16 %v1618, %v1810
      %v1939 = vmul.bf16 %v1619, %v1811
      %v1940 = vmul.bf16 %v1620, %v1812
      %v1941 = vmul.bf16 %v1621, %v1813
      %v1942 = vmul.bf16 %v1622, %v1814
      %v1943 = vmul.bf16 %v1623, %v1815
      %v1944 = vmul.bf16 %v1624, %v1816
      %v1945 = vmul.bf16 %v1625, %v1817
      %v1946 = vmul.bf16 %v1626, %v1818
      %v1947 = vmul.bf16 %v1627, %v1819
      %v1948 = vmul.bf16 %v1628, %v1820
      %v1949 = vmul.bf16 %v1629, %v1821
      %v1950 = vmul.bf16 %v1630, %v1822
      %v1951 = vmul.bf16 %v1631, %v1823
      %v1952 = vmul.bf16 %v1632, %v1824
      %v1953 = vmul.bf16 %v1633, %v1825
      %v1954 = vmul.bf16 %v1634, %v1826
      %v1955 = vmul.bf16 %v1635, %v1827
      %v1956 = vmul.bf16 %v1636, %v1828
      %v1957 = vmul.bf16 %v1637, %v1829
      %v1958 = vmul.bf16 %v1638, %v1830
      %v1959 = vmul.bf16 %v1639, %v1831
      %v1960 = vmul.bf16 %v1640, %v1832
      %v1961 = vmul.bf16 %v1641, %v1833
      %v1962 = vmul.bf16 %v1642, %v1834
      %v1963 = vmul.bf16 %v1643, %v1835
      %v1964 = vmul.bf16 %v1644, %v1836
      %v1965 = vmul.bf16 %v1645, %v1837
      %v1966 = vmul.bf16 %v1646, %v1838
      %v1967 = vmul.bf16 %v1647, %v1839
      %v1968 = vmul.bf16 %v1648, %v1840
      %v1969 = vmul.bf16 %v1649, %v1841
      %v1970 = vmul.bf16 %v1650, %v1842
      %v1971 = vmul.bf16 %v1651, %v1843
      %v1972 = vmul.bf16 %v1652, %v1844
      %v1973 = vmul.bf16 %v1653, %v1845
      %v1974 = vmul.bf16 %v1654, %v1846
      %v1975 = vmul.bf16 %v1655, %v1847
      %v1976 = vmul.bf16 %v1656, %v1848
      %v1977 = vmul.bf16 %v1657, %v1849
      %v1978 = vmul.bf16 %v1658, %v1850
      %v1979 = vmul.bf16 %v1659, %v1851
      %v1980 = vmul.bf16 %v1660, %v1852
      %v1981 = vmul.bf16 %v1661, %v1853
      %v1982 = vmul.bf16 %v1662, %v1854
      %v1983 = vld [vmem:[%s3] sm:$0xf]
      %v1984 = vld [vmem:[%s3 + $0x4] sm:$0xf]
      %v1985 = vld [vmem:[%s3 + $0x8] sm:$0xf]
      %v1986 = vld [vmem:[%s3 + $0xc] sm:$0xf]
      %v1987 = vld [vmem:[%s3 + $0x10] sm:$0xf]
      %v1988 = vld [vmem:[%s3 + $0x14] sm:$0xf]
      %v1989 = vld [vmem:[%s3 + $0x18] sm:$0xf]
      %v1990 = vld [vmem:[%s3 + $0x1c] sm:$0xf]
      %v1991 = vld [vmem:[%s4] sm:$0x1]
      %v1993 = vlaneseq
      %v1994 = vshrl.u32 %v1993, 7
      %v1995 = vsub.s32 0, %v1994
      %v1996 = vrot.slane %v1991, %v1995
      %v2062 = vunpack.c.l.b16 %v1919
      %v2063 = vunpack.c.l.b16 %v1920
      %v2064 = vunpack.c.l.b16 %v1921
      %v2065 = vunpack.c.l.b16 %v1922
      %v2066 = vunpack.c.l.b16 %v1923
      %v2067 = vunpack.c.l.b16 %v1924
      %v2068 = vunpack.c.l.b16 %v1925
      %v2069 = vunpack.c.l.b16 %v1926
      %v2070 = vunpack.c.l.b16 %v1927
      %v2071 = vunpack.c.l.b16 %v1928
      %v2072 = vunpack.c.l.b16 %v1929
      %v2073 = vunpack.c.l.b16 %v1930
      %v2074 = vunpack.c.l.b16 %v1931
      %v2075 = vunpack.c.l.b16 %v1932
      %v2076 = vunpack.c.l.b16 %v1933
      %v2077 = vunpack.c.l.b16 %v1934
      %v2078 = vunpack.c.l.b16 %v1935
      %v2079 = vunpack.c.l.b16 %v1936
      %v2080 = vunpack.c.l.b16 %v1937
      %v2081 = vunpack.c.l.b16 %v1938
      %v2082 = vunpack.c.l.b16 %v1939
      %v2083 = vunpack.c.l.b16 %v1940
      %v2084 = vunpack.c.l.b16 %v1941
      %v2085 = vunpack.c.l.b16 %v1942
      %v2086 = vunpack.c.l.b16 %v1943
      %v2087 = vunpack.c.l.b16 %v1944
      %v2088 = vunpack.c.l.b16 %v1945
      %v2089 = vunpack.c.l.b16 %v1946
      %v2090 = vunpack.c.l.b16 %v1947
      %v2091 = vunpack.c.l.b16 %v1948
      %v2092 = vunpack.c.l.b16 %v1949
      %v2093 = vunpack.c.l.b16 %v1950
      %v2094 = vunpack.c.l.b16 %v1951
      %v2095 = vunpack.c.l.b16 %v1952
      %v2096 = vunpack.c.l.b16 %v1953
      %v2097 = vunpack.c.l.b16 %v1954
      %v2098 = vunpack.c.l.b16 %v1955
      %v2099 = vunpack.c.l.b16 %v1956
      %v2100 = vunpack.c.l.b16 %v1957
      %v2101 = vunpack.c.l.b16 %v1958
      %v2102 = vunpack.c.l.b16 %v1959
      %v2103 = vunpack.c.l.b16 %v1960
      %v2104 = vunpack.c.l.b16 %v1961
      %v2105 = vunpack.c.l.b16 %v1962
      %v2106 = vunpack.c.l.b16 %v1963
      %v2107 = vunpack.c.l.b16 %v1964
      %v2108 = vunpack.c.l.b16 %v1965
      %v2109 = vunpack.c.l.b16 %v1966
      %v2110 = vunpack.c.l.b16 %v1967
      %v2111 = vunpack.c.l.b16 %v1968
      %v2112 = vunpack.c.l.b16 %v1969
      %v2113 = vunpack.c.l.b16 %v1970
      %v2114 = vunpack.c.l.b16 %v1971
      %v2115 = vunpack.c.l.b16 %v1972
      %v2116 = vunpack.c.l.b16 %v1973
      %v2117 = vunpack.c.l.b16 %v1974
      %v2118 = vunpack.c.l.b16 %v1975
      %v2119 = vunpack.c.l.b16 %v1976
      %v2120 = vunpack.c.l.b16 %v1977
      %v2121 = vunpack.c.l.b16 %v1978
      %v2122 = vunpack.c.l.b16 %v1979
      %v2123 = vunpack.c.l.b16 %v1980
      %v2124 = vunpack.c.l.b16 %v1981
      %v2125 = vunpack.c.l.b16 %v1982
      %v2126 = vpack.c.b16 %v2063, %v2062
      %v2127 = vpack.c.b16 %v2065, %v2064
      %v2128 = vpack.c.b16 %v2067, %v2066
      %v2129 = vpack.c.b16 %v2069, %v2068
      %v2130 = vpack.c.b16 %v2071, %v2070
      %v2131 = vpack.c.b16 %v2073, %v2072
      %v2132 = vpack.c.b16 %v2075, %v2074
      %v2133 = vpack.c.b16 %v2077, %v2076
      %v2134 = vpack.c.b16 %v2079, %v2078
      %v2135 = vpack.c.b16 %v2081, %v2080
      %v2136 = vpack.c.b16 %v2083, %v2082
      %v2137 = vpack.c.b16 %v2085, %v2084
      %v2138 = vpack.c.b16 %v2087, %v2086
      %v2139 = vpack.c.b16 %v2089, %v2088
      %v2140 = vpack.c.b16 %v2091, %v2090
      %v2141 = vpack.c.b16 %v2093, %v2092
      %v2142 = vpack.c.b16 %v2095, %v2094
      %v2143 = vpack.c.b16 %v2097, %v2096
      %v2144 = vpack.c.b16 %v2099, %v2098
      %v2145 = vpack.c.b16 %v2101, %v2100
      %v2146 = vpack.c.b16 %v2103, %v2102
      %v2147 = vpack.c.b16 %v2105, %v2104
      %v2148 = vpack.c.b16 %v2107, %v2106
      %v2149 = vpack.c.b16 %v2109, %v2108
      %v2150 = vpack.c.b16 %v2111, %v2110
      %v2151 = vpack.c.b16 %v2113, %v2112
      %v2152 = vpack.c.b16 %v2115, %v2114
      %v2153 = vpack.c.b16 %v2117, %v2116
      %v2154 = vpack.c.b16 %v2119, %v2118
      %v2155 = vpack.c.b16 %v2121, %v2120
      %v2156 = vpack.c.b16 %v2123, %v2122
      %v2157 = vpack.c.b16 %v2125, %v2124
      %v2166 = vunpack.c.l.b16 %v1983
      %v2167 = vunpack.c.l.b16 %v1984
      %v2168 = vunpack.c.l.b16 %v1985
      %v2169 = vunpack.c.l.b16 %v1986
      %v2170 = vunpack.c.l.b16 %v1987
      %v2171 = vunpack.c.l.b16 %v1988
      %v2172 = vunpack.c.l.b16 %v1989
      %v2173 = vunpack.c.l.b16 %v1990
      %v2174 = vpack.c.b16 %v2167, %v2166
      %v2175 = vpack.c.b16 %v2169, %v2168
      %v2176 = vpack.c.b16 %v2171, %v2170
      %v2177 = vpack.c.b16 %v2173, %v2172
      %vm2182 = vcmask 523264
      %v2184 = vsel %vm2182, %v2126, 0
      %v2187 = vsel %vm2182, %v2127, 0
      %v2190 = vsel %vm2182, %v2128, 0
      %v2193 = vsel %vm2182, %v2129, 0
      %v2196 = vsel %vm2182, %v2130, 0
      %v2199 = vsel %vm2182, %v2131, 0
      %v2202 = vsel %vm2182, %v2132, 0
      %v2205 = vsel %vm2182, %v2133, 0
      %v2208 = vsel %vm2182, %v2134, 0
      %v2211 = vsel %vm2182, %v2135, 0
      %v2214 = vsel %vm2182, %v2136, 0
      %v2217 = vsel %vm2182, %v2137, 0
      %v2220 = vsel %vm2182, %v2138, 0
      %v2223 = vsel %vm2182, %v2139, 0
      %v2226 = vsel %vm2182, %v2140, 0
      %v2229 = vsel %vm2182, %v2141, 0
      %v2232 = vsel %vm2182, %v2142, 0
      %v2235 = vsel %vm2182, %v2143, 0
      %v2238 = vsel %vm2182, %v2144, 0
      %v2241 = vsel %vm2182, %v2145, 0
      %v2244 = vsel %vm2182, %v2146, 0
      %v2247 = vsel %vm2182, %v2147, 0
      %v2250 = vsel %vm2182, %v2148, 0
      %v2253 = vsel %vm2182, %v2149, 0
      %v2256 = vsel %vm2182, %v2150, 0
      %v2259 = vsel %vm2182, %v2151, 0
      %v2262 = vsel %vm2182, %v2152, 0
      %v2265 = vsel %vm2182, %v2153, 0
      %v2268 = vsel %vm2182, %v2154, 0
      %v2271 = vsel %vm2182, %v2155, 0
      %v2274 = vsel %vm2182, %v2156, 0
      %v2277 = vsel %vm2182, %v2157, 0
      %2279 = vmatprep.subr.bf16.mxu0 0
      %2280 = vmatpush1.bf16.msra.mxu0 0
      %2281 = vmatprep.subr.bf16.mxu0 0
      %2282 = vmatpush1.bf16.msra.mxu0 0
      %2283 = vmatprep.subr.bf16.mxu0 0
      %2284 = vmatpush1.bf16.msra.mxu0 0
      %2285 = vmatprep.subr.bf16.mxu0 0
      %2286 = vmatpush1.bf16.msra.mxu0 0
      %2287 = vmatprep.subr.bf16.mxu0 0
      %2288 = vmatpush1.bf16.msra.mxu0 %v2177
      %2289 = vmatprep.subr.bf16.mxu0 0
      %2290 = vmatpush1.bf16.msra.mxu0 %v2176
      %2291 = vmatprep.subr.bf16.mxu0 0
      %2292 = vmatpush1.bf16.msra.mxu0 %v2175
      %2293 = vmatprep.subr.bf16.mxu0 0
      %2294 = vmatpush1.bf16.msra.mxu0 %v2174
      %2295 = vmatprep.subr.bf16.mxu0 0
      %2296 = vmatpush2.bf16.msra.mxu0 0
      %2297 = vmatprep.subr.bf16.mxu0 0
      %2298 = vmatpush2.bf16.msra.mxu0 0
      %2299 = vmatprep.subr.bf16.mxu0 0
      %2300 = vmatpush2.bf16.msra.mxu0 0
      %2301 = vmatprep.subr.bf16.mxu0 0
      %2302 = vmatpush2.bf16.msra.mxu0 0
      %2303 = vmatprep.subr.bf16.mxu0 0
      %2304 = vmatpush2.bf16.msra.mxu0 0
      %2305 = vmatprep.subr.bf16.mxu0 0
      %2306 = vmatpush2.bf16.msra.mxu0 0
      %2307 = vmatprep.subr.bf16.mxu0 0
      %2308 = vmatpush2.bf16.msra.mxu0 0
      %2309 = vmatprep.subr.bf16.mxu0 0
      %2310 = vmatpush2.bf16.msra.mxu0 0
      %2311 = vmatprep.mubr.bf16.mxu0 0
      %2312 = vmatmul.mubr.bf16.gmra.mxu0 %v2184
      %v2313 = vpop.f32.mrf.mxu0
      %v2314 = vadd.f32 %v1996, %v2313
      %v2315 = vpop.f32.mrf.mxu0
      %v2316 = vpop.f32.mrf.mxu0
      %v2317 = vadd.f32 %v1996, %v2316
      %v2318 = vpop.f32.mrf.mxu0
      %2319 = vmatprep.mubr.bf16.mxu0 0
      %2320 = vmatmul.mubr.bf16.gmra.mxu0 %v2187
      %v2321 = vpop.f32.mrf.mxu0
      %v2322 = vadd.f32 %v1996, %v2321
      %v2323 = vpop.f32.mrf.mxu0
      %v2324 = vpop.f32.mrf.mxu0
      %v2325 = vadd.f32 %v1996, %v2324
      %v2326 = vpop.f32.mrf.mxu0
      %2327 = vmatprep.mubr.bf16.mxu0 0
      %2328 = vmatmul.mubr.bf16.gmra.mxu0 %v2190
      %v2329 = vpop.f32.mrf.mxu0
      %v2330 = vadd.f32 %v1996, %v2329
      %v2331 = vpop.f32.mrf.mxu0
      %v2332 = vpop.f32.mrf.mxu0
      %v2333 = vadd.f32 %v1996, %v2332
      %v2334 = vpop.f32.mrf.mxu0
      %2335 = vmatprep.mubr.bf16.mxu0 0
      %2336 = vmatmul.mubr.bf16.gmra.mxu0 %v2193
      %v2337 = vpop.f32.mrf.mxu0
      %v2338 = vadd.f32 %v1996, %v2337
      %v2339 = vpop.f32.mrf.mxu0
      %v2340 = vpop.f32.mrf.mxu0
      %v2341 = vadd.f32 %v1996, %v2340
      %v2342 = vpop.f32.mrf.mxu0
      %2343 = vmatprep.mubr.bf16.mxu0 0
      %2344 = vmatmul.mubr.bf16.gmra.mxu0 %v2196
      %v2345 = vpop.f32.mrf.mxu0
      %v2346 = vadd.f32 %v1996, %v2345
      %v2347 = vpop.f32.mrf.mxu0
      %v2348 = vpop.f32.mrf.mxu0
      %v2349 = vadd.f32 %v1996, %v2348
      %v2350 = vpop.f32.mrf.mxu0
      %2351 = vmatprep.mubr.bf16.mxu0 0
      %2352 = vmatmul.mubr.bf16.gmra.mxu0 %v2199
      %v2353 = vpop.f32.mrf.mxu0
      %v2354 = vadd.f32 %v1996, %v2353
      %v2355 = vpop.f32.mrf.mxu0
      %v2356 = vpop.f32.mrf.mxu0
      %v2357 = vadd.f32 %v1996, %v2356
      %v2358 = vpop.f32.mrf.mxu0
      %2359 = vmatprep.mubr.bf16.mxu0 0
      %2360 = vmatmul.mubr.bf16.gmra.mxu0 %v2202
      %v2361 = vpop.f32.mrf.mxu0
      %v2362 = vadd.f32 %v1996, %v2361
      %v2363 = vpop.f32.mrf.mxu0
      %v2364 = vpop.f32.mrf.mxu0
      %v2365 = vadd.f32 %v1996, %v2364
      %v2366 = vpop.f32.mrf.mxu0
      %2367 = vmatprep.mubr.bf16.mxu0 0
      %2368 = vmatmul.mubr.bf16.gmra.mxu0 %v2205
      %v2369 = vpop.f32.mrf.mxu0
      %v2370 = vadd.f32 %v1996, %v2369
      %v2371 = vpop.f32.mrf.mxu0
      %v2372 = vpop.f32.mrf.mxu0
      %v2373 = vadd.f32 %v1996, %v2372
      %v2374 = vpop.f32.mrf.mxu0
      %2375 = vmatprep.mubr.bf16.mxu0 0
      %2376 = vmatmul.mubr.bf16.gmra.mxu0 %v2208
      %v2377 = vpop.f32.mrf.mxu0
      %v2378 = vadd.f32 %v1996, %v2377
      %v2379 = vpop.f32.mrf.mxu0
      %v2380 = vpop.f32.mrf.mxu0
      %v2381 = vadd.f32 %v1996, %v2380
      %v2382 = vpop.f32.mrf.mxu0
      %2383 = vmatprep.mubr.bf16.mxu0 0
      %2384 = vmatmul.mubr.bf16.gmra.mxu0 %v2211
      %v2385 = vpop.f32.mrf.mxu0
      %v2386 = vadd.f32 %v1996, %v2385
      %v2387 = vpop.f32.mrf.mxu0
      %v2388 = vpop.f32.mrf.mxu0
      %v2389 = vadd.f32 %v1996, %v2388
      %v2390 = vpop.f32.mrf.mxu0
      %2391 = vmatprep.mubr.bf16.mxu0 0
      %2392 = vmatmul.mubr.bf16.gmra.mxu0 %v2214
      %v2393 = vpop.f32.mrf.mxu0
      %v2394 = vadd.f32 %v1996, %v2393
      %v2395 = vpop.f32.mrf.mxu0
      %v2396 = vpop.f32.mrf.mxu0
      %v2397 = vadd.f32 %v1996, %v2396
      %v2398 = vpop.f32.mrf.mxu0
      %2399 = vmatprep.mubr.bf16.mxu0 0
      %2400 = vmatmul.mubr.bf16.gmra.mxu0 %v2217
      %v2401 = vpop.f32.mrf.mxu0
      %v2402 = vadd.f32 %v1996, %v2401
      %v2403 = vpop.f32.mrf.mxu0
      %v2404 = vpop.f32.mrf.mxu0
      %v2405 = vadd.f32 %v1996, %v2404
      %v2406 = vpop.f32.mrf.mxu0
      %2407 = vmatprep.mubr.bf16.mxu0 0
      %2408 = vmatmul.mubr.bf16.gmra.mxu0 %v2220
      %v2409 = vpop.f32.mrf.mxu0
      %v2410 = vadd.f32 %v1996, %v2409
      %v2411 = vpop.f32.mrf.mxu0
      %v2412 = vpop.f32.mrf.mxu0
      %v2413 = vadd.f32 %v1996, %v2412
      %v2414 = vpop.f32.mrf.mxu0
      %2415 = vmatprep.mubr.bf16.mxu0 0
      %2416 = vmatmul.mubr.bf16.gmra.mxu0 %v2223
      %v2417 = vpop.f32.mrf.mxu0
      %v2418 = vadd.f32 %v1996, %v2417
      %v2419 = vpop.f32.mrf.mxu0
      %v2420 = vpop.f32.mrf.mxu0
      %v2421 = vadd.f32 %v1996, %v2420
      %v2422 = vpop.f32.mrf.mxu0
      %2423 = vmatprep.mubr.bf16.mxu0 0
      %2424 = vmatmul.mubr.bf16.gmra.mxu0 %v2226
      %v2425 = vpop.f32.mrf.mxu0
      %v2426 = vadd.f32 %v1996, %v2425
      %v2427 = vpop.f32.mrf.mxu0
      %v2428 = vpop.f32.mrf.mxu0
      %v2429 = vadd.f32 %v1996, %v2428
      %v2430 = vpop.f32.mrf.mxu0
      %2431 = vmatprep.mubr.bf16.mxu0 0
      %2432 = vmatmul.mubr.bf16.gmra.mxu0 %v2229
      %v2433 = vpop.f32.mrf.mxu0
      %v2434 = vadd.f32 %v1996, %v2433
      %v2435 = vpop.f32.mrf.mxu0
      %v2436 = vpop.f32.mrf.mxu0
      %v2437 = vadd.f32 %v1996, %v2436
      %v2438 = vpop.f32.mrf.mxu0
      %2439 = vmatprep.mubr.bf16.mxu0 0
      %2440 = vmatmul.mubr.bf16.gmra.mxu0 %v2232
      %v2441 = vpop.f32.mrf.mxu0
      %v2442 = vadd.f32 %v1996, %v2441
      %v2443 = vpop.f32.mrf.mxu0
      %v2444 = vpop.f32.mrf.mxu0
      %v2445 = vadd.f32 %v1996, %v2444
      %v2446 = vpop.f32.mrf.mxu0
      %2447 = vmatprep.mubr.bf16.mxu0 0
      %2448 = vmatmul.mubr.bf16.gmra.mxu0 %v2235
      %v2449 = vpop.f32.mrf.mxu0
      %v2450 = vadd.f32 %v1996, %v2449
      %v2451 = vpop.f32.mrf.mxu0
      %v2452 = vpop.f32.mrf.mxu0
      %v2453 = vadd.f32 %v1996, %v2452
      %v2454 = vpop.f32.mrf.mxu0
      %2455 = vmatprep.mubr.bf16.mxu0 0
      %2456 = vmatmul.mubr.bf16.gmra.mxu0 %v2238
      %v2457 = vpop.f32.mrf.mxu0
      %v2458 = vadd.f32 %v1996, %v2457
      %v2459 = vpop.f32.mrf.mxu0
      %v2460 = vpop.f32.mrf.mxu0
      %v2461 = vadd.f32 %v1996, %v2460
      %v2462 = vpop.f32.mrf.mxu0
      %2463 = vmatprep.mubr.bf16.mxu0 0
      %2464 = vmatmul.mubr.bf16.gmra.mxu0 %v2241
      %v2465 = vpop.f32.mrf.mxu0
      %v2466 = vadd.f32 %v1996, %v2465
      %v2467 = vpop.f32.mrf.mxu0
      %v2468 = vpop.f32.mrf.mxu0
      %v2469 = vadd.f32 %v1996, %v2468
      %v2470 = vpop.f32.mrf.mxu0
      %2471 = vmatprep.mubr.bf16.mxu0 0
      %2472 = vmatmul.mubr.bf16.gmra.mxu0 %v2244
      %v2473 = vpop.f32.mrf.mxu0
      %v2474 = vadd.f32 %v1996, %v2473
      %v2475 = vpop.f32.mrf.mxu0
      %v2476 = vpop.f32.mrf.mxu0
      %v2477 = vadd.f32 %v1996, %v2476
      %v2478 = vpop.f32.mrf.mxu0
      %2479 = vmatprep.mubr.bf16.mxu0 0
      %2480 = vmatmul.mubr.bf16.gmra.mxu0 %v2247
      %v2481 = vpop.f32.mrf.mxu0
      %v2482 = vadd.f32 %v1996, %v2481
      %v2483 = vpop.f32.mrf.mxu0
      %v2484 = vpop.f32.mrf.mxu0
      %v2485 = vadd.f32 %v1996, %v2484
      %v2486 = vpop.f32.mrf.mxu0
      %2487 = vmatprep.mubr.bf16.mxu0 0
      %2488 = vmatmul.mubr.bf16.gmra.mxu0 %v2250
      %v2489 = vpop.f32.mrf.mxu0
      %v2490 = vadd.f32 %v1996, %v2489
      %v2491 = vpop.f32.mrf.mxu0
      %v2492 = vpop.f32.mrf.mxu0
      %v2493 = vadd.f32 %v1996, %v2492
      %v2494 = vpop.f32.mrf.mxu0
      %2495 = vmatprep.mubr.bf16.mxu0 0
      %2496 = vmatmul.mubr.bf16.gmra.mxu0 %v2253
      %v2497 = vpop.f32.mrf.mxu0
      %v2498 = vadd.f32 %v1996, %v2497
      %v2499 = vpop.f32.mrf.mxu0
      %v2500 = vpop.f32.mrf.mxu0
      %v2501 = vadd.f32 %v1996, %v2500
      %v2502 = vpop.f32.mrf.mxu0
      %2503 = vmatprep.mubr.bf16.mxu0 0
      %2504 = vmatmul.mubr.bf16.gmra.mxu0 %v2256
      %v2505 = vpop.f32.mrf.mxu0
      %v2506 = vadd.f32 %v1996, %v2505
      %v2507 = vpop.f32.mrf.mxu0
      %v2508 = vpop.f32.mrf.mxu0
      %v2509 = vadd.f32 %v1996, %v2508
      %v2510 = vpop.f32.mrf.mxu0
      %2511 = vmatprep.mubr.bf16.mxu0 0
      %2512 = vmatmul.mubr.bf16.gmra.mxu0 %v2259
      %v2513 = vpop.f32.mrf.mxu0
      %v2514 = vadd.f32 %v1996, %v2513
      %v2515 = vpop.f32.mrf.mxu0
      %v2516 = vpop.f32.mrf.mxu0
      %v2517 = vadd.f32 %v1996, %v2516
      %v2518 = vpop.f32.mrf.mxu0
      %2519 = vmatprep.mubr.bf16.mxu0 0
      %2520 = vmatmul.mubr.bf16.gmra.mxu0 %v2262
      %v2521 = vpop.f32.mrf.mxu0
      %v2522 = vadd.f32 %v1996, %v2521
      %v2523 = vpop.f32.mrf.mxu0
      %v2524 = vpop.f32.mrf.mxu0
      %v2525 = vadd.f32 %v1996, %v2524
      %v2526 = vpop.f32.mrf.mxu0
      %2527 = vmatprep.mubr.bf16.mxu0 0
      %2528 = vmatmul.mubr.bf16.gmra.mxu0 %v2265
      %v2529 = vpop.f32.mrf.mxu0
      %v2530 = vadd.f32 %v1996, %v2529
      %v2531 = vpop.f32.mrf.mxu0
      %v2532 = vpop.f32.mrf.mxu0
      %v2533 = vadd.f32 %v1996, %v2532
      %v2534 = vpop.f32.mrf.mxu0
      %2535 = vmatprep.mubr.bf16.mxu0 0
      %2536 = vmatmul.mubr.bf16.gmra.mxu0 %v2268
      %v2537 = vpop.f32.mrf.mxu0
      %v2538 = vadd.f32 %v1996, %v2537
      %v2539 = vpop.f32.mrf.mxu0
      %v2540 = vpop.f32.mrf.mxu0
      %v2541 = vadd.f32 %v1996, %v2540
      %v2542 = vpop.f32.mrf.mxu0
      %2543 = vmatprep.mubr.bf16.mxu0 0
      %2544 = vmatmul.mubr.bf16.gmra.mxu0 %v2271
      %v2545 = vpop.f32.mrf.mxu0
      %v2546 = vadd.f32 %v1996, %v2545
      %v2547 = vpop.f32.mrf.mxu0
      %v2548 = vpop.f32.mrf.mxu0
      %v2549 = vadd.f32 %v1996, %v2548
      %v2550 = vpop.f32.mrf.mxu0
      %2551 = vmatprep.mubr.bf16.mxu0 0
      %2552 = vmatmul.mubr.bf16.gmra.mxu0 %v2274
      %v2553 = vpop.f32.mrf.mxu0
      %v2554 = vadd.f32 %v1996, %v2553
      %v2555 = vpop.f32.mrf.mxu0
      %v2556 = vpop.f32.mrf.mxu0
      %v2557 = vadd.f32 %v1996, %v2556
      %v2558 = vpop.f32.mrf.mxu0
      %2559 = vmatprep.mubr.bf16.mxu0 0
      %2560 = vmatmul.mubr.bf16.gmra.mxu0 %v2277
      %v2561 = vpop.f32.mrf.mxu0
      %v2562 = vadd.f32 %v1996, %v2561
      %v2563 = vpop.f32.mrf.mxu0
      %v2564 = vpop.f32.mrf.mxu0
      %v2565 = vadd.f32 %v1996, %v2564
      %v2566 = vpop.f32.mrf.mxu0
      %2567 = vdwg.mxu0
      %2568 = vst [vmem:[%s248] sm:$0xff] %v2314
      %2569 = vst [vmem:[%s248 + $0x8] sm:$0xff] %v2317
      %2570 = vst [vmem:[%s248 + $0x10] sm:$0xff] %v2322
      %2571 = vst [vmem:[%s248 + $0x18] sm:$0xff] %v2325
      %2572 = vst [vmem:[%s248 + $0x20] sm:$0xff] %v2330
      %2573 = vst [vmem:[%s248 + $0x28] sm:$0xff] %v2333
      %2574 = vst [vmem:[%s248 + $0x30] sm:$0xff] %v2338
      %2575 = vst [vmem:[%s248 + $0x38] sm:$0xff] %v2341
      %2576 = vst [vmem:[%s248 + $0x40] sm:$0xff] %v2346
      %2577 = vst [vmem:[%s248 + $0x48] sm:$0xff] %v2349
      %2578 = vst [vmem:[%s248 + $0x50] sm:$0xff] %v2354
      %2579 = vst [vmem:[%s248 + $0x58] sm:$0xff] %v2357
      %2580 = vst [vmem:[%s248 + $0x60] sm:$0xff] %v2362
      %2581 = vst [vmem:[%s248 + $0x68] sm:$0xff] %v2365
      %2582 = vst [vmem:[%s248 + $0x70] sm:$0xff] %v2370
      %2583 = vst [vmem:[%s248 + $0x78] sm:$0xff] %v2373
      %2584 = vst [vmem:[%s248 + $0x80] sm:$0xff] %v2378
      %2585 = vst [vmem:[%s248 + $0x88] sm:$0xff] %v2381
      %2586 = vst [vmem:[%s248 + $0x90] sm:$0xff] %v2386
      %2587 = vst [vmem:[%s248 + $0x98] sm:$0xff] %v2389
      %2588 = vst [vmem:[%s248 + $0xa0] sm:$0xff] %v2394
      %2589 = vst [vmem:[%s248 + $0xa8] sm:$0xff] %v2397
      %2590 = vst [vmem:[%s248 + $0xb0] sm:$0xff] %v2402
      %2591 = vst [vmem:[%s248 + $0xb8] sm:$0xff] %v2405
      %2592 = vst [vmem:[%s248 + $0xc0] sm:$0xff] %v2410
      %2593 = vst [vmem:[%s248 + $0xc8] sm:$0xff] %v2413
      %2594 = vst [vmem:[%s248 + $0xd0] sm:$0xff] %v2418
      %2595 = vst [vmem:[%s248 + $0xd8] sm:$0xff] %v2421
      %2596 = vst [vmem:[%s248 + $0xe0] sm:$0xff] %v2426
      %2597 = vst [vmem:[%s248 + $0xe8] sm:$0xff] %v2429
      %2598 = vst [vmem:[%s248 + $0xf0] sm:$0xff] %v2434
      %2599 = vst [vmem:[%s248 + $0xf8] sm:$0xff] %v2437
      %2600 = vst [vmem:[%s248 + $0x100] sm:$0xff] %v2442
      %2601 = vst [vmem:[%s248 + $0x108] sm:$0xff] %v2445
      %2602 = vst [vmem:[%s248 + $0x110] sm:$0xff] %v2450
      %2603 = vst [vmem:[%s248 + $0x118] sm:$0xff] %v2453
      %2604 = vst [vmem:[%s248 + $0x120] sm:$0xff] %v2458
      %2605 = vst [vmem:[%s248 + $0x128] sm:$0xff] %v2461
      %2606 = vst [vmem:[%s248 + $0x130] sm:$0xff] %v2466
      %2607 = vst [vmem:[%s248 + $0x138] sm:$0xff] %v2469
      %2608 = vst [vmem:[%s248 + $0x140] sm:$0xff] %v2474
      %2609 = vst [vmem:[%s248 + $0x148] sm:$0xff] %v2477
      %2610 = vst [vmem:[%s248 + $0x150] sm:$0xff] %v2482
      %2611 = vst [vmem:[%s248 + $0x158] sm:$0xff] %v2485
      %2612 = vst [vmem:[%s248 + $0x160] sm:$0xff] %v2490
      %2613 = vst [vmem:[%s248 + $0x168] sm:$0xff] %v2493
      %2614 = vst [vmem:[%s248 + $0x170] sm:$0xff] %v2498
      %2615 = vst [vmem:[%s248 + $0x178] sm:$0xff] %v2501
      %2616 = vst [vmem:[%s248 + $0x180] sm:$0xff] %v2506
      %2617 = vst [vmem:[%s248 + $0x188] sm:$0xff] %v2509
      %2618 = vst [vmem:[%s248 + $0x190] sm:$0xff] %v2514
      %2619 = vst [vmem:[%s248 + $0x198] sm:$0xff] %v2517
      %2620 = vst [vmem:[%s248 + $0x1a0] sm:$0xff] %v2522
      %2621 = vst [vmem:[%s248 + $0x1a8] sm:$0xff] %v2525
      %2622 = vst [vmem:[%s248 + $0x1b0] sm:$0xff] %v2530
      %2623 = vst [vmem:[%s248 + $0x1b8] sm:$0xff] %v2533
      %2624 = vst [vmem:[%s248 + $0x1c0] sm:$0xff] %v2538
      %2625 = vst [vmem:[%s248 + $0x1c8] sm:$0xff] %v2541
      %2626 = vst [vmem:[%s248 + $0x1d0] sm:$0xff] %v2546
      %2627 = vst [vmem:[%s248 + $0x1d8] sm:$0xff] %v2549
      %2628 = vst [vmem:[%s248 + $0x1e0] sm:$0xff] %v2554
      %2629 = vst [vmem:[%s248 + $0x1e8] sm:$0xff] %v2557
      %2630 = vst [vmem:[%s248 + $0x1f0] sm:$0xff] %v2562
      %2631 = vst [vmem:[%s248 + $0x1f8] sm:$0xff] %v2565
      %s2632 = smul.u32 64, %s16
      %p2633 = scmp.lt.s32.totalorder %s2632, 255
      %s2634 = scalar_select %p2633, %s2632, 255
      %s2635 = smul.addr %s2634, 8
      %s2636 = scalar_lea.vmem %s5, %s2635
      // Predicated region
      $region41: #{dcn_transpose_forward.3} parent=39 // pred_check
        %p2637 = pneg %p149
      $region42: #{dcn_transpose_forward.3} parent=39 // pred_check_branch
        %2639 = sbr.rel (%p2637) target = $region44
      $region43: #{dcn_transpose_forward.3} parent=39 // pred_region
        %s2640 = smul.u32 64, %s16
      $region44: #{dcn_transpose_forward.3} parent=39 // pred_fallthru
        _
    $region40: #{dcn_transpose_forward.3} parent=5 // pred_fallthru
      _
    %p2641 = scmp.le.s32.totalorder 2, %s11
    // Predicated region
    $region45: #{dcn_transpose_forward.3} parent=5 // pred_check
      %p2642 = pneg %p2641
    $region46: #{dcn_transpose_forward.3} parent=5 // pred_check_branch
      %2644 = sbr.rel (%p2642) target = $region48
    $region47: #{dcn_transpose_forward.3} parent=5 // pred_region
      %s2645 = ssub.s32 %s11, 2
      // Predicated region
      $region49: #{dcn_transpose_forward.3} parent=47 // pred_check
        %p2646 = pneg %p155
      $region50: #{dcn_transpose_forward.3} parent=47 // pred_check_branch
        %2648 = sbr.rel (%p2646) target = $region52
      $region51: #{dcn_transpose_forward.3} parent=47 // pred_region
        %s2649 = smul.u32 64, %s17
        %p2650 = scmp.lt.s32.totalorder %s2649, 255
        %s2651 = scalar_select %p2650, %s2649, 255
        %s2652 = smul.addr %s2651, 8
        %s2653 = scalar_lea.vmem %s5, %s2652
      $region52: #{dcn_transpose_forward.3} parent=47 // pred_fallthru
        _
    $region48: #{dcn_transpose_forward.3} parent=5 // pred_fallthru
      _
  $region6: #{dcn_transpose_forward.3} parent=0 // loop_footer
    %s15 = sadd.s32 1, %s11
  $region7: #{dcn_transpose_forward.3} parent=0 // loop_footer_branch
    %10 = sbr.rel target = $region3
  $region8: #{dcn_transpose_forward.3} parent=0 // loop_exit
    _

</llo_original>
